<compile_context>
chip_gen: v6e
topology: v6e:2x2x1
jax: 0.10.0
libtpu: 0.0.40
codegen_flags: <defaults>
</compile_context>

<pallas_src>
import functools
import math

import jax
import jax.numpy as jnp
from jax import lax
from jax.experimental import pallas as pl
from jax.experimental.pallas import tpu as pltpu

_HI = jax.lax.Precision.HIGHEST  # reference only


# ----------------------------------------------------------------------------
# Fused Pallas kernel: whole st_conv_block for one Bblk sub-batch.
# ----------------------------------------------------------------------------
def _st_block_kernel(x_ref, w1p_ref, w1q_ref, b1p_ref, b1q_ref, th_ref, lk_ref,
                     bs_ref, w2_ref, b2_ref, seg_ref, segt_ref, g_ref, be_ref,
                     o_ref, *, kt, ks, n, c1, c2, t, eps, nb):
    t1 = t - kt + 1
    t2 = t1 - kt + 1
    f32 = jnp.float32
    bf16 = jnp.bfloat16
    inv_cnt = 1.0 / float(n * c2)

    def one_batch(bb, carry):
        x = x_ref[bb]                                    # (t*n, c1) bf16, lanes >= c0 are zero

        # ---- temporal conv 1 + GLU: two c1-wide accumulators (no lane split),
        #      kt shifted in-VMEM matmuls; residual added exactly on the VPU ----
        p = x[(kt - 1) * n:(kt - 1) * n + t1 * n, :].astype(f32) + b1p_ref[...]
        q = jnp.zeros((t1 * n, c1), f32) + b1q_ref[...]
        for d in range(kt):                              # kt small -> static unroll
            xs = x[d * n:d * n + t1 * n, :]
            p = p + jnp.dot(xs, w1p_ref[d], preferred_element_type=f32)
            q = q + jnp.dot(xs, w1q_ref[d], preferred_element_type=f32)
        x_t1 = p * jax.nn.sigmoid(q)                     # (t1*n, c1) f32

        # ---- spatial graph conv: per-k theta matmul + ONE block-diagonal Lk matmul
        #      covering all t1 time slices (no per-slice loop / concat / lane slice) ----
        x_t1b = x_t1.astype(bf16)
        gc = jnp.zeros((t1 * n, c1), f32)
        for k in range(ks):                              # ks small -> static unroll
            y_k = jnp.dot(x_t1b, th_ref[k], preferred_element_type=f32)   # (t1*n, c1)
            gc = gc + jnp.dot(lk_ref[k], y_k.astype(bf16),
                              preferred_element_type=f32)                 # node mix, all slices
        x_s = jnp.maximum(gc + bs_ref[...] + x_t1, 0.0)  # (t1*n, c1) f32

        # ---- temporal conv 2 + ReLU: residual = lane-padded x_s rows, exact VPU add ----
        res = x_s[(kt - 1) * n:(kt - 1) * n + t2 * n, :]
        if c2 > c1:
            res = jnp.concatenate([res, jnp.zeros((t2 * n, c2 - c1), f32)], axis=-1)
        y2 = res + b2_ref[...]
        x_sb = x_s.astype(bf16)
        for d in range(kt):
            y2 = y2 + jnp.dot(x_sb[d * n:d * n + t2 * n, :], w2_ref[d],
                              preferred_element_type=f32)
        x_t2 = jnp.maximum(y2, 0.0)                      # (t2*n, c2) f32

        # ---- LayerNorm over each (n, c2) time slice: slice-indicator matmuls (MXU)
        #      for the stats + their broadcast, rsqrt on EUP; no per-slice loop ----
        xsum = jnp.dot(seg_ref[...], x_t2, preferred_element_type=f32)      # (t2, c2)
        mu = jnp.sum(xsum, axis=-1, keepdims=True) * inv_cnt                # (t2, 1)
        mu_r = jnp.dot(segt_ref[...], jnp.broadcast_to(mu, (t2, c2)),
                       preferred_element_type=f32)                          # (t2*n, c2)
        xc = x_t2 - mu_r
        xsq = jnp.dot(seg_ref[...], xc * xc, preferred_element_type=f32)    # (t2, c2)
        var = jnp.sum(xsq, axis=-1, keepdims=True) * inv_cnt                # (t2, 1)
        inv = jax.lax.rsqrt(var + eps)                                      # EUP
        inv_r = jnp.dot(segt_ref[...], jnp.broadcast_to(inv, (t2, c2)),
                        preferred_element_type=f32)                         # (t2*n, c2)
        o_ref[bb] = (xc * inv_r * g_ref[...] + be_ref[...]).astype(o_ref.dtype)
        # TODO(synk): training-mode dropout RNG not implemented (nn.Dropout is identity at eval).
        return carry

    lax.fori_loop(0, nb, one_batch, 0)


# ----------------------------------------------------------------------------
# Wrapper: weight packing (layout plumbing only) + pallas_call
# ----------------------------------------------------------------------------
def st_conv_block_forward(x_nchw, params, *, batch_block=None):
    kt = int(params["kt"])
    ks = int(params["ks"])
    w1 = params["w1"]                    # (2*c1, c0, kt)
    w2 = params["w2"]                    # (c2, c1, kt)
    c0 = w1.shape[1]
    c1 = w1.shape[0] // 2
    c2 = w2.shape[0]
    b, _, t, n = x_nchw.shape
    t1 = t - kt + 1
    t2 = t1 - kt + 1
    if c0 > c1 or c1 > c2:
        # TODO(synk): align with c_in > c_out (1x1-conv branch) not implemented.
        raise NotImplementedError("align with c_in > c_out not implemented")

    f32, bf16 = jnp.float32, jnp.bfloat16

    # activations: channels-last, rows = (time, node), lanes zero-padded c0 -> c1, bf16
    x = jnp.transpose(x_nchw, (0, 2, 3, 1)).reshape(b, t * n, c0)
    x = jnp.pad(x, ((0, 0), (0, 0), (0, c1 - c0))).astype(bf16)

    # tconv1 weights: taps-major, GLU p/q split wrapper-side, input dim padded to c1
    w1_t = jnp.transpose(w1, (2, 1, 0)).astype(f32)                # (kt, c0, 2*c1)
    pad_in = ((0, 0), (0, c1 - c0), (0, 0))
    w1p = jnp.pad(w1_t[:, :, :c1], pad_in).astype(bf16)            # (kt, c1, c1)
    w1q = jnp.pad(w1_t[:, :, c1:], pad_in).astype(bf16)            # (kt, c1, c1)
    b1p = params["b1"][:c1].reshape(1, c1).astype(f32)
    b1q = params["b1"][c1:].reshape(1, c1).astype(f32)

    # tconv2 weights
    w2p = jnp.transpose(w2, (2, 1, 0)).astype(bf16)                # (kt, c1, c2)
    b2r = params["b2"].reshape(1, c2).astype(f32)

    # sconv: theta per Chebyshev order k; Lk replicated block-diagonally over the
    # t1 time slices so node mixing for ALL slices is one matmul per k
    thk = jnp.transpose(params["theta"], (2, 0, 1)).astype(bf16)   # (ks, c1, c1), [k, i, o]
    eye_t1 = jnp.eye(t1, dtype=f32)
    lkbd = jnp.stack([jnp.kron(eye_t1, params["Lk"][k].astype(f32))
                      for k in range(ks)]).astype(bf16)            # (ks, t1*n, t1*n)
    bsr = params["bs"].reshape(1, c1).astype(f32)

    # LayerNorm: time-slice indicator (reduce) / transpose (broadcast) matmuls,
    # gamma/beta pre-tiled over the t2 slices
    seg = jnp.kron(jnp.eye(t2, dtype=f32), jnp.ones((1, n), f32))  # (t2, t2*n)
    segt = seg.T                                                   # (t2*n, t2)
    gam = jnp.tile(params["gamma"].astype(f32), (t2, 1))           # (t2*n, c2)
    bet = jnp.tile(params["beta"].astype(f32), (t2, 1))            # (t2*n, c2)

    # batch blocking: amortize per-grid-step overhead, keep grid length even so both
    # v7x TensorCores get work, cap the per-step working set well below VMEM
    if batch_block is None:
        per_elem = t * n * c1 * 2 + t2 * n * c2 * 4                # in (bf16) + out (f32) bytes
        cap = max(1, (4 << 20) // (2 * per_elem))                  # 2x for double buffering
        limit = max(1, min(cap, b // 2 if b % 2 == 0 else b))
        batch_block = max(d for d in range(1, limit + 1) if b % d == 0)
    assert b % batch_block == 0
    nsteps = b // batch_block

    kernel = functools.partial(_st_block_kernel, kt=kt, ks=ks, n=n, c1=c1, c2=c2,
                               t=t, eps=1e-5, nb=batch_block)
    full2 = lambda i: (0, 0)
    full3 = lambda i: (0, 0, 0)

    y = pl.pallas_call(
        kernel,
        out_shape=jax.ShapeDtypeStruct((b, t2 * n, c2), f32),
        grid=(nsteps,),
        in_specs=[
            pl.BlockSpec((batch_block, t * n, c1), lambda i: (i, 0, 0)),   # x
            pl.BlockSpec((kt, c1, c1), full3),          # w1p
            pl.BlockSpec((kt, c1, c1), full3),          # w1q
            pl.BlockSpec((1, c1), full2),               # b1p
            pl.BlockSpec((1, c1), full2),               # b1q
            pl.BlockSpec((ks, c1, c1), full3),          # theta per k
            pl.BlockSpec((ks, t1 * n, t1 * n), full3),  # Lk block-diagonal
            pl.BlockSpec((1, c1), full2),               # bs
            pl.BlockSpec((kt, c1, c2), full3),          # w2
            pl.BlockSpec((1, c2), full2),               # b2
            pl.BlockSpec((t2, t2 * n), full2),          # seg   (slice reduce)
            pl.BlockSpec((t2 * n, t2), full2),          # seg^T (slice broadcast)
            pl.BlockSpec((t2 * n, c2), full2),          # gamma tiled
            pl.BlockSpec((t2 * n, c2), full2),          # beta tiled
        ],
        out_specs=pl.BlockSpec((batch_block, t2 * n, c2), lambda i: (i, 0, 0)),
        compiler_params=pltpu.CompilerParams(
            dimension_semantics=("parallel",),          # even grid -> both TCs on v7x
            vmem_limit_bytes=32 * 1024 * 1024),
    )(x, w1p, w1q, b1p, b1q, thk, lkbd, bsr, w2p, b2r, seg, segt, gam, bet)

    return jnp.transpose(y.reshape(b, t2, n, c2), (0, 3, 1, 2))    # NCHW: (B, c2, T2, N)


# ----------------------------------------------------------------------------
# Pure-JAX reference (direct transcription of the PyTorch forward, f32 HIGHEST)
# ----------------------------------------------------------------------------
def reference_forward(x, params):
    kt = params["kt"]
    w1, w2 = params["w1"], params["w2"]
    c0 = w1.shape[1]
    c1 = w1.shape[0] // 2
    c2 = w2.shape[0]
    b, _, t, n = x.shape

    # tconv1 GLU
    t1 = t - kt + 1
    xp = jnp.pad(x, ((0, 0), (0, c1 - c0), (0, 0), (0, 0)))
    x_in = xp[:, :, kt - 1:, :]
    x_st = jnp.stack([x[:, :, d:d + t1, :] for d in range(kt)], axis=2)
    conv1 = jnp.einsum("oid,bidtn->botn", w1, x_st, precision=_HI)
    conv1 = conv1 + params["b1"][None, :, None, None]
    x_t1 = (conv1[:, :c1] + x_in) * jax.nn.sigmoid(conv1[:, c1:])

    # sconv
    x_c = jnp.einsum("knm,bitm->bitkn", params["Lk"], x_t1, precision=_HI)
    x_gc = jnp.einsum("iok,bitkn->botn", params["theta"], x_c, precision=_HI)
    x_gc = x_gc + params["bs"].reshape(1, c1, 1, 1)
    x_s = jnp.maximum(x_gc + x_t1, 0.0)

    # tconv2 relu
    t2 = t1 - kt + 1
    xs_p = jnp.pad(x_s, ((0, 0), (0, c2 - c1), (0, 0), (0, 0)))
    x_in2 = xs_p[:, :, kt - 1:, :]
    x_st2 = jnp.stack([x_s[:, :, d:d + t2, :] for d in range(kt)], axis=2)
    conv2 = jnp.einsum("oid,bidtn->botn", w2, x_st2, precision=_HI)
    conv2 = conv2 + params["b2"][None, :, None, None]
    x_t2 = jnp.maximum(conv2 + x_in2, 0.0)

    # layernorm over [n, c2]
    y = jnp.transpose(x_t2, (0, 2, 3, 1))
    mu = jnp.mean(y, axis=(2, 3), keepdims=True)
    var = jnp.mean((y - mu) ** 2, axis=(2, 3), keepdims=True)
    y = (y - mu) / jnp.sqrt(var + 1e-5) * params["gamma"] + params["beta"]
    return jnp.transpose(y, (0, 3, 1, 2))


# ----------------------------------------------------------------------------
if __name__ == "__main__":
    B, T, N = 2, 12, 16
    c0, c1, c2 = 4, 16, 32
    kt, ks = 3, 3

    key = jax.random.PRNGKey(0)
    k = jax.random.split(key, 12)

    def u(kk, shape, bound):
        return jax.random.uniform(kk, shape, jnp.float32, -bound, bound)

    params = {
        "kt": kt,
        "ks": ks,
        "w1": u(k[0], (2 * c1, c0, kt), 1.0 / math.sqrt(c0 * kt)),
        "b1": u(k[1], (2 * c1,), 1.0 / math.sqrt(c0 * kt)),
        "Lk": u(k[2], (ks, N, N), 1.0 / math.sqrt(N)),
        "theta": u(k[3], (c1, c1, ks), 1.0 / math.sqrt(c1 * ks)),
        "bs": u(k[4], (c1,), 1.0 / math.sqrt(c1 * ks)),
        "w2": u(k[5], (c2, c1, kt), 1.0 / math.sqrt(c1 * kt)),
        "b2": u(k[6], (c2,), 1.0 / math.sqrt(c1 * kt)),
        "gamma": 1.0 + 0.1 * jax.random.normal(k[7], (N, c2), jnp.float32),
        "beta": 0.1 * jax.random.normal(k[8], (N, c2), jnp.float32),
    }
    x = jax.random.normal(k[9], (B, c0, T, N), jnp.float32)

    out = jax.block_until_ready(st_conv_block_forward(x, params))
    assert out.shape == (B, c2, T - 2 * (kt - 1), N), out.shape

    ref = reference_forward(x, params)
    # bf16-fed MXU at default (single-pass) precision vs. the f32-HIGHEST reference;
    # residual/skip paths are exact VPU adds, so error is pure matmul rounding.
    ok = bool(jnp.allclose(out, ref, atol=5e-2, rtol=5e-2))
    assert ok, f"max abs err {float(jnp.max(jnp.abs(out - ref)))}"
    print("KERNEL_OK")
</pallas_src>

<mosaic_0001>
module attributes {stable_mosaic.version = 11 : i64} {
  func.func @_st_block_kernel(%arg0: i32, %arg1: memref<1x192x16xbf16, #tpu.memory_space<vmem>>, %arg2: memref<3x16x16xbf16, #tpu.memory_space<vmem>>, %arg3: memref<3x16x16xbf16, #tpu.memory_space<vmem>>, %arg4: memref<1x16xf32, #tpu.memory_space<vmem>>, %arg5: memref<1x16xf32, #tpu.memory_space<vmem>>, %arg6: memref<3x16x16xbf16, #tpu.memory_space<vmem>>, %arg7: memref<3x160x160xbf16, #tpu.memory_space<vmem>>, %arg8: memref<1x16xf32, #tpu.memory_space<vmem>>, %arg9: memref<3x16x32xbf16, #tpu.memory_space<vmem>>, %arg10: memref<1x32xf32, #tpu.memory_space<vmem>>, %arg11: memref<8x128xf32, #tpu.memory_space<vmem>>, %arg12: memref<128x8xf32, #tpu.memory_space<vmem>>, %arg13: memref<128x32xf32, #tpu.memory_space<vmem>>, %arg14: memref<128x32xf32, #tpu.memory_space<vmem>>, %arg15: memref<1x128x32xf32, #tpu.memory_space<vmem>>) attributes {dimension_semantics = [#tpu.dimension_semantics<parallel>], iteration_bounds = array<i64: 2>, scalar_prefetch = 0 : i64, scratch_operands = 0 : i64, tpu.core_type = #tpu.core_type<tc>, window_params = [{transform_indices = @transform_0, window_bounds = array<i64: 1, 192, 16>}, {pipeline_mode = #tpu.pipeline_mode<synchronous>, transform_indices = @transform_1, window_bounds = array<i64: 3, 16, 16>}, {pipeline_mode = #tpu.pipeline_mode<synchronous>, transform_indices = @transform_2, window_bounds = array<i64: 3, 16, 16>}, {pipeline_mode = #tpu.pipeline_mode<synchronous>, transform_indices = @transform_3, window_bounds = array<i64: 1, 16>}, {pipeline_mode = #tpu.pipeline_mode<synchronous>, transform_indices = @transform_4, window_bounds = array<i64: 1, 16>}, {pipeline_mode = #tpu.pipeline_mode<synchronous>, transform_indices = @transform_5, window_bounds = array<i64: 3, 16, 16>}, {pipeline_mode = #tpu.pipeline_mode<synchronous>, transform_indices = @transform_6, window_bounds = array<i64: 3, 160, 160>}, {pipeline_mode = #tpu.pipeline_mode<synchronous>, transform_indices = @transform_7, window_bounds = array<i64: 1, 16>}, {pipeline_mode = #tpu.pipeline_mode<synchronous>, transform_indices = @transform_8, window_bounds = array<i64: 3, 16, 32>}, {pipeline_mode = #tpu.pipeline_mode<synchronous>, transform_indices = @transform_9, window_bounds = array<i64: 1, 32>}, {pipeline_mode = #tpu.pipeline_mode<synchronous>, transform_indices = @transform_10, window_bounds = array<i64: 8, 128>}, {pipeline_mode = #tpu.pipeline_mode<synchronous>, transform_indices = @transform_11, window_bounds = array<i64: 128, 8>}, {pipeline_mode = #tpu.pipeline_mode<synchronous>, transform_indices = @transform_12, window_bounds = array<i64: 128, 32>}, {pipeline_mode = #tpu.pipeline_mode<synchronous>, transform_indices = @transform_13, window_bounds = array<i64: 128, 32>}, {transform_indices = @transform_14, window_bounds = array<i64: 1, 128, 32>}]} {
    %c0_i32 = arith.constant 0 : i32
    %0 = arith.index_cast %c0_i32 : i32 to index
    %c0 = arith.constant 0 : index
    %c0_0 = arith.constant 0 : index
    %1 = vector.load %arg1[%0, %c0, %c0_0] : memref<1x192x16xbf16, #tpu.memory_space<vmem>>, vector<1x192x16xbf16>
    %2 = vector.shape_cast %1 : vector<1x192x16xbf16> to vector<192x16xbf16>
    %3 = vector.extract_strided_slice %2 {offsets = [32, 0], sizes = [160, 16], strides = [1, 1]} : vector<192x16xbf16> to vector<160x16xbf16>
    %4 = arith.extf %3 : vector<160x16xbf16> to vector<160x16xf32>
    %c0_1 = arith.constant 0 : index
    %c0_2 = arith.constant 0 : index
    %5 = vector.load %arg4[%c0_1, %c0_2] : memref<1x16xf32, #tpu.memory_space<vmem>>, vector<1x16xf32>
    %6 = vector.broadcast %5 : vector<1x16xf32> to vector<160x16xf32>
    %7 = arith.addf %4, %6 : vector<160x16xf32>
    %cst = arith.constant 0.000000e+00 : f32
    %8 = vector.broadcast %cst : f32 to vector<160x16xf32>
    %c0_3 = arith.constant 0 : index
    %c0_4 = arith.constant 0 : index
    %9 = vector.load %arg5[%c0_3, %c0_4] : memref<1x16xf32, #tpu.memory_space<vmem>>, vector<1x16xf32>
    %10 = vector.broadcast %9 : vector<1x16xf32> to vector<160x16xf32>
    %11 = arith.addf %8, %10 : vector<160x16xf32>
    %12 = vector.extract_strided_slice %2 {offsets = [0, 0], sizes = [160, 16], strides = [1, 1]} : vector<192x16xbf16> to vector<160x16xbf16>
    %c0_5 = arith.constant 0 : index
    %c0_6 = arith.constant 0 : index
    %c0_7 = arith.constant 0 : index
    %13 = vector.load %arg2[%c0_5, %c0_6, %c0_7] : memref<3x16x16xbf16, #tpu.memory_space<vmem>>, vector<1x16x16xbf16>
    %14 = vector.shape_cast %13 : vector<1x16x16xbf16> to vector<16x16xbf16>
    %cst_8 = arith.constant dense<0.000000e+00> : vector<160x16xf32>
    %15 = tpu.matmul %12, %14, %cst_8 {dimension_numbers = #tpu.dot_dimension_numbers<[1], [0], [0], [1], [0, 0, 1, 1], [], []>} : vector<160x16xbf16>, vector<16x16xbf16>, vector<160x16xf32> -> vector<160x16xf32>
    %16 = arith.addf %7, %15 : vector<160x16xf32>
    %c0_9 = arith.constant 0 : index
    %c0_10 = arith.constant 0 : index
    %c0_11 = arith.constant 0 : index
    %17 = vector.load %arg3[%c0_9, %c0_10, %c0_11] : memref<3x16x16xbf16, #tpu.memory_space<vmem>>, vector<1x16x16xbf16>
    %18 = vector.shape_cast %17 : vector<1x16x16xbf16> to vector<16x16xbf16>
    %cst_12 = arith.constant dense<0.000000e+00> : vector<160x16xf32>
    %19 = tpu.matmul %12, %18, %cst_12 {dimension_numbers = #tpu.dot_dimension_numbers<[1], [0], [0], [1], [0, 0, 1, 1], [], []>} : vector<160x16xbf16>, vector<16x16xbf16>, vector<160x16xf32> -> vector<160x16xf32>
    %20 = arith.addf %11, %19 : vector<160x16xf32>
    %21 = vector.extract_strided_slice %2 {offsets = [16, 0], sizes = [160, 16], strides = [1, 1]} : vector<192x16xbf16> to vector<160x16xbf16>
    %c1 = arith.constant 1 : index
    %c0_13 = arith.constant 0 : index
    %c0_14 = arith.constant 0 : index
    %22 = vector.load %arg2[%c1, %c0_13, %c0_14] : memref<3x16x16xbf16, #tpu.memory_space<vmem>>, vector<1x16x16xbf16>
    %23 = vector.shape_cast %22 : vector<1x16x16xbf16> to vector<16x16xbf16>
    %cst_15 = arith.constant dense<0.000000e+00> : vector<160x16xf32>
    %24 = tpu.matmul %21, %23, %cst_15 {dimension_numbers = #tpu.dot_dimension_numbers<[1], [0], [0], [1], [0, 0, 1, 1], [], []>} : vector<160x16xbf16>, vector<16x16xbf16>, vector<160x16xf32> -> vector<160x16xf32>
    %25 = arith.addf %16, %24 : vector<160x16xf32>
    %c1_16 = arith.constant 1 : index
    %c0_17 = arith.constant 0 : index
    %c0_18 = arith.constant 0 : index
    %26 = vector.load %arg3[%c1_16, %c0_17, %c0_18] : memref<3x16x16xbf16, #tpu.memory_space<vmem>>, vector<1x16x16xbf16>
    %27 = vector.shape_cast %26 : vector<1x16x16xbf16> to vector<16x16xbf16>
    %cst_19 = arith.constant dense<0.000000e+00> : vector<160x16xf32>
    %28 = tpu.matmul %21, %27, %cst_19 {dimension_numbers = #tpu.dot_dimension_numbers<[1], [0], [0], [1], [0, 0, 1, 1], [], []>} : vector<160x16xbf16>, vector<16x16xbf16>, vector<160x16xf32> -> vector<160x16xf32>
    %29 = arith.addf %20, %28 : vector<160x16xf32>
    %30 = vector.extract_strided_slice %2 {offsets = [32, 0], sizes = [160, 16], strides = [1, 1]} : vector<192x16xbf16> to vector<160x16xbf16>
    %c2 = arith.constant 2 : index
    %c0_20 = arith.constant 0 : index
    %c0_21 = arith.constant 0 : index
    %31 = vector.load %arg2[%c2, %c0_20, %c0_21] : memref<3x16x16xbf16, #tpu.memory_space<vmem>>, vector<1x16x16xbf16>
    %32 = vector.shape_cast %31 : vector<1x16x16xbf16> to vector<16x16xbf16>
    %cst_22 = arith.constant dense<0.000000e+00> : vector<160x16xf32>
    %33 = tpu.matmul %30, %32, %cst_22 {dimension_numbers = #tpu.dot_dimension_numbers<[1], [0], [0], [1], [0, 0, 1, 1], [], []>} : vector<160x16xbf16>, vector<16x16xbf16>, vector<160x16xf32> -> vector<160x16xf32>
    %34 = arith.addf %25, %33 : vector<160x16xf32>
    %c2_23 = arith.constant 2 : index
    %c0_24 = arith.constant 0 : index
    %c0_25 = arith.constant 0 : index
    %35 = vector.load %arg3[%c2_23, %c0_24, %c0_25] : memref<3x16x16xbf16, #tpu.memory_space<vmem>>, vector<1x16x16xbf16>
    %36 = vector.shape_cast %35 : vector<1x16x16xbf16> to vector<16x16xbf16>
    %cst_26 = arith.constant dense<0.000000e+00> : vector<160x16xf32>
    %37 = tpu.matmul %30, %36, %cst_26 {dimension_numbers = #tpu.dot_dimension_numbers<[1], [0], [0], [1], [0, 0, 1, 1], [], []>} : vector<160x16xbf16>, vector<16x16xbf16>, vector<160x16xf32> -> vector<160x16xf32>
    %38 = arith.addf %29, %37 : vector<160x16xf32>
    %39 = arith.negf %38 : vector<160x16xf32>
    %40 = math.exp %39 : vector<160x16xf32>
    %cst_27 = arith.constant 1.000000e+00 : f32
    %41 = vector.broadcast %cst_27 : f32 to vector<160x16xf32>
    %42 = arith.addf %41, %40 : vector<160x16xf32>
    %43 = arith.divf %41, %42 : vector<160x16xf32>
    %44 = arith.mulf %34, %43 : vector<160x16xf32>
    %45 = arith.truncf %44 : vector<160x16xf32> to vector<160x16xbf16>
    %cst_28 = arith.constant 0.000000e+00 : f32
    %46 = vector.broadcast %cst_28 : f32 to vector<160x16xf32>
    %c0_29 = arith.constant 0 : index
    %c0_30 = arith.constant 0 : index
    %c0_31 = arith.constant 0 : index
    %47 = vector.load %arg6[%c0_29, %c0_30, %c0_31] : memref<3x16x16xbf16, #tpu.memory_space<vmem>>, vector<1x16x16xbf16>
    %48 = vector.shape_cast %47 : vector<1x16x16xbf16> to vector<16x16xbf16>
    %cst_32 = arith.constant dense<0.000000e+00> : vector<160x16xf32>
    %49 = tpu.matmul %45, %48, %cst_32 {dimension_numbers = #tpu.dot_dimension_numbers<[1], [0], [0], [1], [0, 0, 1, 1], [], []>} : vector<160x16xbf16>, vector<16x16xbf16>, vector<160x16xf32> -> vector<160x16xf32>
    %c0_33 = arith.constant 0 : index
    %c0_34 = arith.constant 0 : index
    %c0_35 = arith.constant 0 : index
    %50 = vector.load %arg7[%c0_33, %c0_34, %c0_35] : memref<3x160x160xbf16, #tpu.memory_space<vmem>>, vector<1x160x160xbf16>
    %51 = vector.shape_cast %50 : vector<1x160x160xbf16> to vector<160x160xbf16>
    %52 = arith.truncf %49 : vector<160x16xf32> to vector<160x16xbf16>
    %cst_36 = arith.constant dense<0.000000e+00> : vector<160x16xf32>
    %53 = tpu.matmul %51, %52, %cst_36 {dimension_numbers = #tpu.dot_dimension_numbers<[1], [0], [0], [1], [0, 0, 1, 1], [], []>} : vector<160x160xbf16>, vector<160x16xbf16>, vector<160x16xf32> -> vector<160x16xf32>
    %54 = arith.addf %46, %53 : vector<160x16xf32>
    %c1_37 = arith.constant 1 : index
    %c0_38 = arith.constant 0 : index
    %c0_39 = arith.constant 0 : index
    %55 = vector.load %arg6[%c1_37, %c0_38, %c0_39] : memref<3x16x16xbf16, #tpu.memory_space<vmem>>, vector<1x16x16xbf16>
    %56 = vector.shape_cast %55 : vector<1x16x16xbf16> to vector<16x16xbf16>
    %cst_40 = arith.constant dense<0.000000e+00> : vector<160x16xf32>
    %57 = tpu.matmul %45, %56, %cst_40 {dimension_numbers = #tpu.dot_dimension_numbers<[1], [0], [0], [1], [0, 0, 1, 1], [], []>} : vector<160x16xbf16>, vector<16x16xbf16>, vector<160x16xf32> -> vector<160x16xf32>
    %c1_41 = arith.constant 1 : index
    %c0_42 = arith.constant 0 : index
    %c0_43 = arith.constant 0 : index
    %58 = vector.load %arg7[%c1_41, %c0_42, %c0_43] : memref<3x160x160xbf16, #tpu.memory_space<vmem>>, vector<1x160x160xbf16>
    %59 = vector.shape_cast %58 : vector<1x160x160xbf16> to vector<160x160xbf16>
    %60 = arith.truncf %57 : vector<160x16xf32> to vector<160x16xbf16>
    %cst_44 = arith.constant dense<0.000000e+00> : vector<160x16xf32>
    %61 = tpu.matmul %59, %60, %cst_44 {dimension_numbers = #tpu.dot_dimension_numbers<[1], [0], [0], [1], [0, 0, 1, 1], [], []>} : vector<160x160xbf16>, vector<160x16xbf16>, vector<160x16xf32> -> vector<160x16xf32>
    %62 = arith.addf %54, %61 : vector<160x16xf32>
    %c2_45 = arith.constant 2 : index
    %c0_46 = arith.constant 0 : index
    %c0_47 = arith.constant 0 : index
    %63 = vector.load %arg6[%c2_45, %c0_46, %c0_47] : memref<3x16x16xbf16, #tpu.memory_space<vmem>>, vector<1x16x16xbf16>
    %64 = vector.shape_cast %63 : vector<1x16x16xbf16> to vector<16x16xbf16>
    %cst_48 = arith.constant dense<0.000000e+00> : vector<160x16xf32>
    %65 = tpu.matmul %45, %64, %cst_48 {dimension_numbers = #tpu.dot_dimension_numbers<[1], [0], [0], [1], [0, 0, 1, 1], [], []>} : vector<160x16xbf16>, vector<16x16xbf16>, vector<160x16xf32> -> vector<160x16xf32>
    %c2_49 = arith.constant 2 : index
    %c0_50 = arith.constant 0 : index
    %c0_51 = arith.constant 0 : index
    %66 = vector.load %arg7[%c2_49, %c0_50, %c0_51] : memref<3x160x160xbf16, #tpu.memory_space<vmem>>, vector<1x160x160xbf16>
    %67 = vector.shape_cast %66 : vector<1x160x160xbf16> to vector<160x160xbf16>
    %68 = arith.truncf %65 : vector<160x16xf32> to vector<160x16xbf16>
    %cst_52 = arith.constant dense<0.000000e+00> : vector<160x16xf32>
    %69 = tpu.matmul %67, %68, %cst_52 {dimension_numbers = #tpu.dot_dimension_numbers<[1], [0], [0], [1], [0, 0, 1, 1], [], []>} : vector<160x160xbf16>, vector<160x16xbf16>, vector<160x16xf32> -> vector<160x16xf32>
    %70 = arith.addf %62, %69 : vector<160x16xf32>
    %c0_53 = arith.constant 0 : index
    %c0_54 = arith.constant 0 : index
    %71 = vector.load %arg8[%c0_53, %c0_54] : memref<1x16xf32, #tpu.memory_space<vmem>>, vector<1x16xf32>
    %72 = vector.broadcast %71 : vector<1x16xf32> to vector<160x16xf32>
    %73 = arith.addf %70, %72 : vector<160x16xf32>
    %74 = arith.addf %73, %44 : vector<160x16xf32>
    %cst_55 = arith.constant 0.000000e+00 : f32
    %75 = vector.broadcast %cst_55 : f32 to vector<160x16xf32>
    %76 = arith.maximumf %74, %75 : vector<160x16xf32>
    %77 = vector.extract_strided_slice %76 {offsets = [32, 0], sizes = [128, 16], strides = [1, 1]} : vector<160x16xf32> to vector<128x16xf32>
    %cst_56 = arith.constant 0.000000e+00 : f32
    %78 = vector.broadcast %cst_56 : f32 to vector<128x16xf32>
    %79 = tpu.concatenate %77, %78 in 1 : vector<128x16xf32>, vector<128x16xf32> -> vector<128x32xf32>
    %c0_57 = arith.constant 0 : index
    %c0_58 = arith.constant 0 : index
    %80 = vector.load %arg10[%c0_57, %c0_58] : memref<1x32xf32, #tpu.memory_space<vmem>>, vector<1x32xf32>
    %81 = vector.broadcast %80 : vector<1x32xf32> to vector<128x32xf32>
    %82 = arith.addf %79, %81 : vector<128x32xf32>
    %83 = arith.truncf %76 : vector<160x16xf32> to vector<160x16xbf16>
    %84 = vector.extract_strided_slice %83 {offsets = [0, 0], sizes = [128, 16], strides = [1, 1]} : vector<160x16xbf16> to vector<128x16xbf16>
    %c0_59 = arith.constant 0 : index
    %c0_60 = arith.constant 0 : index
    %c0_61 = arith.constant 0 : index
    %85 = vector.load %arg9[%c0_59, %c0_60, %c0_61] : memref<3x16x32xbf16, #tpu.memory_space<vmem>>, vector<1x16x32xbf16>
    %86 = vector.shape_cast %85 : vector<1x16x32xbf16> to vector<16x32xbf16>
    %cst_62 = arith.constant dense<0.000000e+00> : vector<128x32xf32>
    %87 = tpu.matmul %84, %86, %cst_62 {dimension_numbers = #tpu.dot_dimension_numbers<[1], [0], [0], [1], [0, 0, 1, 1], [], []>} : vector<128x16xbf16>, vector<16x32xbf16>, vector<128x32xf32> -> vector<128x32xf32>
    %88 = arith.addf %82, %87 : vector<128x32xf32>
    %89 = vector.extract_strided_slice %83 {offsets = [16, 0], sizes = [128, 16], strides = [1, 1]} : vector<160x16xbf16> to vector<128x16xbf16>
    %c1_63 = arith.constant 1 : index
    %c0_64 = arith.constant 0 : index
    %c0_65 = arith.constant 0 : index
    %90 = vector.load %arg9[%c1_63, %c0_64, %c0_65] : memref<3x16x32xbf16, #tpu.memory_space<vmem>>, vector<1x16x32xbf16>
    %91 = vector.shape_cast %90 : vector<1x16x32xbf16> to vector<16x32xbf16>
    %cst_66 = arith.constant dense<0.000000e+00> : vector<128x32xf32>
    %92 = tpu.matmul %89, %91, %cst_66 {dimension_numbers = #tpu.dot_dimension_numbers<[1], [0], [0], [1], [0, 0, 1, 1], [], []>} : vector<128x16xbf16>, vector<16x32xbf16>, vector<128x32xf32> -> vector<128x32xf32>
    %93 = arith.addf %88, %92 : vector<128x32xf32>
    %94 = vector.extract_strided_slice %83 {offsets = [32, 0], sizes = [128, 16], strides = [1, 1]} : vector<160x16xbf16> to vector<128x16xbf16>
    %c2_67 = arith.constant 2 : index
    %c0_68 = arith.constant 0 : index
    %c0_69 = arith.constant 0 : index
    %95 = vector.load %arg9[%c2_67, %c0_68, %c0_69] : memref<3x16x32xbf16, #tpu.memory_space<vmem>>, vector<1x16x32xbf16>
    %96 = vector.shape_cast %95 : vector<1x16x32xbf16> to vector<16x32xbf16>
    %cst_70 = arith.constant dense<0.000000e+00> : vector<128x32xf32>
    %97 = tpu.matmul %94, %96, %cst_70 {dimension_numbers = #tpu.dot_dimension_numbers<[1], [0], [0], [1], [0, 0, 1, 1], [], []>} : vector<128x16xbf16>, vector<16x32xbf16>, vector<128x32xf32> -> vector<128x32xf32>
    %98 = arith.addf %93, %97 : vector<128x32xf32>
    %cst_71 = arith.constant 0.000000e+00 : f32
    %99 = vector.broadcast %cst_71 : f32 to vector<128x32xf32>
    %100 = arith.maximumf %98, %99 : vector<128x32xf32>
    %c0_72 = arith.constant 0 : index
    %c0_73 = arith.constant 0 : index
    %101 = vector.load %arg11[%c0_72, %c0_73] : memref<8x128xf32, #tpu.memory_space<vmem>>, vector<8x128xf32>
    %cst_74 = arith.constant dense<0.000000e+00> : vector<8x32xf32>
    %102 = tpu.matmul %101, %100, %cst_74 {dimension_numbers = #tpu.dot_dimension_numbers<[1], [0], [0], [1], [0, 0, 1, 1], [], []>} : vector<8x128xf32>, vector<128x32xf32>, vector<8x32xf32> -> vector<8x32xf32>
    %cst_75 = arith.constant dense<0.000000e+00> : vector<8xf32>
    %103 = vector.multi_reduction <add>, %102, %cst_75 [1] : vector<8x32xf32> to vector<8xf32>
    %104 = vector.shape_cast %103 : vector<8xf32> to vector<8x1xf32>
    %cst_76 = arith.constant 0.001953125 : f32
    %105 = vector.broadcast %cst_76 : f32 to vector<8x1xf32>
    %106 = arith.mulf %104, %105 : vector<8x1xf32>
    %c0_77 = arith.constant 0 : index
    %c0_78 = arith.constant 0 : index
    %107 = vector.load %arg12[%c0_77, %c0_78] : memref<128x8xf32, #tpu.memory_space<vmem>>, vector<128x8xf32>
    %108 = vector.shape_cast %106 : vector<8x1xf32> to vector<8x1xf32>
    %109 = vector.broadcast %108 : vector<8x1xf32> to vector<8x32xf32>
    %cst_79 = arith.constant dense<0.000000e+00> : vector<128x32xf32>
    %110 = tpu.matmul %107, %109, %cst_79 {dimension_numbers = #tpu.dot_dimension_numbers<[1], [0], [0], [1], [0, 0, 1, 1], [], []>} : vector<128x8xf32>, vector<8x32xf32>, vector<128x32xf32> -> vector<128x32xf32>
    %111 = arith.subf %100, %110 : vector<128x32xf32>
    %c0_80 = arith.constant 0 : index
    %c0_81 = arith.constant 0 : index
    %112 = vector.load %arg11[%c0_80, %c0_81] : memref<8x128xf32, #tpu.memory_space<vmem>>, vector<8x128xf32>
    %113 = arith.mulf %111, %111 : vector<128x32xf32>
    %cst_82 = arith.constant dense<0.000000e+00> : vector<8x32xf32>
    %114 = tpu.matmul %112, %113, %cst_82 {dimension_numbers = #tpu.dot_dimension_numbers<[1], [0], [0], [1], [0, 0, 1, 1], [], []>} : vector<8x128xf32>, vector<128x32xf32>, vector<8x32xf32> -> vector<8x32xf32>
    %cst_83 = arith.constant dense<0.000000e+00> : vector<8xf32>
    %115 = vector.multi_reduction <add>, %114, %cst_83 [1] : vector<8x32xf32> to vector<8xf32>
    %116 = vector.shape_cast %115 : vector<8xf32> to vector<8x1xf32>
    %cst_84 = arith.constant 0.001953125 : f32
    %117 = vector.broadcast %cst_84 : f32 to vector<8x1xf32>
    %118 = arith.mulf %116, %117 : vector<8x1xf32>
    %cst_85 = arith.constant 9.99999974E-6 : f32
    %119 = vector.broadcast %cst_85 : f32 to vector<8x1xf32>
    %120 = arith.addf %118, %119 : vector<8x1xf32>
    %121 = math.rsqrt %120 : vector<8x1xf32>
    %c0_86 = arith.constant 0 : index
    %c0_87 = arith.constant 0 : index
    %122 = vector.load %arg12[%c0_86, %c0_87] : memref<128x8xf32, #tpu.memory_space<vmem>>, vector<128x8xf32>
    %123 = vector.shape_cast %121 : vector<8x1xf32> to vector<8x1xf32>
    %124 = vector.broadcast %123 : vector<8x1xf32> to vector<8x32xf32>
    %cst_88 = arith.constant dense<0.000000e+00> : vector<128x32xf32>
    %125 = tpu.matmul %122, %124, %cst_88 {dimension_numbers = #tpu.dot_dimension_numbers<[1], [0], [0], [1], [0, 0, 1, 1], [], []>} : vector<128x8xf32>, vector<8x32xf32>, vector<128x32xf32> -> vector<128x32xf32>
    %126 = arith.mulf %111, %125 : vector<128x32xf32>
    %c0_89 = arith.constant 0 : index
    %c0_90 = arith.constant 0 : index
    %127 = vector.load %arg13[%c0_89, %c0_90] : memref<128x32xf32, #tpu.memory_space<vmem>>, vector<128x32xf32>
    %128 = arith.mulf %126, %127 : vector<128x32xf32>
    %c0_91 = arith.constant 0 : index
    %c0_92 = arith.constant 0 : index
    %129 = vector.load %arg14[%c0_91, %c0_92] : memref<128x32xf32, #tpu.memory_space<vmem>>, vector<128x32xf32>
    %130 = arith.addf %128, %129 : vector<128x32xf32>
    %131 = arith.index_cast %c0_i32 : i32 to index
    %c0_93 = arith.constant 0 : index
    %c0_94 = arith.constant 0 : index
    %132 = vector.load %arg15[%131, %c0_93, %c0_94] : memref<1x128x32xf32, #tpu.memory_space<vmem>>, vector<1x128x32xf32>
    %133 = vector.shape_cast %132 : vector<1x128x32xf32> to vector<128x32xf32>
    %134 = vector.shape_cast %130 : vector<128x32xf32> to vector<1x128x32xf32>
    tpu.vector_store %arg15[%131, %c0_93, %c0_94], %134 {strides = array<i32>} : memref<1x128x32xf32, #tpu.memory_space<vmem>>, vector<1x128x32xf32>,
    %c1_i32 = arith.constant 1 : i32
    return
  }
  func.func @transform_0(%arg0: i32) -> (i32, i32, i32) {
    %c0_i32 = arith.constant 0 : i32
    %c0_i32_0 = arith.constant 0 : i32
    %c0_i32_1 = arith.constant 0 : i32
    return %arg0, %c0_i32, %c0_i32_0 : i32, i32, i32
  }
  func.func @transform_1(%arg0: i32) -> (i32, i32, i32) {
    %c0_i32 = arith.constant 0 : i32
    %c0_i32_0 = arith.constant 0 : i32
    %c0_i32_1 = arith.constant 0 : i32
    %c0_i32_2 = arith.constant 0 : i32
    return %c0_i32, %c0_i32_0, %c0_i32_1 : i32, i32, i32
  }
  func.func @transform_2(%arg0: i32) -> (i32, i32, i32) {
    %c0_i32 = arith.constant 0 : i32
    %c0_i32_0 = arith.constant 0 : i32
    %c0_i32_1 = arith.constant 0 : i32
    %c0_i32_2 = arith.constant 0 : i32
    return %c0_i32, %c0_i32_0, %c0_i32_1 : i32, i32, i32
  }
  func.func @transform_3(%arg0: i32) -> (i32, i32) {
    %c0_i32 = arith.constant 0 : i32
    %c0_i32_0 = arith.constant 0 : i32
    %c0_i32_1 = arith.constant 0 : i32
    return %c0_i32, %c0_i32_0 : i32, i32
  }
  func.func @transform_4(%arg0: i32) -> (i32, i32) {
    %c0_i32 = arith.constant 0 : i32
    %c0_i32_0 = arith.constant 0 : i32
    %c0_i32_1 = arith.constant 0 : i32
    return %c0_i32, %c0_i32_0 : i32, i32
  }
  func.func @transform_5(%arg0: i32) -> (i32, i32, i32) {
    %c0_i32 = arith.constant 0 : i32
    %c0_i32_0 = arith.constant 0 : i32
    %c0_i32_1 = arith.constant 0 : i32
    %c0_i32_2 = arith.constant 0 : i32
    return %c0_i32, %c0_i32_0, %c0_i32_1 : i32, i32, i32
  }
  func.func @transform_6(%arg0: i32) -> (i32, i32, i32) {
    %c0_i32 = arith.constant 0 : i32
    %c0_i32_0 = arith.constant 0 : i32
    %c0_i32_1 = arith.constant 0 : i32
    %c0_i32_2 = arith.constant 0 : i32
    return %c0_i32, %c0_i32_0, %c0_i32_1 : i32, i32, i32
  }
  func.func @transform_7(%arg0: i32) -> (i32, i32) {
    %c0_i32 = arith.constant 0 : i32
    %c0_i32_0 = arith.constant 0 : i32
    %c0_i32_1 = arith.constant 0 : i32
    return %c0_i32, %c0_i32_0 : i32, i32
  }
  func.func @transform_8(%arg0: i32) -> (i32, i32, i32) {
    %c0_i32 = arith.constant 0 : i32
    %c0_i32_0 = arith.constant 0 : i32
    %c0_i32_1 = arith.constant 0 : i32
    %c0_i32_2 = arith.constant 0 : i32
    return %c0_i32, %c0_i32_0, %c0_i32_1 : i32, i32, i32
  }
  func.func @transform_9(%arg0: i32) -> (i32, i32) {
    %c0_i32 = arith.constant 0 : i32
    %c0_i32_0 = arith.constant 0 : i32
    %c0_i32_1 = arith.constant 0 : i32
    return %c0_i32, %c0_i32_0 : i32, i32
  }
  func.func @transform_10(%arg0: i32) -> (i32, i32) {
    %c0_i32 = arith.constant 0 : i32
    %c0_i32_0 = arith.constant 0 : i32
    %c0_i32_1 = arith.constant 0 : i32
    return %c0_i32, %c0_i32_0 : i32, i32
  }
  func.func @transform_11(%arg0: i32) -> (i32, i32) {
    %c0_i32 = arith.constant 0 : i32
    %c0_i32_0 = arith.constant 0 : i32
    %c0_i32_1 = arith.constant 0 : i32
    return %c0_i32, %c0_i32_0 : i32, i32
  }
  func.func @transform_12(%arg0: i32) -> (i32, i32) {
    %c0_i32 = arith.constant 0 : i32
    %c0_i32_0 = arith.constant 0 : i32
    %c0_i32_1 = arith.constant 0 : i32
    return %c0_i32, %c0_i32_0 : i32, i32
  }
  func.func @transform_13(%arg0: i32) -> (i32, i32) {
    %c0_i32 = arith.constant 0 : i32
    %c0_i32_0 = arith.constant 0 : i32
    %c0_i32_1 = arith.constant 0 : i32
    return %c0_i32, %c0_i32_0 : i32, i32
  }
  func.func @transform_14(%arg0: i32) -> (i32, i32, i32) {
    %c0_i32 = arith.constant 0 : i32
    %c0_i32_0 = arith.constant 0 : i32
    %c0_i32_1 = arith.constant 0 : i32
    return %arg0, %c0_i32, %c0_i32_0 : i32, i32, i32
  }
}

</mosaic_0001>

<llo_original>
// kernel: tpu_custom_call.1
$region0: #{tpu_custom_call.1}
  #allocation0 [shape = 'u32[]', space=smem, size = 0x4, offset = 0x4, fixed_abs, tag = 'smem constant byte address 0x4 - core index']
  #allocation1 [shape = 'u32[144,128]{1,0:T(1,128)}', space=vmem, size = 0x12000, scoped, tag = 'internal scratch']
  %s0 = inlined_call_operand.vmem [shape: bf16[2,192,16], index: 0, kind: input, shape index: {}]
  %s1 = inlined_call_operand.vmem [shape: bf16[3,16,16], index: 1, kind: input, shape index: {}]
  %s2 = inlined_call_operand.vmem [shape: bf16[3,16,16], index: 2, kind: input, shape index: {}]
  %s3 = inlined_call_operand.vmem [shape: f32[1,16], index: 3, kind: input, shape index: {}]
  %s4 = inlined_call_operand.vmem [shape: f32[1,16], index: 4, kind: input, shape index: {}]
  %s5 = inlined_call_operand.vmem [shape: bf16[3,16,16], index: 5, kind: input, shape index: {}]
  %s6 = inlined_call_operand.vmem [shape: bf16[3,160,160], index: 6, kind: input, shape index: {}]
  %s7 = inlined_call_operand.vmem [shape: f32[1,16], index: 7, kind: input, shape index: {}]
  %s8 = inlined_call_operand.vmem [shape: bf16[3,16,32], index: 8, kind: input, shape index: {}]
  %s9 = inlined_call_operand.vmem [shape: f32[1,32], index: 9, kind: input, shape index: {}]
  %s10 = inlined_call_operand.vmem [shape: f32[8,128], index: 10, kind: input, shape index: {}]
  %s11 = inlined_call_operand.vmem [shape: f32[128,8], index: 11, kind: input, shape index: {}]
  %s12 = inlined_call_operand.vmem [shape: f32[128,32], index: 12, kind: input, shape index: {}]
  %s13 = inlined_call_operand.vmem [shape: f32[128,32], index: 13, kind: input, shape index: {}]
  %s14 = inlined_call_operand.vmem [shape: f32[2,128,32], index: 14, kind: output, shape index: {}]
  %s15 = sld [smem:[#allocation0]]
  $region89: #{tpu_custom_call.1} parent=0
    _
  %s17 = ssub.s32 1, %s15
  %s18 = scalar_select 0, %s17, %s15
  loop: start=0, step=1, limit=4
  $region2: #{tpu_custom_call.1} parent=0 // loop_pre_header
    _
  $region3: #{tpu_custom_call.1} parent=0 // loop_header
    %s20 = sphi 0, %s24
    %p21 = scmp.ge.s32.totalorder %s20, 4
    %s30 = sphi 0, %s32
    %s33 = sphi 0, %s30
    %s34 = sphi 0, %s33
    %s50 = sphi 0, %s34
    %s54 = sphi 0, %s54
    %s56 = sphi 0, %s54
    %s57 = sphi 0, %s56
    %s71 = sphi 0, %s57
    %s75 = sphi 0, %s75
    %s77 = sphi 0, %s75
    %s78 = sphi 0, %s77
    %s92 = sphi 0, %s78
    %s96 = sphi 0, %s96
    %s98 = sphi 0, %s96
    %s99 = sphi 0, %s98
    %s113 = sphi 0, %s99
    %s117 = sphi 0, %s117
    %s119 = sphi 0, %s117
    %s120 = sphi 0, %s119
    %s134 = sphi 0, %s120
    %s138 = sphi 0, %s138
    %s140 = sphi 0, %s138
    %s141 = sphi 0, %s140
    %s155 = sphi 0, %s141
    %s159 = sphi 0, %s159
    %s161 = sphi 0, %s159
    %s162 = sphi 0, %s161
    %s176 = sphi 0, %s162
    %s180 = sphi 0, %s180
    %s182 = sphi 0, %s180
    %s183 = sphi 0, %s182
    %s197 = sphi 0, %s183
    %s201 = sphi 0, %s201
    %s203 = sphi 0, %s201
    %s204 = sphi 0, %s203
    %s218 = sphi 0, %s204
    %s222 = sphi 0, %s222
    %s224 = sphi 0, %s222
    %s225 = sphi 0, %s224
    %s239 = sphi 0, %s225
    %s243 = sphi 0, %s243
    %s245 = sphi 0, %s243
    %s246 = sphi 0, %s245
    %s260 = sphi 0, %s246
    %s264 = sphi 0, %s264
    %s266 = sphi 0, %s264
    %s267 = sphi 0, %s266
    %s281 = sphi 0, %s267
    %s285 = sphi 0, %s285
    %s287 = sphi 0, %s285
    %s288 = sphi 0, %s287
    %s302 = sphi 0, %s288
    %s306 = sphi 0, %s306
    %s308 = sphi 0, %s306
    %s309 = sphi 0, %s308
    %s323 = sphi 0, %s309
    %s329 = sphi 0, %s331
    %s332 = sphi 0, %s329
    %s333 = sphi 0, %s332
    %s349 = sphi 0, %s333
  $region4: #{tpu_custom_call.1} parent=0 // loop_header_branch
    %23 = sbr.rel (%p21) target = $region8
  $region5: #{tpu_custom_call.1} parent=0 // loop_body
    %s25 = ssub.s32 %s20, 1
    %s26 = ssub.s32 %s20, 2
    %s27 = sadd.s32 %s20, 1
    %s28 = ssub.s32 %s20, %s27
    %p29 = scmp.eq.s32.totalorder %s28, 0
    %s31 = sadd.s32 %s30, 1
    %s32 = scalar_select %p29, %s30, %s31
    %p35 = pneg %p29
    %p36 = scmp.eq.s32.totalorder %s20, 1
    %p37 = por %p35, %p36
    %p38 = scmp.ne.s32.totalorder %s30, %s33
    %p39 = scmp.eq.s32.totalorder %s20, 0
    %p40 = por %p38, %p39
    %p41 = scmp.ne.s32.totalorder %s30, %s33
    %p42 = scmp.eq.s32.totalorder %s25, 1
    %p43 = por %p41, %p42
    %p44 = scmp.ne.s32.totalorder %s33, %s34
    %p45 = scmp.eq.s32.totalorder %s25, 0
    %p46 = por %p44, %p45
    %p47 = scmp.ne.s32.totalorder %s33, %s34
    %p48 = scmp.eq.s32.totalorder %s26, 1
    %p49 = por %p47, %p48
    %p51 = scmp.ne.s32.totalorder %s34, %s50
    %p52 = scmp.eq.s32.totalorder %s26, 0
    %p53 = por %p51, %p52
    %s55 = sadd.s32 %s54, 1
    %p58 = scmp.eq.s32.totalorder %s20, 1
    %p59 = scmp.ne.s32.totalorder %s54, %s56
    %p60 = scmp.eq.s32.totalorder %s20, 0
    %p61 = por %p59, %p60
    %p62 = scmp.ne.s32.totalorder %s54, %s56
    %p63 = scmp.eq.s32.totalorder %s25, 1
    %p64 = por %p62, %p63
    %p65 = scmp.ne.s32.totalorder %s56, %s57
    %p66 = scmp.eq.s32.totalorder %s25, 0
    %p67 = por %p65, %p66
    %p68 = scmp.ne.s32.totalorder %s56, %s57
    %p69 = scmp.eq.s32.totalorder %s26, 1
    %p70 = por %p68, %p69
    %p72 = scmp.ne.s32.totalorder %s57, %s71
    %p73 = scmp.eq.s32.totalorder %s26, 0
    %p74 = por %p72, %p73
    %s76 = sadd.s32 %s75, 1
    %p79 = scmp.eq.s32.totalorder %s20, 1
    %p80 = scmp.ne.s32.totalorder %s75, %s77
    %p81 = scmp.eq.s32.totalorder %s20, 0
    %p82 = por %p80, %p81
    %p83 = scmp.ne.s32.totalorder %s75, %s77
    %p84 = scmp.eq.s32.totalorder %s25, 1
    %p85 = por %p83, %p84
    %p86 = scmp.ne.s32.totalorder %s77, %s78
    %p87 = scmp.eq.s32.totalorder %s25, 0
    %p88 = por %p86, %p87
    %p89 = scmp.ne.s32.totalorder %s77, %s78
    %p90 = scmp.eq.s32.totalorder %s26, 1
    %p91 = por %p89, %p90
    %p93 = scmp.ne.s32.totalorder %s78, %s92
    %p94 = scmp.eq.s32.totalorder %s26, 0
    %p95 = por %p93, %p94
    %s97 = sadd.s32 %s96, 1
    %p100 = scmp.eq.s32.totalorder %s20, 1
    %p101 = scmp.ne.s32.totalorder %s96, %s98
    %p102 = scmp.eq.s32.totalorder %s20, 0
    %p103 = por %p101, %p102
    %p104 = scmp.ne.s32.totalorder %s96, %s98
    %p105 = scmp.eq.s32.totalorder %s25, 1
    %p106 = por %p104, %p105
    %p107 = scmp.ne.s32.totalorder %s98, %s99
    %p108 = scmp.eq.s32.totalorder %s25, 0
    %p109 = por %p107, %p108
    %p110 = scmp.ne.s32.totalorder %s98, %s99
    %p111 = scmp.eq.s32.totalorder %s26, 1
    %p112 = por %p110, %p111
    %p114 = scmp.ne.s32.totalorder %s99, %s113
    %p115 = scmp.eq.s32.totalorder %s26, 0
    %p116 = por %p114, %p115
    %s118 = sadd.s32 %s117, 1
    %p121 = scmp.eq.s32.totalorder %s20, 1
    %p122 = scmp.ne.s32.totalorder %s117, %s119
    %p123 = scmp.eq.s32.totalorder %s20, 0
    %p124 = por %p122, %p123
    %p125 = scmp.ne.s32.totalorder %s117, %s119
    %p126 = scmp.eq.s32.totalorder %s25, 1
    %p127 = por %p125, %p126
    %p128 = scmp.ne.s32.totalorder %s119, %s120
    %p129 = scmp.eq.s32.totalorder %s25, 0
    %p130 = por %p128, %p129
    %p131 = scmp.ne.s32.totalorder %s119, %s120
    %p132 = scmp.eq.s32.totalorder %s26, 1
    %p133 = por %p131, %p132
    %p135 = scmp.ne.s32.totalorder %s120, %s134
    %p136 = scmp.eq.s32.totalorder %s26, 0
    %p137 = por %p135, %p136
    %s139 = sadd.s32 %s138, 1
    %p142 = scmp.eq.s32.totalorder %s20, 1
    %p143 = scmp.ne.s32.totalorder %s138, %s140
    %p144 = scmp.eq.s32.totalorder %s20, 0
    %p145 = por %p143, %p144
    %p146 = scmp.ne.s32.totalorder %s138, %s140
    %p147 = scmp.eq.s32.totalorder %s25, 1
    %p148 = por %p146, %p147
    %p149 = scmp.ne.s32.totalorder %s140, %s141
    %p150 = scmp.eq.s32.totalorder %s25, 0
    %p151 = por %p149, %p150
    %p152 = scmp.ne.s32.totalorder %s140, %s141
    %p153 = scmp.eq.s32.totalorder %s26, 1
    %p154 = por %p152, %p153
    %p156 = scmp.ne.s32.totalorder %s141, %s155
    %p157 = scmp.eq.s32.totalorder %s26, 0
    %p158 = por %p156, %p157
    %s160 = sadd.s32 %s159, 1
    %p163 = scmp.eq.s32.totalorder %s20, 1
    %p164 = scmp.ne.s32.totalorder %s159, %s161
    %p165 = scmp.eq.s32.totalorder %s20, 0
    %p166 = por %p164, %p165
    %p167 = scmp.ne.s32.totalorder %s159, %s161
    %p168 = scmp.eq.s32.totalorder %s25, 1
    %p169 = por %p167, %p168
    %p170 = scmp.ne.s32.totalorder %s161, %s162
    %p171 = scmp.eq.s32.totalorder %s25, 0
    %p172 = por %p170, %p171
    %p173 = scmp.ne.s32.totalorder %s161, %s162
    %p174 = scmp.eq.s32.totalorder %s26, 1
    %p175 = por %p173, %p174
    %p177 = scmp.ne.s32.totalorder %s162, %s176
    %p178 = scmp.eq.s32.totalorder %s26, 0
    %p179 = por %p177, %p178
    %s181 = sadd.s32 %s180, 1
    %p184 = scmp.eq.s32.totalorder %s20, 1
    %p185 = scmp.ne.s32.totalorder %s180, %s182
    %p186 = scmp.eq.s32.totalorder %s20, 0
    %p187 = por %p185, %p186
    %p188 = scmp.ne.s32.totalorder %s180, %s182
    %p189 = scmp.eq.s32.totalorder %s25, 1
    %p190 = por %p188, %p189
    %p191 = scmp.ne.s32.totalorder %s182, %s183
    %p192 = scmp.eq.s32.totalorder %s25, 0
    %p193 = por %p191, %p192
    %p194 = scmp.ne.s32.totalorder %s182, %s183
    %p195 = scmp.eq.s32.totalorder %s26, 1
    %p196 = por %p194, %p195
    %p198 = scmp.ne.s32.totalorder %s183, %s197
    %p199 = scmp.eq.s32.totalorder %s26, 0
    %p200 = por %p198, %p199
    %s202 = sadd.s32 %s201, 1
    %p205 = scmp.eq.s32.totalorder %s20, 1
    %p206 = scmp.ne.s32.totalorder %s201, %s203
    %p207 = scmp.eq.s32.totalorder %s20, 0
    %p208 = por %p206, %p207
    %p209 = scmp.ne.s32.totalorder %s201, %s203
    %p210 = scmp.eq.s32.totalorder %s25, 1
    %p211 = por %p209, %p210
    %p212 = scmp.ne.s32.totalorder %s203, %s204
    %p213 = scmp.eq.s32.totalorder %s25, 0
    %p214 = por %p212, %p213
    %p215 = scmp.ne.s32.totalorder %s203, %s204
    %p216 = scmp.eq.s32.totalorder %s26, 1
    %p217 = por %p215, %p216
    %p219 = scmp.ne.s32.totalorder %s204, %s218
    %p220 = scmp.eq.s32.totalorder %s26, 0
    %p221 = por %p219, %p220
    %s223 = sadd.s32 %s222, 1
    %p226 = scmp.eq.s32.totalorder %s20, 1
    %p227 = scmp.ne.s32.totalorder %s222, %s224
    %p228 = scmp.eq.s32.totalorder %s20, 0
    %p229 = por %p227, %p228
    %p230 = scmp.ne.s32.totalorder %s222, %s224
    %p231 = scmp.eq.s32.totalorder %s25, 1
    %p232 = por %p230, %p231
    %p233 = scmp.ne.s32.totalorder %s224, %s225
    %p234 = scmp.eq.s32.totalorder %s25, 0
    %p235 = por %p233, %p234
    %p236 = scmp.ne.s32.totalorder %s224, %s225
    %p237 = scmp.eq.s32.totalorder %s26, 1
    %p238 = por %p236, %p237
    %p240 = scmp.ne.s32.totalorder %s225, %s239
    %p241 = scmp.eq.s32.totalorder %s26, 0
    %p242 = por %p240, %p241
    %s244 = sadd.s32 %s243, 1
    %p247 = scmp.eq.s32.totalorder %s20, 1
    %p248 = scmp.ne.s32.totalorder %s243, %s245
    %p249 = scmp.eq.s32.totalorder %s20, 0
    %p250 = por %p248, %p249
    %p251 = scmp.ne.s32.totalorder %s243, %s245
    %p252 = scmp.eq.s32.totalorder %s25, 1
    %p253 = por %p251, %p252
    %p254 = scmp.ne.s32.totalorder %s245, %s246
    %p255 = scmp.eq.s32.totalorder %s25, 0
    %p256 = por %p254, %p255
    %p257 = scmp.ne.s32.totalorder %s245, %s246
    %p258 = scmp.eq.s32.totalorder %s26, 1
    %p259 = por %p257, %p258
    %p261 = scmp.ne.s32.totalorder %s246, %s260
    %p262 = scmp.eq.s32.totalorder %s26, 0
    %p263 = por %p261, %p262
    %s265 = sadd.s32 %s264, 1
    %p268 = scmp.eq.s32.totalorder %s20, 1
    %p269 = scmp.ne.s32.totalorder %s264, %s266
    %p270 = scmp.eq.s32.totalorder %s20, 0
    %p271 = por %p269, %p270
    %p272 = scmp.ne.s32.totalorder %s264, %s266
    %p273 = scmp.eq.s32.totalorder %s25, 1
    %p274 = por %p272, %p273
    %p275 = scmp.ne.s32.totalorder %s266, %s267
    %p276 = scmp.eq.s32.totalorder %s25, 0
    %p277 = por %p275, %p276
    %p278 = scmp.ne.s32.totalorder %s266, %s267
    %p279 = scmp.eq.s32.totalorder %s26, 1
    %p280 = por %p278, %p279
    %p282 = scmp.ne.s32.totalorder %s267, %s281
    %p283 = scmp.eq.s32.totalorder %s26, 0
    %p284 = por %p282, %p283
    %s286 = sadd.s32 %s285, 1
    %p289 = scmp.eq.s32.totalorder %s20, 1
    %p290 = scmp.ne.s32.totalorder %s285, %s287
    %p291 = scmp.eq.s32.totalorder %s20, 0
    %p292 = por %p290, %p291
    %p293 = scmp.ne.s32.totalorder %s285, %s287
    %p294 = scmp.eq.s32.totalorder %s25, 1
    %p295 = por %p293, %p294
    %p296 = scmp.ne.s32.totalorder %s287, %s288
    %p297 = scmp.eq.s32.totalorder %s25, 0
    %p298 = por %p296, %p297
    %p299 = scmp.ne.s32.totalorder %s287, %s288
    %p300 = scmp.eq.s32.totalorder %s26, 1
    %p301 = por %p299, %p300
    %p303 = scmp.ne.s32.totalorder %s288, %s302
    %p304 = scmp.eq.s32.totalorder %s26, 0
    %p305 = por %p303, %p304
    %s307 = sadd.s32 %s306, 1
    %p310 = scmp.eq.s32.totalorder %s20, 1
    %p311 = scmp.ne.s32.totalorder %s306, %s308
    %p312 = scmp.eq.s32.totalorder %s20, 0
    %p313 = por %p311, %p312
    %p314 = scmp.ne.s32.totalorder %s306, %s308
    %p315 = scmp.eq.s32.totalorder %s25, 1
    %p316 = por %p314, %p315
    %p317 = scmp.ne.s32.totalorder %s308, %s309
    %p318 = scmp.eq.s32.totalorder %s25, 0
    %p319 = por %p317, %p318
    %p320 = scmp.ne.s32.totalorder %s308, %s309
    %p321 = scmp.eq.s32.totalorder %s26, 1
    %p322 = por %p320, %p321
    %p324 = scmp.ne.s32.totalorder %s309, %s323
    %p325 = scmp.eq.s32.totalorder %s26, 0
    %p326 = por %p324, %p325
    %s327 = ssub.s32 %s20, %s27
    %p328 = scmp.eq.s32.totalorder %s327, 0
    %s330 = sadd.s32 %s329, 1
    %s331 = scalar_select %p328, %s329, %s330
    %p334 = pneg %p328
    %p335 = scmp.eq.s32.totalorder %s20, 1
    %p336 = por %p334, %p335
    %p337 = scmp.ne.s32.totalorder %s329, %s332
    %p338 = scmp.eq.s32.totalorder %s20, 0
    %p339 = por %p337, %p338
    %p340 = scmp.ne.s32.totalorder %s329, %s332
    %p341 = scmp.eq.s32.totalorder %s25, 1
    %p342 = por %p340, %p341
    %p343 = scmp.ne.s32.totalorder %s332, %s333
    %p344 = scmp.eq.s32.totalorder %s25, 0
    %p345 = por %p343, %p344
    %p346 = scmp.ne.s32.totalorder %s332, %s333
    %p347 = scmp.eq.s32.totalorder %s26, 1
    %p348 = por %p346, %p347
    %p350 = scmp.ne.s32.totalorder %s333, %s349
    %p351 = scmp.eq.s32.totalorder %s26, 0
    %p352 = por %p350, %p351
    %p353 = scmp.le.s32.totalorder 1, %s20
    %p354 = scmp.lt.s32.totalorder %s20, 3
    %p355 = pnand %p353, %p354
    %p356 = pneg %p355
    // Predicated region
    $region9: #{tpu_custom_call.1} parent=5 // pred_check
      _
    $region10: #{tpu_custom_call.1} parent=5 // pred_check_branch
      %358 = sbr.rel (%p355) target = $region12
    $region11: #{tpu_custom_call.1} parent=5 // pred_region
      %s359 = ssub.s32 %s20, 1
      // Predicated region
      $region13: #{tpu_custom_call.1} parent=11 // pred_check
        %p360 = pneg %p67
      $region14: #{tpu_custom_call.1} parent=11 // pred_check_branch
        %362 = sbr.rel (%p360) target = $region16
      $region15: #{tpu_custom_call.1} parent=11 // pred_region
        _
      $region16: #{tpu_custom_call.1} parent=11 // pred_fallthru
        _
      // Predicated region
      $region17: #{tpu_custom_call.1} parent=11 // pred_check
        %p363 = pneg %p88
      $region18: #{tpu_custom_call.1} parent=11 // pred_check_branch
        %365 = sbr.rel (%p363) target = $region20
      $region19: #{tpu_custom_call.1} parent=11 // pred_region
        _
      $region20: #{tpu_custom_call.1} parent=11 // pred_fallthru
        _
      // Predicated region
      $region21: #{tpu_custom_call.1} parent=11 // pred_check
        %p366 = pneg %p109
      $region22: #{tpu_custom_call.1} parent=11 // pred_check_branch
        %368 = sbr.rel (%p366) target = $region24
      $region23: #{tpu_custom_call.1} parent=11 // pred_region
        _
      $region24: #{tpu_custom_call.1} parent=11 // pred_fallthru
        _
      // Predicated region
      $region25: #{tpu_custom_call.1} parent=11 // pred_check
        %p369 = pneg %p130
      $region26: #{tpu_custom_call.1} parent=11 // pred_check_branch
        %371 = sbr.rel (%p369) target = $region28
      $region27: #{tpu_custom_call.1} parent=11 // pred_region
        _
      $region28: #{tpu_custom_call.1} parent=11 // pred_fallthru
        _
      // Predicated region
      $region29: #{tpu_custom_call.1} parent=11 // pred_check
        %p372 = pneg %p151
      $region30: #{tpu_custom_call.1} parent=11 // pred_check_branch
        %374 = sbr.rel (%p372) target = $region32
      $region31: #{tpu_custom_call.1} parent=11 // pred_region
        _
      $region32: #{tpu_custom_call.1} parent=11 // pred_fallthru
        _
      // Predicated region
      $region33: #{tpu_custom_call.1} parent=11 // pred_check
        %p375 = pneg %p172
      $region34: #{tpu_custom_call.1} parent=11 // pred_check_branch
        %377 = sbr.rel (%p375) target = $region36
      $region35: #{tpu_custom_call.1} parent=11 // pred_region
        _
      $region36: #{tpu_custom_call.1} parent=11 // pred_fallthru
        _
      // Predicated region
      $region37: #{tpu_custom_call.1} parent=11 // pred_check
        %p378 = pneg %p193
      $region38: #{tpu_custom_call.1} parent=11 // pred_check_branch
        %380 = sbr.rel (%p378) target = $region40
      $region39: #{tpu_custom_call.1} parent=11 // pred_region
        _
      $region40: #{tpu_custom_call.1} parent=11 // pred_fallthru
        _
      // Predicated region
      $region41: #{tpu_custom_call.1} parent=11 // pred_check
        %p381 = pneg %p214
      $region42: #{tpu_custom_call.1} parent=11 // pred_check_branch
        %383 = sbr.rel (%p381) target = $region44
      $region43: #{tpu_custom_call.1} parent=11 // pred_region
        _
      $region44: #{tpu_custom_call.1} parent=11 // pred_fallthru
        _
      // Predicated region
      $region45: #{tpu_custom_call.1} parent=11 // pred_check
        %p384 = pneg %p235
      $region46: #{tpu_custom_call.1} parent=11 // pred_check_branch
        %386 = sbr.rel (%p384) target = $region48
      $region47: #{tpu_custom_call.1} parent=11 // pred_region
        _
      $region48: #{tpu_custom_call.1} parent=11 // pred_fallthru
        _
      // Predicated region
      $region49: #{tpu_custom_call.1} parent=11 // pred_check
        %p387 = pneg %p256
      $region50: #{tpu_custom_call.1} parent=11 // pred_check_branch
        %389 = sbr.rel (%p387) target = $region52
      $region51: #{tpu_custom_call.1} parent=11 // pred_region
        _
      $region52: #{tpu_custom_call.1} parent=11 // pred_fallthru
        _
      // Predicated region
      $region53: #{tpu_custom_call.1} parent=11 // pred_check
        %p390 = pneg %p277
      $region54: #{tpu_custom_call.1} parent=11 // pred_check_branch
        %392 = sbr.rel (%p390) target = $region56
      $region55: #{tpu_custom_call.1} parent=11 // pred_region
        _
      $region56: #{tpu_custom_call.1} parent=11 // pred_fallthru
        _
      // Predicated region
      $region57: #{tpu_custom_call.1} parent=11 // pred_check
        %p393 = pneg %p298
      $region58: #{tpu_custom_call.1} parent=11 // pred_check_branch
        %395 = sbr.rel (%p393) target = $region60
      $region59: #{tpu_custom_call.1} parent=11 // pred_region
        _
      $region60: #{tpu_custom_call.1} parent=11 // pred_fallthru
        _
      // Predicated region
      $region61: #{tpu_custom_call.1} parent=11 // pred_check
        %p396 = pneg %p319
      $region62: #{tpu_custom_call.1} parent=11 // pred_check_branch
        %398 = sbr.rel (%p396) target = $region64
      $region63: #{tpu_custom_call.1} parent=11 // pred_region
        _
      $region64: #{tpu_custom_call.1} parent=11 // pred_fallthru
        _
    $region12: #{tpu_custom_call.1} parent=5 // pred_fallthru
      _
    %p399 = scmp.lt.s32.totalorder %s20, 2
    // Predicated region
    $region65: #{tpu_custom_call.1} parent=5 // pred_check
      %p400 = pneg %p399
    $region66: #{tpu_custom_call.1} parent=5 // pred_check_branch
      %402 = sbr.rel (%p400) target = $region68
    $region67: #{tpu_custom_call.1} parent=5 // pred_region
      // Predicated region
      $region69: #{tpu_custom_call.1} parent=67 // pred_check
        %p403 = pneg %p40
      $region70: #{tpu_custom_call.1} parent=67 // pred_check_branch
        %405 = sbr.rel (%p403) target = $region72
      $region71: #{tpu_custom_call.1} parent=67 // pred_region
        %p406 = scmp.lt.s32.totalorder %s20, 1
        %s407 = scalar_select %p406, %s20, 1
        %s408 = smul.addr %s407, 24
        %s409 = smul.addr %s408, 4
        %s410 = scalar_lea.vmem %s0, %s409
      $region72: #{tpu_custom_call.1} parent=67 // pred_fallthru
        _
    $region68: #{tpu_custom_call.1} parent=5 // pred_fallthru
      _
    %p411 = scmp.le.s32.totalorder 1, %s20
    %p412 = scmp.lt.s32.totalorder %s20, 3
    %p413 = pnand %p411, %p412
    %p414 = pneg %p413
    // Predicated region
    $region73: #{tpu_custom_call.1} parent=5 // pred_check
      _
    $region74: #{tpu_custom_call.1} parent=5 // pred_check_branch
      %416 = sbr.rel (%p413) target = $region76
    $region75: #{tpu_custom_call.1} parent=5 // pred_region
      %s417 = ssub.s32 %s20, 1
      %p418 = scmp.lt.s32.totalorder %s25, 1
      %s419 = scalar_select %p418, %s25, 1
      %s420 = smul.addr %s419, 24
      %s421 = smul.addr %s420, 4
      %s422 = scalar_lea.vmem %s0, %s421
      %p423 = pneg %p46
      %p424 = pneg %p43
      %p425 = pneg %p67
      %p426 = pneg %p64
      %p427 = pneg %p88
      %p428 = pneg %p85
      %p429 = pneg %p109
      %p430 = pneg %p106
      %p431 = pneg %p130
      %p432 = pneg %p127
      %p433 = pneg %p151
      %p434 = pneg %p148
      %p435 = pneg %p172
      %p436 = pneg %p169
      %p437 = pneg %p193
      %p438 = pneg %p190
      %p439 = pneg %p214
      %p440 = pneg %p211
      %p441 = pneg %p235
      %p442 = pneg %p232
      %p443 = pneg %p256
      %p444 = pneg %p253
      %p445 = pneg %p277
      %p446 = pneg %p274
      %p447 = pneg %p298
      %p448 = pneg %p295
      %p449 = pneg %p319
      %p450 = pneg %p316
      %p451 = pneg %p345
      %p452 = pneg %p342
      %p453 = scmp.lt.s32.totalorder %s25, 1
      %s454 = scalar_select %p453, %s25, 1
      %s455 = smul.addr %s454, 16
      %s456 = smul.addr %s455, 8
      %s457 = scalar_lea.vmem %s14, %s456
      %p458 = scmp.lt.s32.totalorder %s25, 1
      %s459 = scalar_select %p458, %s25, 1
      %s460 = smul.addr %s459, 24
      %s461 = smul.addr %s460, 4
      %s462 = scalar_lea.vmem %s0, %s461
      %p463 = scmp.lt.s32.totalorder %s25, 1
      %s464 = scalar_select %p463, %s25, 1
      %s465 = smul.addr %s464, 16
      %s466 = smul.addr %s465, 8
      %s467 = scalar_lea.vmem %s14, %s466
      %v469 = vld [vmem:[%s462] sm:$0xf]
      %v470 = vld [vmem:[%s462 + $0x4] sm:$0xf]
      %v471 = vld [vmem:[%s462 + $0x8] sm:$0xf]
      %v472 = vld [vmem:[%s462 + $0xc] sm:$0xf]
      %v473 = vld [vmem:[%s462 + $0x10] sm:$0xf]
      %v474 = vld [vmem:[%s462 + $0x14] sm:$0xf]
      %v475 = vld [vmem:[%s462 + $0x18] sm:$0xf]
      %v476 = vld [vmem:[%s462 + $0x1c] sm:$0xf]
      %v477 = vld [vmem:[%s462 + $0x20] sm:$0xf]
      %v478 = vld [vmem:[%s462 + $0x24] sm:$0xf]
      %v479 = vld [vmem:[%s462 + $0x28] sm:$0xf]
      %v480 = vld [vmem:[%s462 + $0x2c] sm:$0xf]
      %v481 = vld [vmem:[%s462 + $0x30] sm:$0xf]
      %v482 = vld [vmem:[%s462 + $0x34] sm:$0xf]
      %v483 = vld [vmem:[%s462 + $0x38] sm:$0xf]
      %v484 = vld [vmem:[%s462 + $0x3c] sm:$0xf]
      %v485 = vld [vmem:[%s462 + $0x40] sm:$0xf]
      %v486 = vld [vmem:[%s462 + $0x44] sm:$0xf]
      %v487 = vld [vmem:[%s462 + $0x48] sm:$0xf]
      %v488 = vld [vmem:[%s462 + $0x4c] sm:$0xf]
      %v489 = vld [vmem:[%s462 + $0x50] sm:$0xf]
      %v490 = vld [vmem:[%s462 + $0x54] sm:$0xf]
      %v491 = vld [vmem:[%s462 + $0x58] sm:$0xf]
      %v492 = vld [vmem:[%s462 + $0x5c] sm:$0xf]
      %v493 = vunpack.c.l.bf16 %v473
      %v494 = vunpack.c.l.bf16 %v474
      %v495 = vunpack.c.l.bf16 %v475
      %v496 = vunpack.c.l.bf16 %v476
      %v497 = vunpack.c.l.bf16 %v477
      %v498 = vunpack.c.l.bf16 %v478
      %v499 = vunpack.c.l.bf16 %v479
      %v500 = vunpack.c.l.bf16 %v480
      %v501 = vunpack.c.l.bf16 %v481
      %v502 = vunpack.c.l.bf16 %v482
      %v503 = vunpack.c.l.bf16 %v483
      %v504 = vunpack.c.l.bf16 %v484
      %v505 = vunpack.c.l.bf16 %v485
      %v506 = vunpack.c.l.bf16 %v486
      %v507 = vunpack.c.l.bf16 %v487
      %v508 = vunpack.c.l.bf16 %v488
      %v509 = vunpack.c.l.bf16 %v489
      %v510 = vunpack.c.l.bf16 %v490
      %v511 = vunpack.c.l.bf16 %v491
      %v512 = vunpack.c.l.bf16 %v492
      %v513 = vld [vmem:[%s3] sm:$0x1]
      %v515 = vlaneseq
      %v516 = vshrl.u32 %v515, 7
      %v517 = vsub.s32 0, %v516
      %v518 = vrot.slane %v513, %v517
      %v520 = vadd.f32 %v493, %v518
      %v521 = vadd.f32 %v494, %v518
      %v522 = vadd.f32 %v495, %v518
      %v523 = vadd.f32 %v496, %v518
      %v524 = vadd.f32 %v497, %v518
      %v525 = vadd.f32 %v498, %v518
      %v526 = vadd.f32 %v499, %v518
      %v527 = vadd.f32 %v500, %v518
      %v528 = vadd.f32 %v501, %v518
      %v529 = vadd.f32 %v502, %v518
      %v530 = vadd.f32 %v503, %v518
      %v531 = vadd.f32 %v504, %v518
      %v532 = vadd.f32 %v505, %v518
      %v533 = vadd.f32 %v506, %v518
      %v534 = vadd.f32 %v507, %v518
      %v535 = vadd.f32 %v508, %v518
      %v536 = vadd.f32 %v509, %v518
      %v537 = vadd.f32 %v510, %v518
      %v538 = vadd.f32 %v511, %v518
      %v539 = vadd.f32 %v512, %v518
      %v540 = vld [vmem:[%s4] sm:$0x1]
      %v542 = vlaneseq
      %v543 = vshrl.u32 %v542, 7
      %v544 = vsub.s32 0, %v543
      %v545 = vrot.slane %v540, %v544
      %v547 = vadd.f32 %v545, 0.0
      %v548 = vld [vmem:[%s1] sm:$0xf]
      %v549 = vld [vmem:[%s1 + $0x4] sm:$0xf]
      %v570 = vunpack.c.l.b16 %v469
      %v571 = vunpack.c.l.b16 %v470
      %v572 = vunpack.c.l.b16 %v471
      %v573 = vunpack.c.l.b16 %v472
      %v574 = vunpack.c.l.b16 %v473
      %v575 = vunpack.c.l.b16 %v474
      %v576 = vunpack.c.l.b16 %v475
      %v577 = vunpack.c.l.b16 %v476
      %v578 = vunpack.c.l.b16 %v477
      %v579 = vunpack.c.l.b16 %v478
      %v580 = vunpack.c.l.b16 %v479
      %v581 = vunpack.c.l.b16 %v480
      %v582 = vunpack.c.l.b16 %v481
      %v583 = vunpack.c.l.b16 %v482
      %v584 = vunpack.c.l.b16 %v483
      %v585 = vunpack.c.l.b16 %v484
      %v586 = vunpack.c.l.b16 %v485
      %v587 = vunpack.c.l.b16 %v486
      %v588 = vunpack.c.l.b16 %v487
      %v589 = vunpack.c.l.b16 %v488
      %v590 = vpack.c.b16 %v571, %v570
      %v591 = vpack.c.b16 %v573, %v572
      %v592 = vpack.c.b16 %v575, %v574
      %v593 = vpack.c.b16 %v577, %v576
      %v594 = vpack.c.b16 %v579, %v578
      %v595 = vpack.c.b16 %v581, %v580
      %v596 = vpack.c.b16 %v583, %v582
      %v597 = vpack.c.b16 %v585, %v584
      %v598 = vpack.c.b16 %v587, %v586
      %v599 = vpack.c.b16 %v589, %v588
      %v602 = vunpack.c.l.b16 %v548
      %v603 = vunpack.c.l.b16 %v549
      %v604 = vpack.c.b16 %v603, %v602
      %vm606 = vcmask 130048
      %v608 = vsel %vm606, %v590, 0
      %v611 = vsel %vm606, %v591, 0
      %v614 = vsel %vm606, %v592, 0
      %v617 = vsel %vm606, %v593, 0
      %v620 = vsel %vm606, %v594, 0
      %v623 = vsel %vm606, %v595, 0
      %v626 = vsel %vm606, %v596, 0
      %v629 = vsel %vm606, %v597, 0
      %v632 = vsel %vm606, %v598, 0
      %v635 = vsel %vm606, %v599, 0
      %637 = vmatprep.subr.bf16.mxu0 0
      %638 = vmatpush1.bf16.msra.mxu0 0
      %639 = vmatprep.subr.bf16.mxu0 0
      %640 = vmatpush1.bf16.msra.mxu0 0
      %641 = vmatprep.subr.bf16.mxu0 0
      %642 = vmatpush1.bf16.msra.mxu0 0
      %643 = vmatprep.subr.bf16.mxu0 0
      %644 = vmatpush1.bf16.msra.mxu0 0
      %645 = vmatprep.subr.bf16.mxu0 0
      %646 = vmatpush1.bf16.msra.mxu0 0
      %647 = vmatprep.subr.bf16.mxu0 0
      %648 = vmatpush1.bf16.msra.mxu0 0
      %649 = vmatprep.subr.bf16.mxu0 0
      %650 = vmatpush1.bf16.msra.mxu0 0
      %651 = vmatprep.subr.bf16.mxu0 0
      %652 = vmatpush1.bf16.msra.mxu0 %v604
      %653 = vmatprep.subr.bf16.mxu0 0
      %654 = vmatpush2.bf16.msra.mxu0 0
      %655 = vmatprep.subr.bf16.mxu0 0
      %656 = vmatpush2.bf16.msra.mxu0 0
      %657 = vmatprep.subr.bf16.mxu0 0
      %658 = vmatpush2.bf16.msra.mxu0 0
      %659 = vmatprep.subr.bf16.mxu0 0
      %660 = vmatpush2.bf16.msra.mxu0 0
      %661 = vmatprep.subr.bf16.mxu0 0
      %662 = vmatpush2.bf16.msra.mxu0 0
      %663 = vmatprep.subr.bf16.mxu0 0
      %664 = vmatpush2.bf16.msra.mxu0 0
      %665 = vmatprep.subr.bf16.mxu0 0
      %666 = vmatpush2.bf16.msra.mxu0 0
      %667 = vmatprep.subr.bf16.mxu0 0
      %668 = vmatpush2.bf16.msra.mxu0 0
      %669 = vmatprep.mubr.bf16.mxu0 0
      %670 = vmatmul.mubr.bf16.gmra.mxu0 %v608
      %v671 = vpop.f32.mrf.mxu0
      %v672 = vadd.f32 0.0, %v671
      %v673 = vpop.f32.mrf.mxu0
      %v674 = vpop.f32.mrf.mxu0
      %v675 = vadd.f32 0.0, %v674
      %v676 = vpop.f32.mrf.mxu0
      %677 = vmatprep.mubr.bf16.mxu0 0
      %678 = vmatmul.mubr.bf16.gmra.mxu0 %v611
      %v679 = vpop.f32.mrf.mxu0
      %v680 = vadd.f32 0.0, %v679
      %v681 = vpop.f32.mrf.mxu0
      %v682 = vpop.f32.mrf.mxu0
      %v683 = vadd.f32 0.0, %v682
      %v684 = vpop.f32.mrf.mxu0
      %685 = vmatprep.mubr.bf16.mxu0 0
      %686 = vmatmul.mubr.bf16.gmra.mxu0 %v614
      %v687 = vpop.f32.mrf.mxu0
      %v688 = vadd.f32 0.0, %v687
      %v689 = vpop.f32.mrf.mxu0
      %v690 = vpop.f32.mrf.mxu0
      %v691 = vadd.f32 0.0, %v690
      %v692 = vpop.f32.mrf.mxu0
      %693 = vmatprep.mubr.bf16.mxu0 0
      %694 = vmatmul.mubr.bf16.gmra.mxu0 %v617
      %v695 = vpop.f32.mrf.mxu0
      %v696 = vadd.f32 0.0, %v695
      %v697 = vpop.f32.mrf.mxu0
      %v698 = vpop.f32.mrf.mxu0
      %v699 = vadd.f32 0.0, %v698
      %v700 = vpop.f32.mrf.mxu0
      %701 = vmatprep.mubr.bf16.mxu0 0
      %702 = vmatmul.mubr.bf16.gmra.mxu0 %v620
      %v703 = vpop.f32.mrf.mxu0
      %v704 = vadd.f32 0.0, %v703
      %v705 = vpop.f32.mrf.mxu0
      %v706 = vpop.f32.mrf.mxu0
      %v707 = vadd.f32 0.0, %v706
      %v708 = vpop.f32.mrf.mxu0
      %709 = vmatprep.mubr.bf16.mxu0 0
      %710 = vmatmul.mubr.bf16.gmra.mxu0 %v623
      %v711 = vpop.f32.mrf.mxu0
      %v712 = vadd.f32 0.0, %v711
      %v713 = vpop.f32.mrf.mxu0
      %v714 = vpop.f32.mrf.mxu0
      %v715 = vadd.f32 0.0, %v714
      %v716 = vpop.f32.mrf.mxu0
      %717 = vmatprep.mubr.bf16.mxu0 0
      %718 = vmatmul.mubr.bf16.gmra.mxu0 %v626
      %v719 = vpop.f32.mrf.mxu0
      %v720 = vadd.f32 0.0, %v719
      %v721 = vpop.f32.mrf.mxu0
      %v722 = vpop.f32.mrf.mxu0
      %v723 = vadd.f32 0.0, %v722
      %v724 = vpop.f32.mrf.mxu0
      %725 = vmatprep.mubr.bf16.mxu0 0
      %726 = vmatmul.mubr.bf16.gmra.mxu0 %v629
      %v727 = vpop.f32.mrf.mxu0
      %v728 = vadd.f32 0.0, %v727
      %v729 = vpop.f32.mrf.mxu0
      %v730 = vpop.f32.mrf.mxu0
      %v731 = vadd.f32 0.0, %v730
      %v732 = vpop.f32.mrf.mxu0
      %733 = vmatprep.mubr.bf16.mxu0 0
      %734 = vmatmul.mubr.bf16.gmra.mxu0 %v632
      %v735 = vpop.f32.mrf.mxu0
      %v736 = vadd.f32 0.0, %v735
      %v737 = vpop.f32.mrf.mxu0
      %v738 = vpop.f32.mrf.mxu0
      %v739 = vadd.f32 0.0, %v738
      %v740 = vpop.f32.mrf.mxu0
      %741 = vmatprep.mubr.bf16.mxu0 0
      %742 = vmatmul.mubr.bf16.gmra.mxu0 %v635
      %v743 = vpop.f32.mrf.mxu0
      %v744 = vadd.f32 0.0, %v743
      %v745 = vpop.f32.mrf.mxu0
      %v746 = vpop.f32.mrf.mxu0
      %v747 = vadd.f32 0.0, %v746
      %v748 = vpop.f32.mrf.mxu0
      %749 = vdwg.mxu0
      %v750 = vadd.f32 %v520, %v672
      %v751 = vadd.f32 %v521, %v675
      %v752 = vadd.f32 %v522, %v680
      %v753 = vadd.f32 %v523, %v683
      %v754 = vadd.f32 %v524, %v688
      %v755 = vadd.f32 %v525, %v691
      %v756 = vadd.f32 %v526, %v696
      %v757 = vadd.f32 %v527, %v699
      %v758 = vadd.f32 %v528, %v704
      %v759 = vadd.f32 %v529, %v707
      %v760 = vadd.f32 %v530, %v712
      %v761 = vadd.f32 %v531, %v715
      %v762 = vadd.f32 %v532, %v720
      %v763 = vadd.f32 %v533, %v723
      %v764 = vadd.f32 %v534, %v728
      %v765 = vadd.f32 %v535, %v731
      %v766 = vadd.f32 %v536, %v736
      %v767 = vadd.f32 %v537, %v739
      %v768 = vadd.f32 %v538, %v744
      %v769 = vadd.f32 %v539, %v747
      %v770 = vld [vmem:[%s2] sm:$0xf]
      %v771 = vld [vmem:[%s2 + $0x4] sm:$0xf]
      %v774 = vunpack.c.l.b16 %v770
      %v775 = vunpack.c.l.b16 %v771
      %v776 = vpack.c.b16 %v775, %v774
      %778 = vmatprep.subr.bf16.mxu0 0
      %779 = vmatpush1.bf16.msra.mxu0 0
      %780 = vmatprep.subr.bf16.mxu0 0
      %781 = vmatpush1.bf16.msra.mxu0 0
      %782 = vmatprep.subr.bf16.mxu0 0
      %783 = vmatpush1.bf16.msra.mxu0 0
      %784 = vmatprep.subr.bf16.mxu0 0
      %785 = vmatpush1.bf16.msra.mxu0 0
      %786 = vmatprep.subr.bf16.mxu0 0
      %787 = vmatpush1.bf16.msra.mxu0 0
      %788 = vmatprep.subr.bf16.mxu0 0
      %789 = vmatpush1.bf16.msra.mxu0 0
      %790 = vmatprep.subr.bf16.mxu0 0
      %791 = vmatpush1.bf16.msra.mxu0 0
      %792 = vmatprep.subr.bf16.mxu0 0
      %793 = vmatpush1.bf16.msra.mxu0 %v776
      %794 = vmatprep.subr.bf16.mxu0 0
      %795 = vmatpush2.bf16.msra.mxu0 0
      %796 = vmatprep.subr.bf16.mxu0 0
      %797 = vmatpush2.bf16.msra.mxu0 0
      %798 = vmatprep.subr.bf16.mxu0 0
      %799 = vmatpush2.bf16.msra.mxu0 0
      %800 = vmatprep.subr.bf16.mxu0 0
      %801 = vmatpush2.bf16.msra.mxu0 0
      %802 = vmatprep.subr.bf16.mxu0 0
      %803 = vmatpush2.bf16.msra.mxu0 0
      %804 = vmatprep.subr.bf16.mxu0 0
      %805 = vmatpush2.bf16.msra.mxu0 0
      %806 = vmatprep.subr.bf16.mxu0 0
      %807 = vmatpush2.bf16.msra.mxu0 0
      %808 = vmatprep.subr.bf16.mxu0 0
      %809 = vmatpush2.bf16.msra.mxu0 0
      %810 = vmatprep.mubr.bf16.mxu0 0
      %811 = vmatmul.mubr.bf16.gmra.mxu0 %v608
      %v812 = vpop.f32.mrf.mxu0
      %v813 = vadd.f32 0.0, %v812
      %v814 = vpop.f32.mrf.mxu0
      %v815 = vpop.f32.mrf.mxu0
      %v816 = vadd.f32 0.0, %v815
      %v817 = vpop.f32.mrf.mxu0
      %818 = vmatprep.mubr.bf16.mxu0 0
      %819 = vmatmul.mubr.bf16.gmra.mxu0 %v611
      %v820 = vpop.f32.mrf.mxu0
      %v821 = vadd.f32 0.0, %v820
      %v822 = vpop.f32.mrf.mxu0
      %v823 = vpop.f32.mrf.mxu0
      %v824 = vadd.f32 0.0, %v823
      %v825 = vpop.f32.mrf.mxu0
      %826 = vmatprep.mubr.bf16.mxu0 0
      %827 = vmatmul.mubr.bf16.gmra.mxu0 %v614
      %v828 = vpop.f32.mrf.mxu0
      %v829 = vadd.f32 0.0, %v828
      %v830 = vpop.f32.mrf.mxu0
      %v831 = vpop.f32.mrf.mxu0
      %v832 = vadd.f32 0.0, %v831
      %v833 = vpop.f32.mrf.mxu0
      %834 = vmatprep.mubr.bf16.mxu0 0
      %835 = vmatmul.mubr.bf16.gmra.mxu0 %v617
      %v836 = vpop.f32.mrf.mxu0
      %v837 = vadd.f32 0.0, %v836
      %v838 = vpop.f32.mrf.mxu0
      %v839 = vpop.f32.mrf.mxu0
      %v840 = vadd.f32 0.0, %v839
      %v841 = vpop.f32.mrf.mxu0
      %842 = vmatprep.mubr.bf16.mxu0 0
      %843 = vmatmul.mubr.bf16.gmra.mxu0 %v620
      %v844 = vpop.f32.mrf.mxu0
      %v845 = vadd.f32 0.0, %v844
      %v846 = vpop.f32.mrf.mxu0
      %v847 = vpop.f32.mrf.mxu0
      %v848 = vadd.f32 0.0, %v847
      %v849 = vpop.f32.mrf.mxu0
      %850 = vmatprep.mubr.bf16.mxu0 0
      %851 = vmatmul.mubr.bf16.gmra.mxu0 %v623
      %v852 = vpop.f32.mrf.mxu0
      %v853 = vadd.f32 0.0, %v852
      %v854 = vpop.f32.mrf.mxu0
      %v855 = vpop.f32.mrf.mxu0
      %v856 = vadd.f32 0.0, %v855
      %v857 = vpop.f32.mrf.mxu0
      %858 = vmatprep.mubr.bf16.mxu0 0
      %859 = vmatmul.mubr.bf16.gmra.mxu0 %v626
      %v860 = vpop.f32.mrf.mxu0
      %v861 = vadd.f32 0.0, %v860
      %v862 = vpop.f32.mrf.mxu0
      %v863 = vpop.f32.mrf.mxu0
      %v864 = vadd.f32 0.0, %v863
      %v865 = vpop.f32.mrf.mxu0
      %866 = vmatprep.mubr.bf16.mxu0 0
      %867 = vmatmul.mubr.bf16.gmra.mxu0 %v629
      %v868 = vpop.f32.mrf.mxu0
      %v869 = vadd.f32 0.0, %v868
      %v870 = vpop.f32.mrf.mxu0
      %v871 = vpop.f32.mrf.mxu0
      %v872 = vadd.f32 0.0, %v871
      %v873 = vpop.f32.mrf.mxu0
      %874 = vmatprep.mubr.bf16.mxu0 0
      %875 = vmatmul.mubr.bf16.gmra.mxu0 %v632
      %v876 = vpop.f32.mrf.mxu0
      %v877 = vadd.f32 0.0, %v876
      %v878 = vpop.f32.mrf.mxu0
      %v879 = vpop.f32.mrf.mxu0
      %v880 = vadd.f32 0.0, %v879
      %v881 = vpop.f32.mrf.mxu0
      %882 = vmatprep.mubr.bf16.mxu0 0
      %883 = vmatmul.mubr.bf16.gmra.mxu0 %v635
      %v884 = vpop.f32.mrf.mxu0
      %v885 = vadd.f32 0.0, %v884
      %v886 = vpop.f32.mrf.mxu0
      %v887 = vpop.f32.mrf.mxu0
      %v888 = vadd.f32 0.0, %v887
      %v889 = vpop.f32.mrf.mxu0
      %890 = vdwg.mxu0
      %v891 = vadd.f32 %v547, %v813
      %v892 = vadd.f32 %v547, %v816
      %v893 = vadd.f32 %v547, %v821
      %v894 = vadd.f32 %v547, %v824
      %v895 = vadd.f32 %v547, %v829
      %v896 = vadd.f32 %v547, %v832
      %v897 = vadd.f32 %v547, %v837
      %v898 = vadd.f32 %v547, %v840
      %v899 = vadd.f32 %v547, %v845
      %v900 = vadd.f32 %v547, %v848
      %v901 = vadd.f32 %v547, %v853
      %v902 = vadd.f32 %v547, %v856
      %v903 = vadd.f32 %v547, %v861
      %v904 = vadd.f32 %v547, %v864
      %v905 = vadd.f32 %v547, %v869
      %v906 = vadd.f32 %v547, %v872
      %v907 = vadd.f32 %v547, %v877
      %v908 = vadd.f32 %v547, %v880
      %v909 = vadd.f32 %v547, %v885
      %v910 = vadd.f32 %v547, %v888
      %s911 = scalar_lea.vmem %s1, 8
      %v912 = vld [vmem:[%s911] sm:$0xf]
      %v913 = vld [vmem:[%s911 + $0x4] sm:$0xf]
      %v916 = vunpack.c.l.b16 %v489
      %v917 = vunpack.c.l.b16 %v490
      %v918 = vpack.c.b16 %v917, %v916
      %v921 = vunpack.c.l.b16 %v912
      %v922 = vunpack.c.l.b16 %v913
      %v923 = vpack.c.b16 %v922, %v921
      %v926 = vsel %vm606, %v918, 0
      %928 = vmatprep.subr.bf16.mxu0 0
      %929 = vmatpush1.bf16.msra.mxu0 0
      %930 = vmatprep.subr.bf16.mxu0 0
      %931 = vmatpush1.bf16.msra.mxu0 0
      %932 = vmatprep.subr.bf16.mxu0 0
      %933 = vmatpush1.bf16.msra.mxu0 0
      %934 = vmatprep.subr.bf16.mxu0 0
      %935 = vmatpush1.bf16.msra.mxu0 0
      %936 = vmatprep.subr.bf16.mxu0 0
      %937 = vmatpush1.bf16.msra.mxu0 0
      %938 = vmatprep.subr.bf16.mxu0 0
      %939 = vmatpush1.bf16.msra.mxu0 0
      %940 = vmatprep.subr.bf16.mxu0 0
      %941 = vmatpush1.bf16.msra.mxu0 0
      %942 = vmatprep.subr.bf16.mxu0 0
      %943 = vmatpush1.bf16.msra.mxu0 %v923
      %944 = vmatprep.subr.bf16.mxu0 0
      %945 = vmatpush2.bf16.msra.mxu0 0
      %946 = vmatprep.subr.bf16.mxu0 0
      %947 = vmatpush2.bf16.msra.mxu0 0
      %948 = vmatprep.subr.bf16.mxu0 0
      %949 = vmatpush2.bf16.msra.mxu0 0
      %950 = vmatprep.subr.bf16.mxu0 0
      %951 = vmatpush2.bf16.msra.mxu0 0
      %952 = vmatprep.subr.bf16.mxu0 0
      %953 = vmatpush2.bf16.msra.mxu0 0
      %954 = vmatprep.subr.bf16.mxu0 0
      %955 = vmatpush2.bf16.msra.mxu0 0
      %956 = vmatprep.subr.bf16.mxu0 0
      %957 = vmatpush2.bf16.msra.mxu0 0
      %958 = vmatprep.subr.bf16.mxu0 0
      %959 = vmatpush2.bf16.msra.mxu0 0
      %960 = vmatprep.mubr.bf16.mxu0 0
      %961 = vmatmul.mubr.bf16.gmra.mxu0 %v611
      %v962 = vpop.f32.mrf.mxu0
      %v963 = vadd.f32 0.0, %v962
      %v964 = vpop.f32.mrf.mxu0
      %v965 = vpop.f32.mrf.mxu0
      %v966 = vadd.f32 0.0, %v965
      %v967 = vpop.f32.mrf.mxu0
      %968 = vmatprep.mubr.bf16.mxu0 0
      %969 = vmatmul.mubr.bf16.gmra.mxu0 %v614
      %v970 = vpop.f32.mrf.mxu0
      %v971 = vadd.f32 0.0, %v970
      %v972 = vpop.f32.mrf.mxu0
      %v973 = vpop.f32.mrf.mxu0
      %v974 = vadd.f32 0.0, %v973
      %v975 = vpop.f32.mrf.mxu0
      %976 = vmatprep.mubr.bf16.mxu0 0
      %977 = vmatmul.mubr.bf16.gmra.mxu0 %v617
      %v978 = vpop.f32.mrf.mxu0
      %v979 = vadd.f32 0.0, %v978
      %v980 = vpop.f32.mrf.mxu0
      %v981 = vpop.f32.mrf.mxu0
      %v982 = vadd.f32 0.0, %v981
      %v983 = vpop.f32.mrf.mxu0
      %984 = vmatprep.mubr.bf16.mxu0 0
      %985 = vmatmul.mubr.bf16.gmra.mxu0 %v620
      %v986 = vpop.f32.mrf.mxu0
      %v987 = vadd.f32 0.0, %v986
      %v988 = vpop.f32.mrf.mxu0
      %v989 = vpop.f32.mrf.mxu0
      %v990 = vadd.f32 0.0, %v989
      %v991 = vpop.f32.mrf.mxu0
      %992 = vmatprep.mubr.bf16.mxu0 0
      %993 = vmatmul.mubr.bf16.gmra.mxu0 %v623
      %v994 = vpop.f32.mrf.mxu0
      %v995 = vadd.f32 0.0, %v994
      %v996 = vpop.f32.mrf.mxu0
      %v997 = vpop.f32.mrf.mxu0
      %v998 = vadd.f32 0.0, %v997
      %v999 = vpop.f32.mrf.mxu0
      %1000 = vmatprep.mubr.bf16.mxu0 0
      %1001 = vmatmul.mubr.bf16.gmra.mxu0 %v626
      %v1002 = vpop.f32.mrf.mxu0
      %v1003 = vadd.f32 0.0, %v1002
      %v1004 = vpop.f32.mrf.mxu0
      %v1005 = vpop.f32.mrf.mxu0
      %v1006 = vadd.f32 0.0, %v1005
      %v1007 = vpop.f32.mrf.mxu0
      %1008 = vmatprep.mubr.bf16.mxu0 0
      %1009 = vmatmul.mubr.bf16.gmra.mxu0 %v629
      %v1010 = vpop.f32.mrf.mxu0
      %v1011 = vadd.f32 0.0, %v1010
      %v1012 = vpop.f32.mrf.mxu0
      %v1013 = vpop.f32.mrf.mxu0
      %v1014 = vadd.f32 0.0, %v1013
      %v1015 = vpop.f32.mrf.mxu0
      %1016 = vmatprep.mubr.bf16.mxu0 0
      %1017 = vmatmul.mubr.bf16.gmra.mxu0 %v632
      %v1018 = vpop.f32.mrf.mxu0
      %v1019 = vadd.f32 0.0, %v1018
      %v1020 = vpop.f32.mrf.mxu0
      %v1021 = vpop.f32.mrf.mxu0
      %v1022 = vadd.f32 0.0, %v1021
      %v1023 = vpop.f32.mrf.mxu0
      %1024 = vmatprep.mubr.bf16.mxu0 0
      %1025 = vmatmul.mubr.bf16.gmra.mxu0 %v635
      %v1026 = vpop.f32.mrf.mxu0
      %v1027 = vadd.f32 0.0, %v1026
      %v1028 = vpop.f32.mrf.mxu0
      %v1029 = vpop.f32.mrf.mxu0
      %v1030 = vadd.f32 0.0, %v1029
      %v1031 = vpop.f32.mrf.mxu0
      %1032 = vmatprep.mubr.bf16.mxu0 0
      %1033 = vmatmul.mubr.bf16.gmra.mxu0 %v926
      %v1034 = vpop.f32.mrf.mxu0
      %v1035 = vadd.f32 0.0, %v1034
      %v1036 = vpop.f32.mrf.mxu0
      %v1037 = vpop.f32.mrf.mxu0
      %v1038 = vadd.f32 0.0, %v1037
      %v1039 = vpop.f32.mrf.mxu0
      %1040 = vdwg.mxu0
      %v1041 = vadd.f32 %v750, %v963
      %v1042 = vadd.f32 %v751, %v966
      %v1043 = vadd.f32 %v752, %v971
      %v1044 = vadd.f32 %v753, %v974
      %v1045 = vadd.f32 %v754, %v979
      %v1046 = vadd.f32 %v755, %v982
      %v1047 = vadd.f32 %v756, %v987
      %v1048 = vadd.f32 %v757, %v990
      %v1049 = vadd.f32 %v758, %v995
      %v1050 = vadd.f32 %v759, %v998
      %v1051 = vadd.f32 %v760, %v1003
      %v1052 = vadd.f32 %v761, %v1006
      %v1053 = vadd.f32 %v762, %v1011
      %v1054 = vadd.f32 %v763, %v1014
      %v1055 = vadd.f32 %v764, %v1019
      %v1056 = vadd.f32 %v765, %v1022
      %v1057 = vadd.f32 %v766, %v1027
      %v1058 = vadd.f32 %v767, %v1030
      %v1059 = vadd.f32 %v768, %v1035
      %v1060 = vadd.f32 %v769, %v1038
      %s1061 = scalar_lea.vmem %s2, 8
      %v1062 = vld [vmem:[%s1061] sm:$0xf]
      %v1063 = vld [vmem:[%s1061 + $0x4] sm:$0xf]
      %v1066 = vunpack.c.l.b16 %v1062
      %v1067 = vunpack.c.l.b16 %v1063
      %v1068 = vpack.c.b16 %v1067, %v1066
      %1070 = vmatprep.subr.bf16.mxu0 0
      %1071 = vmatpush1.bf16.msra.mxu0 0
      %1072 = vmatprep.subr.bf16.mxu0 0
      %1073 = vmatpush1.bf16.msra.mxu0 0
      %1074 = vmatprep.subr.bf16.mxu0 0
      %1075 = vmatpush1.bf16.msra.mxu0 0
      %1076 = vmatprep.subr.bf16.mxu0 0
      %1077 = vmatpush1.bf16.msra.mxu0 0
      %1078 = vmatprep.subr.bf16.mxu0 0
      %1079 = vmatpush1.bf16.msra.mxu0 0
      %1080 = vmatprep.subr.bf16.mxu0 0
      %1081 = vmatpush1.bf16.msra.mxu0 0
      %1082 = vmatprep.subr.bf16.mxu0 0
      %1083 = vmatpush1.bf16.msra.mxu0 0
      %1084 = vmatprep.subr.bf16.mxu0 0
      %1085 = vmatpush1.bf16.msra.mxu0 %v1068
      %1086 = vmatprep.subr.bf16.mxu0 0
      %1087 = vmatpush2.bf16.msra.mxu0 0
      %1088 = vmatprep.subr.bf16.mxu0 0
      %1089 = vmatpush2.bf16.msra.mxu0 0
      %1090 = vmatprep.subr.bf16.mxu0 0
      %1091 = vmatpush2.bf16.msra.mxu0 0
      %1092 = vmatprep.subr.bf16.mxu0 0
      %1093 = vmatpush2.bf16.msra.mxu0 0
      %1094 = vmatprep.subr.bf16.mxu0 0
      %1095 = vmatpush2.bf16.msra.mxu0 0
      %1096 = vmatprep.subr.bf16.mxu0 0
      %1097 = vmatpush2.bf16.msra.mxu0 0
      %1098 = vmatprep.subr.bf16.mxu0 0
      %1099 = vmatpush2.bf16.msra.mxu0 0
      %1100 = vmatprep.subr.bf16.mxu0 0
      %1101 = vmatpush2.bf16.msra.mxu0 0
      %1102 = vmatprep.mubr.bf16.mxu0 0
      %1103 = vmatmul.mubr.bf16.gmra.mxu0 %v611
      %v1104 = vpop.f32.mrf.mxu0
      %v1105 = vadd.f32 0.0, %v1104
      %v1106 = vpop.f32.mrf.mxu0
      %v1107 = vpop.f32.mrf.mxu0
      %v1108 = vadd.f32 0.0, %v1107
      %v1109 = vpop.f32.mrf.mxu0
      %1110 = vmatprep.mubr.bf16.mxu0 0
      %1111 = vmatmul.mubr.bf16.gmra.mxu0 %v614
      %v1112 = vpop.f32.mrf.mxu0
      %v1113 = vadd.f32 0.0, %v1112
      %v1114 = vpop.f32.mrf.mxu0
      %v1115 = vpop.f32.mrf.mxu0
      %v1116 = vadd.f32 0.0, %v1115
      %v1117 = vpop.f32.mrf.mxu0
      %1118 = vmatprep.mubr.bf16.mxu0 0
      %1119 = vmatmul.mubr.bf16.gmra.mxu0 %v617
      %v1120 = vpop.f32.mrf.mxu0
      %v1121 = vadd.f32 0.0, %v1120
      %v1122 = vpop.f32.mrf.mxu0
      %v1123 = vpop.f32.mrf.mxu0
      %v1124 = vadd.f32 0.0, %v1123
      %v1125 = vpop.f32.mrf.mxu0
      %1126 = vmatprep.mubr.bf16.mxu0 0
      %1127 = vmatmul.mubr.bf16.gmra.mxu0 %v620
      %v1128 = vpop.f32.mrf.mxu0
      %v1129 = vadd.f32 0.0, %v1128
      %v1130 = vpop.f32.mrf.mxu0
      %v1131 = vpop.f32.mrf.mxu0
      %v1132 = vadd.f32 0.0, %v1131
      %v1133 = vpop.f32.mrf.mxu0
      %1134 = vmatprep.mubr.bf16.mxu0 0
      %1135 = vmatmul.mubr.bf16.gmra.mxu0 %v623
      %v1136 = vpop.f32.mrf.mxu0
      %v1137 = vadd.f32 0.0, %v1136
      %v1138 = vpop.f32.mrf.mxu0
      %v1139 = vpop.f32.mrf.mxu0
      %v1140 = vadd.f32 0.0, %v1139
      %v1141 = vpop.f32.mrf.mxu0
      %1142 = vmatprep.mubr.bf16.mxu0 0
      %1143 = vmatmul.mubr.bf16.gmra.mxu0 %v626
      %v1144 = vpop.f32.mrf.mxu0
      %v1145 = vadd.f32 0.0, %v1144
      %v1146 = vpop.f32.mrf.mxu0
      %v1147 = vpop.f32.mrf.mxu0
      %v1148 = vadd.f32 0.0, %v1147
      %v1149 = vpop.f32.mrf.mxu0
      %1150 = vmatprep.mubr.bf16.mxu0 0
      %1151 = vmatmul.mubr.bf16.gmra.mxu0 %v629
      %v1152 = vpop.f32.mrf.mxu0
      %v1153 = vadd.f32 0.0, %v1152
      %v1154 = vpop.f32.mrf.mxu0
      %v1155 = vpop.f32.mrf.mxu0
      %v1156 = vadd.f32 0.0, %v1155
      %v1157 = vpop.f32.mrf.mxu0
      %1158 = vmatprep.mubr.bf16.mxu0 0
      %1159 = vmatmul.mubr.bf16.gmra.mxu0 %v632
      %v1160 = vpop.f32.mrf.mxu0
      %v1161 = vadd.f32 0.0, %v1160
      %v1162 = vpop.f32.mrf.mxu0
      %v1163 = vpop.f32.mrf.mxu0
      %v1164 = vadd.f32 0.0, %v1163
      %v1165 = vpop.f32.mrf.mxu0
      %1166 = vmatprep.mubr.bf16.mxu0 0
      %1167 = vmatmul.mubr.bf16.gmra.mxu0 %v635
      %v1168 = vpop.f32.mrf.mxu0
      %v1169 = vadd.f32 0.0, %v1168
      %v1170 = vpop.f32.mrf.mxu0
      %v1171 = vpop.f32.mrf.mxu0
      %v1172 = vadd.f32 0.0, %v1171
      %v1173 = vpop.f32.mrf.mxu0
      %1174 = vmatprep.mubr.bf16.mxu0 0
      %1175 = vmatmul.mubr.bf16.gmra.mxu0 %v926
      %v1176 = vpop.f32.mrf.mxu0
      %v1177 = vadd.f32 0.0, %v1176
      %v1178 = vpop.f32.mrf.mxu0
      %v1179 = vpop.f32.mrf.mxu0
      %v1180 = vadd.f32 0.0, %v1179
      %v1181 = vpop.f32.mrf.mxu0
      %1182 = vdwg.mxu0
      %v1183 = vadd.f32 %v891, %v1105
      %v1184 = vadd.f32 %v892, %v1108
      %v1185 = vadd.f32 %v893, %v1113
      %v1186 = vadd.f32 %v894, %v1116
      %v1187 = vadd.f32 %v895, %v1121
      %v1188 = vadd.f32 %v896, %v1124
      %v1189 = vadd.f32 %v897, %v1129
      %v1190 = vadd.f32 %v898, %v1132
      %v1191 = vadd.f32 %v899, %v1137
      %v1192 = vadd.f32 %v900, %v1140
      %v1193 = vadd.f32 %v901, %v1145
      %v1194 = vadd.f32 %v902, %v1148
      %v1195 = vadd.f32 %v903, %v1153
      %v1196 = vadd.f32 %v904, %v1156
      %v1197 = vadd.f32 %v905, %v1161
      %v1198 = vadd.f32 %v906, %v1164
      %v1199 = vadd.f32 %v907, %v1169
      %v1200 = vadd.f32 %v908, %v1172
      %v1201 = vadd.f32 %v909, %v1177
      %v1202 = vadd.f32 %v910, %v1180
      %s1203 = scalar_lea.vmem %s1, 16
      %v1204 = vld [vmem:[%s1203] sm:$0xf]
      %v1205 = vld [vmem:[%s1203 + $0x4] sm:$0xf]
      %v1208 = vunpack.c.l.b16 %v491
      %v1209 = vunpack.c.l.b16 %v492
      %v1210 = vpack.c.b16 %v1209, %v1208
      %v1213 = vunpack.c.l.b16 %v1204
      %v1214 = vunpack.c.l.b16 %v1205
      %v1215 = vpack.c.b16 %v1214, %v1213
      %v1218 = vsel %vm606, %v1210, 0
      %1220 = vmatprep.subr.bf16.mxu0 0
      %1221 = vmatpush1.bf16.msra.mxu0 0
      %1222 = vmatprep.subr.bf16.mxu0 0
      %1223 = vmatpush1.bf16.msra.mxu0 0
      %1224 = vmatprep.subr.bf16.mxu0 0
      %1225 = vmatpush1.bf16.msra.mxu0 0
      %1226 = vmatprep.subr.bf16.mxu0 0
      %1227 = vmatpush1.bf16.msra.mxu0 0
      %1228 = vmatprep.subr.bf16.mxu0 0
      %1229 = vmatpush1.bf16.msra.mxu0 0
      %1230 = vmatprep.subr.bf16.mxu0 0
      %1231 = vmatpush1.bf16.msra.mxu0 0
      %1232 = vmatprep.subr.bf16.mxu0 0
      %1233 = vmatpush1.bf16.msra.mxu0 0
      %1234 = vmatprep.subr.bf16.mxu0 0
      %1235 = vmatpush1.bf16.msra.mxu0 %v1215
      %1236 = vmatprep.subr.bf16.mxu0 0
      %1237 = vmatpush2.bf16.msra.mxu0 0
      %1238 = vmatprep.subr.bf16.mxu0 0
      %1239 = vmatpush2.bf16.msra.mxu0 0
      %1240 = vmatprep.subr.bf16.mxu0 0
      %1241 = vmatpush2.bf16.msra.mxu0 0
      %1242 = vmatprep.subr.bf16.mxu0 0
      %1243 = vmatpush2.bf16.msra.mxu0 0
      %1244 = vmatprep.subr.bf16.mxu0 0
      %1245 = vmatpush2.bf16.msra.mxu0 0
      %1246 = vmatprep.subr.bf16.mxu0 0
      %1247 = vmatpush2.bf16.msra.mxu0 0
      %1248 = vmatprep.subr.bf16.mxu0 0
      %1249 = vmatpush2.bf16.msra.mxu0 0
      %1250 = vmatprep.subr.bf16.mxu0 0
      %1251 = vmatpush2.bf16.msra.mxu0 0
      %1252 = vmatprep.mubr.bf16.mxu0 0
      %1253 = vmatmul.mubr.bf16.gmra.mxu0 %v614
      %v1254 = vpop.f32.mrf.mxu0
      %v1255 = vadd.f32 0.0, %v1254
      %v1256 = vpop.f32.mrf.mxu0
      %v1257 = vpop.f32.mrf.mxu0
      %v1258 = vadd.f32 0.0, %v1257
      %v1259 = vpop.f32.mrf.mxu0
      %1260 = vmatprep.mubr.bf16.mxu0 0
      %1261 = vmatmul.mubr.bf16.gmra.mxu0 %v617
      %v1262 = vpop.f32.mrf.mxu0
      %v1263 = vadd.f32 0.0, %v1262
      %v1264 = vpop.f32.mrf.mxu0
      %v1265 = vpop.f32.mrf.mxu0
      %v1266 = vadd.f32 0.0, %v1265
      %v1267 = vpop.f32.mrf.mxu0
      %1268 = vmatprep.mubr.bf16.mxu0 0
      %1269 = vmatmul.mubr.bf16.gmra.mxu0 %v620
      %v1270 = vpop.f32.mrf.mxu0
      %v1271 = vadd.f32 0.0, %v1270
      %v1272 = vpop.f32.mrf.mxu0
      %v1273 = vpop.f32.mrf.mxu0
      %v1274 = vadd.f32 0.0, %v1273
      %v1275 = vpop.f32.mrf.mxu0
      %1276 = vmatprep.mubr.bf16.mxu0 0
      %1277 = vmatmul.mubr.bf16.gmra.mxu0 %v623
      %v1278 = vpop.f32.mrf.mxu0
      %v1279 = vadd.f32 0.0, %v1278
      %v1280 = vpop.f32.mrf.mxu0
      %v1281 = vpop.f32.mrf.mxu0
      %v1282 = vadd.f32 0.0, %v1281
      %v1283 = vpop.f32.mrf.mxu0
      %1284 = vmatprep.mubr.bf16.mxu0 0
      %1285 = vmatmul.mubr.bf16.gmra.mxu0 %v626
      %v1286 = vpop.f32.mrf.mxu0
      %v1287 = vadd.f32 0.0, %v1286
      %v1288 = vpop.f32.mrf.mxu0
      %v1289 = vpop.f32.mrf.mxu0
      %v1290 = vadd.f32 0.0, %v1289
      %v1291 = vpop.f32.mrf.mxu0
      %1292 = vmatprep.mubr.bf16.mxu0 0
      %1293 = vmatmul.mubr.bf16.gmra.mxu0 %v629
      %v1294 = vpop.f32.mrf.mxu0
      %v1295 = vadd.f32 0.0, %v1294
      %v1296 = vpop.f32.mrf.mxu0
      %v1297 = vpop.f32.mrf.mxu0
      %v1298 = vadd.f32 0.0, %v1297
      %v1299 = vpop.f32.mrf.mxu0
      %1300 = vmatprep.mubr.bf16.mxu0 0
      %1301 = vmatmul.mubr.bf16.gmra.mxu0 %v632
      %v1302 = vpop.f32.mrf.mxu0
      %v1303 = vadd.f32 0.0, %v1302
      %v1304 = vpop.f32.mrf.mxu0
      %v1305 = vpop.f32.mrf.mxu0
      %v1306 = vadd.f32 0.0, %v1305
      %v1307 = vpop.f32.mrf.mxu0
      %1308 = vmatprep.mubr.bf16.mxu0 0
      %1309 = vmatmul.mubr.bf16.gmra.mxu0 %v635
      %v1310 = vpop.f32.mrf.mxu0
      %v1311 = vadd.f32 0.0, %v1310
      %v1312 = vpop.f32.mrf.mxu0
      %v1313 = vpop.f32.mrf.mxu0
      %v1314 = vadd.f32 0.0, %v1313
      %v1315 = vpop.f32.mrf.mxu0
      %1316 = vmatprep.mubr.bf16.mxu0 0
      %1317 = vmatmul.mubr.bf16.gmra.mxu0 %v926
      %v1318 = vpop.f32.mrf.mxu0
      %v1319 = vadd.f32 0.0, %v1318
      %v1320 = vpop.f32.mrf.mxu0
      %v1321 = vpop.f32.mrf.mxu0
      %v1322 = vadd.f32 0.0, %v1321
      %v1323 = vpop.f32.mrf.mxu0
      %1324 = vmatprep.mubr.bf16.mxu0 0
      %1325 = vmatmul.mubr.bf16.gmra.mxu0 %v1218
      %v1326 = vpop.f32.mrf.mxu0
      %v1327 = vadd.f32 0.0, %v1326
      %v1328 = vpop.f32.mrf.mxu0
      %v1329 = vpop.f32.mrf.mxu0
      %v1330 = vadd.f32 0.0, %v1329
      %v1331 = vpop.f32.mrf.mxu0
      %1332 = vdwg.mxu0
      %v1333 = vadd.f32 %v1041, %v1255
      %v1334 = vadd.f32 %v1042, %v1258
      %v1335 = vadd.f32 %v1043, %v1263
      %v1336 = vadd.f32 %v1044, %v1266
      %v1337 = vadd.f32 %v1045, %v1271
      %v1338 = vadd.f32 %v1046, %v1274
      %v1339 = vadd.f32 %v1047, %v1279
      %v1340 = vadd.f32 %v1048, %v1282
      %v1341 = vadd.f32 %v1049, %v1287
      %v1342 = vadd.f32 %v1050, %v1290
      %v1343 = vadd.f32 %v1051, %v1295
      %v1344 = vadd.f32 %v1052, %v1298
      %v1345 = vadd.f32 %v1053, %v1303
      %v1346 = vadd.f32 %v1054, %v1306
      %v1347 = vadd.f32 %v1055, %v1311
      %v1348 = vadd.f32 %v1056, %v1314
      %v1349 = vadd.f32 %v1057, %v1319
      %v1350 = vadd.f32 %v1058, %v1322
      %v1351 = vadd.f32 %v1059, %v1327
      %v1352 = vadd.f32 %v1060, %v1330
      %s1353 = scalar_lea.vmem %s2, 16
      %v1354 = vld [vmem:[%s1353] sm:$0xf]
      %v1355 = vld [vmem:[%s1353 + $0x4] sm:$0xf]
      %v1358 = vunpack.c.l.b16 %v1354
      %v1359 = vunpack.c.l.b16 %v1355
      %v1360 = vpack.c.b16 %v1359, %v1358
      %1362 = vmatprep.subr.bf16.mxu0 0
      %1363 = vmatpush1.bf16.msra.mxu0 0
      %1364 = vmatprep.subr.bf16.mxu0 0
      %1365 = vmatpush1.bf16.msra.mxu0 0
      %1366 = vmatprep.subr.bf16.mxu0 0
      %1367 = vmatpush1.bf16.msra.mxu0 0
      %1368 = vmatprep.subr.bf16.mxu0 0
      %1369 = vmatpush1.bf16.msra.mxu0 0
      %1370 = vmatprep.subr.bf16.mxu0 0
      %1371 = vmatpush1.bf16.msra.mxu0 0
      %1372 = vmatprep.subr.bf16.mxu0 0
      %1373 = vmatpush1.bf16.msra.mxu0 0
      %1374 = vmatprep.subr.bf16.mxu0 0
      %1375 = vmatpush1.bf16.msra.mxu0 0
      %1376 = vmatprep.subr.bf16.mxu0 0
      %1377 = vmatpush1.bf16.msra.mxu0 %v1360
      %1378 = vmatprep.subr.bf16.mxu0 0
      %1379 = vmatpush2.bf16.msra.mxu0 0
      %1380 = vmatprep.subr.bf16.mxu0 0
      %1381 = vmatpush2.bf16.msra.mxu0 0
      %1382 = vmatprep.subr.bf16.mxu0 0
      %1383 = vmatpush2.bf16.msra.mxu0 0
      %1384 = vmatprep.subr.bf16.mxu0 0
      %1385 = vmatpush2.bf16.msra.mxu0 0
      %1386 = vmatprep.subr.bf16.mxu0 0
      %1387 = vmatpush2.bf16.msra.mxu0 0
      %1388 = vmatprep.subr.bf16.mxu0 0
      %1389 = vmatpush2.bf16.msra.mxu0 0
      %1390 = vmatprep.subr.bf16.mxu0 0
      %1391 = vmatpush2.bf16.msra.mxu0 0
      %1392 = vmatprep.subr.bf16.mxu0 0
      %1393 = vmatpush2.bf16.msra.mxu0 0
      %1394 = vmatprep.mubr.bf16.mxu0 0
      %1395 = vmatmul.mubr.bf16.gmra.mxu0 %v614
      %v1396 = vpop.f32.mrf.mxu0
      %v1397 = vadd.f32 0.0, %v1396
      %v1398 = vpop.f32.mrf.mxu0
      %v1399 = vpop.f32.mrf.mxu0
      %v1400 = vadd.f32 0.0, %v1399
      %v1401 = vpop.f32.mrf.mxu0
      %1402 = vmatprep.mubr.bf16.mxu0 0
      %1403 = vmatmul.mubr.bf16.gmra.mxu0 %v617
      %v1404 = vpop.f32.mrf.mxu0
      %v1405 = vadd.f32 0.0, %v1404
      %v1406 = vpop.f32.mrf.mxu0
      %v1407 = vpop.f32.mrf.mxu0
      %v1408 = vadd.f32 0.0, %v1407
      %v1409 = vpop.f32.mrf.mxu0
      %1410 = vmatprep.mubr.bf16.mxu0 0
      %1411 = vmatmul.mubr.bf16.gmra.mxu0 %v620
      %v1412 = vpop.f32.mrf.mxu0
      %v1413 = vadd.f32 0.0, %v1412
      %v1414 = vpop.f32.mrf.mxu0
      %v1415 = vpop.f32.mrf.mxu0
      %v1416 = vadd.f32 0.0, %v1415
      %v1417 = vpop.f32.mrf.mxu0
      %1418 = vmatprep.mubr.bf16.mxu0 0
      %1419 = vmatmul.mubr.bf16.gmra.mxu0 %v623
      %v1420 = vpop.f32.mrf.mxu0
      %v1421 = vadd.f32 0.0, %v1420
      %v1422 = vpop.f32.mrf.mxu0
      %v1423 = vpop.f32.mrf.mxu0
      %v1424 = vadd.f32 0.0, %v1423
      %v1425 = vpop.f32.mrf.mxu0
      %1426 = vmatprep.mubr.bf16.mxu0 0
      %1427 = vmatmul.mubr.bf16.gmra.mxu0 %v626
      %v1428 = vpop.f32.mrf.mxu0
      %v1429 = vadd.f32 0.0, %v1428
      %v1430 = vpop.f32.mrf.mxu0
      %v1431 = vpop.f32.mrf.mxu0
      %v1432 = vadd.f32 0.0, %v1431
      %v1433 = vpop.f32.mrf.mxu0
      %1434 = vmatprep.mubr.bf16.mxu0 0
      %1435 = vmatmul.mubr.bf16.gmra.mxu0 %v629
      %v1436 = vpop.f32.mrf.mxu0
      %v1437 = vadd.f32 0.0, %v1436
      %v1438 = vpop.f32.mrf.mxu0
      %v1439 = vpop.f32.mrf.mxu0
      %v1440 = vadd.f32 0.0, %v1439
      %v1441 = vpop.f32.mrf.mxu0
      %1442 = vmatprep.mubr.bf16.mxu0 0
      %1443 = vmatmul.mubr.bf16.gmra.mxu0 %v632
      %v1444 = vpop.f32.mrf.mxu0
      %v1445 = vadd.f32 0.0, %v1444
      %v1446 = vpop.f32.mrf.mxu0
      %v1447 = vpop.f32.mrf.mxu0
      %v1448 = vadd.f32 0.0, %v1447
      %v1449 = vpop.f32.mrf.mxu0
      %1450 = vmatprep.mubr.bf16.mxu0 0
      %1451 = vmatmul.mubr.bf16.gmra.mxu0 %v635
      %v1452 = vpop.f32.mrf.mxu0
      %v1453 = vadd.f32 0.0, %v1452
      %v1454 = vpop.f32.mrf.mxu0
      %v1455 = vpop.f32.mrf.mxu0
      %v1456 = vadd.f32 0.0, %v1455
      %v1457 = vpop.f32.mrf.mxu0
      %1458 = vmatprep.mubr.bf16.mxu0 0
      %1459 = vmatmul.mubr.bf16.gmra.mxu0 %v926
      %v1460 = vpop.f32.mrf.mxu0
      %v1461 = vadd.f32 0.0, %v1460
      %v1462 = vpop.f32.mrf.mxu0
      %v1463 = vpop.f32.mrf.mxu0
      %v1464 = vadd.f32 0.0, %v1463
      %v1465 = vpop.f32.mrf.mxu0
      %1466 = vmatprep.mubr.bf16.mxu0 0
      %1467 = vmatmul.mubr.bf16.gmra.mxu0 %v1218
      %v1468 = vpop.f32.mrf.mxu0
      %v1469 = vadd.f32 0.0, %v1468
      %v1470 = vpop.f32.mrf.mxu0
      %v1471 = vpop.f32.mrf.mxu0
      %v1472 = vadd.f32 0.0, %v1471
      %v1473 = vpop.f32.mrf.mxu0
      %1474 = vdwg.mxu0
      %v1475 = vadd.f32 %v1183, %v1397
      %v1476 = vadd.f32 %v1184, %v1400
      %v1477 = vadd.f32 %v1185, %v1405
      %v1478 = vadd.f32 %v1186, %v1408
      %v1479 = vadd.f32 %v1187, %v1413
      %v1480 = vadd.f32 %v1188, %v1416
      %v1481 = vadd.f32 %v1189, %v1421
      %v1482 = vadd.f32 %v1190, %v1424
      %v1483 = vadd.f32 %v1191, %v1429
      %v1484 = vadd.f32 %v1192, %v1432
      %v1485 = vadd.f32 %v1193, %v1437
      %v1486 = vadd.f32 %v1194, %v1440
      %v1487 = vadd.f32 %v1195, %v1445
      %v1488 = vadd.f32 %v1196, %v1448
      %v1489 = vadd.f32 %v1197, %v1453
      %v1490 = vadd.f32 %v1198, %v1456
      %v1491 = vadd.f32 %v1199, %v1461
      %v1492 = vadd.f32 %v1200, %v1464
      %v1493 = vadd.f32 %v1201, %v1469
      %v1494 = vadd.f32 %v1202, %v1472
      %v1495 = vxor.u32 %v1475, 2147483648
      %v1496 = vxor.u32 %v1476, 2147483648
      %v1497 = vxor.u32 %v1477, 2147483648
      %v1498 = vxor.u32 %v1478, 2147483648
      %v1499 = vxor.u32 %v1479, 2147483648
      %v1500 = vxor.u32 %v1480, 2147483648
      %v1501 = vxor.u32 %v1481, 2147483648
      %v1502 = vxor.u32 %v1482, 2147483648
      %v1503 = vxor.u32 %v1483, 2147483648
      %v1504 = vxor.u32 %v1484, 2147483648
      %v1505 = vxor.u32 %v1485, 2147483648
      %v1506 = vxor.u32 %v1486, 2147483648
      %v1507 = vxor.u32 %v1487, 2147483648
      %v1508 = vxor.u32 %v1488, 2147483648
      %v1509 = vxor.u32 %v1489, 2147483648
      %v1510 = vxor.u32 %v1490, 2147483648
      %v1511 = vxor.u32 %v1491, 2147483648
      %v1512 = vxor.u32 %v1492, 2147483648
      %v1513 = vxor.u32 %v1493, 2147483648
      %v1514 = vxor.u32 %v1494, 2147483648
      %v1515 = vmul.f32 %v1495, 1.442695
      %v1516 = vpow.pop %v1515
      %v1517 = vmul.f32 %v1496, 1.442695
      %v1518 = vpow.pop %v1517
      %v1519 = vmul.f32 %v1497, 1.442695
      %v1520 = vpow.pop %v1519
      %v1521 = vmul.f32 %v1498, 1.442695
      %v1522 = vpow.pop %v1521
      %v1523 = vmul.f32 %v1499, 1.442695
      %v1524 = vpow.pop %v1523
      %v1525 = vmul.f32 %v1500, 1.442695
      %v1526 = vpow.pop %v1525
      %v1527 = vmul.f32 %v1501, 1.442695
      %v1528 = vpow.pop %v1527
      %v1529 = vmul.f32 %v1502, 1.442695
      %v1530 = vpow.pop %v1529
      %v1531 = vmul.f32 %v1503, 1.442695
      %v1532 = vpow.pop %v1531
      %v1533 = vmul.f32 %v1504, 1.442695
      %v1534 = vpow.pop %v1533
      %v1535 = vmul.f32 %v1505, 1.442695
      %v1536 = vpow.pop %v1535
      %v1537 = vmul.f32 %v1506, 1.442695
      %v1538 = vpow.pop %v1537
      %v1539 = vmul.f32 %v1507, 1.442695
      %v1540 = vpow.pop %v1539
      %v1541 = vmul.f32 %v1508, 1.442695
      %v1542 = vpow.pop %v1541
      %v1543 = vmul.f32 %v1509, 1.442695
      %v1544 = vpow.pop %v1543
      %v1545 = vmul.f32 %v1510, 1.442695
      %v1546 = vpow.pop %v1545
      %v1547 = vmul.f32 %v1511, 1.442695
      %v1548 = vpow.pop %v1547
      %v1549 = vmul.f32 %v1512, 1.442695
      %v1550 = vpow.pop %v1549
      %v1551 = vmul.f32 %v1513, 1.442695
      %v1552 = vpow.pop %v1551
      %v1553 = vmul.f32 %v1514, 1.442695
      %v1554 = vpow.pop %v1553
      %v1555 = vadd.f32 %v1516, 1.0
      %v1556 = vadd.f32 %v1518, 1.0
      %v1557 = vadd.f32 %v1520, 1.0
      %v1558 = vadd.f32 %v1522, 1.0
      %v1559 = vadd.f32 %v1524, 1.0
      %v1560 = vadd.f32 %v1526, 1.0
      %v1561 = vadd.f32 %v1528, 1.0
      %v1562 = vadd.f32 %v1530, 1.0
      %v1563 = vadd.f32 %v1532, 1.0
      %v1564 = vadd.f32 %v1534, 1.0
      %v1565 = vadd.f32 %v1536, 1.0
      %v1566 = vadd.f32 %v1538, 1.0
      %v1567 = vadd.f32 %v1540, 1.0
      %v1568 = vadd.f32 %v1542, 1.0
      %v1569 = vadd.f32 %v1544, 1.0
      %v1570 = vadd.f32 %v1546, 1.0
      %v1571 = vadd.f32 %v1548, 1.0
      %v1572 = vadd.f32 %v1550, 1.0
      %v1573 = vadd.f32 %v1552, 1.0
      %v1574 = vadd.f32 %v1554, 1.0
      %v1575 = vrcp.pop %v1555
      %v1576 = vmul.f32 1.0, %v1575
      %v1577 = vrcp.pop %v1556
      %v1578 = vmul.f32 1.0, %v1577
      %v1579 = vrcp.pop %v1557
      %v1580 = vmul.f32 1.0, %v1579
      %v1581 = vrcp.pop %v1558
      %v1582 = vmul.f32 1.0, %v1581
      %v1583 = vrcp.pop %v1559
      %v1584 = vmul.f32 1.0, %v1583
      %v1585 = vrcp.pop %v1560
      %v1586 = vmul.f32 1.0, %v1585
      %v1587 = vrcp.pop %v1561
      %v1588 = vmul.f32 1.0, %v1587
      %v1589 = vrcp.pop %v1562
      %v1590 = vmul.f32 1.0, %v1589
      %v1591 = vrcp.pop %v1563
      %v1592 = vmul.f32 1.0, %v1591
      %v1593 = vrcp.pop %v1564
      %v1594 = vmul.f32 1.0, %v1593
      %v1595 = vrcp.pop %v1565
      %v1596 = vmul.f32 1.0, %v1595
      %v1597 = vrcp.pop %v1566
      %v1598 = vmul.f32 1.0, %v1597
      %v1599 = vrcp.pop %v1567
      %v1600 = vmul.f32 1.0, %v1599
      %v1601 = vrcp.pop %v1568
      %v1602 = vmul.f32 1.0, %v1601
      %v1603 = vrcp.pop %v1569
      %v1604 = vmul.f32 1.0, %v1603
      %v1605 = vrcp.pop %v1570
      %v1606 = vmul.f32 1.0, %v1605
      %v1607 = vrcp.pop %v1571
      %v1608 = vmul.f32 1.0, %v1607
      %v1609 = vrcp.pop %v1572
      %v1610 = vmul.f32 1.0, %v1609
      %v1611 = vrcp.pop %v1573
      %v1612 = vmul.f32 1.0, %v1611
      %v1613 = vrcp.pop %v1574
      %v1614 = vmul.f32 1.0, %v1613
      %v1615 = vmul.f32 %v1333, %v1576
      %v1616 = vmul.f32 %v1334, %v1578
      %v1617 = vmul.f32 %v1335, %v1580
      %v1618 = vmul.f32 %v1336, %v1582
      %v1619 = vmul.f32 %v1337, %v1584
      %v1620 = vmul.f32 %v1338, %v1586
      %v1621 = vmul.f32 %v1339, %v1588
      %v1622 = vmul.f32 %v1340, %v1590
      %v1623 = vmul.f32 %v1341, %v1592
      %v1624 = vmul.f32 %v1342, %v1594
      %v1625 = vmul.f32 %v1343, %v1596
      %v1626 = vmul.f32 %v1344, %v1598
      %v1627 = vmul.f32 %v1345, %v1600
      %v1628 = vmul.f32 %v1346, %v1602
      %v1629 = vmul.f32 %v1347, %v1604
      %v1630 = vmul.f32 %v1348, %v1606
      %v1631 = vmul.f32 %v1349, %v1608
      %v1632 = vmul.f32 %v1350, %v1610
      %v1633 = vmul.f32 %v1351, %v1612
      %v1634 = vmul.f32 %v1352, %v1614
      %v1635 = vpack.c.bf16 %v1616, %v1615
      %v1636 = vpack.c.bf16 %v1618, %v1617
      %v1637 = vpack.c.bf16 %v1620, %v1619
      %v1638 = vpack.c.bf16 %v1622, %v1621
      %v1639 = vpack.c.bf16 %v1624, %v1623
      %v1640 = vpack.c.bf16 %v1626, %v1625
      %v1641 = vpack.c.bf16 %v1628, %v1627
      %v1642 = vpack.c.bf16 %v1630, %v1629
      %v1643 = vpack.c.bf16 %v1632, %v1631
      %v1644 = vpack.c.bf16 %v1634, %v1633
      %v1645 = vld [vmem:[%s5] sm:$0xf]
      %v1646 = vld [vmem:[%s5 + $0x4] sm:$0xf]
      %v1649 = vunpack.c.l.b16 %v1645
      %v1650 = vunpack.c.l.b16 %v1646
      %v1651 = vpack.c.b16 %v1650, %v1649
      %v1654 = vsel %vm606, %v1635, 0
      %v1657 = vsel %vm606, %v1636, 0
      %v1660 = vsel %vm606, %v1637, 0
      %v1663 = vsel %vm606, %v1638, 0
      %v1666 = vsel %vm606, %v1639, 0
      %v1669 = vsel %vm606, %v1640, 0
      %v1672 = vsel %vm606, %v1641, 0
      %v1675 = vsel %vm606, %v1642, 0
      %v1678 = vsel %vm606, %v1643, 0
      %v1681 = vsel %vm606, %v1644, 0
      %1683 = vmatprep.subr.bf16.mxu0 0
      %1684 = vmatpush1.bf16.msra.mxu0 0
      %1685 = vmatprep.subr.bf16.mxu0 0
      %1686 = vmatpush1.bf16.msra.mxu0 0
      %1687 = vmatprep.subr.bf16.mxu0 0
      %1688 = vmatpush1.bf16.msra.mxu0 0
      %1689 = vmatprep.subr.bf16.mxu0 0
      %1690 = vmatpush1.bf16.msra.mxu0 0
      %1691 = vmatprep.subr.bf16.mxu0 0
      %1692 = vmatpush1.bf16.msra.mxu0 0
      %1693 = vmatprep.subr.bf16.mxu0 0
      %1694 = vmatpush1.bf16.msra.mxu0 0
      %1695 = vmatprep.subr.bf16.mxu0 0
      %1696 = vmatpush1.bf16.msra.mxu0 0
      %1697 = vmatprep.subr.bf16.mxu0 0
      %1698 = vmatpush1.bf16.msra.mxu0 %v1651
      %1699 = vmatprep.subr.bf16.mxu0 0
      %1700 = vmatpush2.bf16.msra.mxu0 0
      %1701 = vmatprep.subr.bf16.mxu0 0
      %1702 = vmatpush2.bf16.msra.mxu0 0
      %1703 = vmatprep.subr.bf16.mxu0 0
      %1704 = vmatpush2.bf16.msra.mxu0 0
      %1705 = vmatprep.subr.bf16.mxu0 0
      %1706 = vmatpush2.bf16.msra.mxu0 0
      %1707 = vmatprep.subr.bf16.mxu0 0
      %1708 = vmatpush2.bf16.msra.mxu0 0
      %1709 = vmatprep.subr.bf16.mxu0 0
      %1710 = vmatpush2.bf16.msra.mxu0 0
      %1711 = vmatprep.subr.bf16.mxu0 0
      %1712 = vmatpush2.bf16.msra.mxu0 0
      %1713 = vmatprep.subr.bf16.mxu0 0
      %1714 = vmatpush2.bf16.msra.mxu0 0
      %1715 = vmatprep.mubr.bf16.mxu0 0
      %1716 = vmatmul.mubr.bf16.gmra.mxu0 %v1654
      %v1717 = vpop.f32.mrf.mxu0
      %v1718 = vadd.f32 0.0, %v1717
      %v1719 = vpop.f32.mrf.mxu0
      %v1720 = vpop.f32.mrf.mxu0
      %v1721 = vadd.f32 0.0, %v1720
      %v1722 = vpop.f32.mrf.mxu0
      %1723 = vmatprep.mubr.bf16.mxu0 0
      %1724 = vmatmul.mubr.bf16.gmra.mxu0 %v1657
      %v1725 = vpop.f32.mrf.mxu0
      %v1726 = vadd.f32 0.0, %v1725
      %v1727 = vpop.f32.mrf.mxu0
      %v1728 = vpop.f32.mrf.mxu0
      %v1729 = vadd.f32 0.0, %v1728
      %v1730 = vpop.f32.mrf.mxu0
      %1731 = vmatprep.mubr.bf16.mxu0 0
      %1732 = vmatmul.mubr.bf16.gmra.mxu0 %v1660
      %v1733 = vpop.f32.mrf.mxu0
      %v1734 = vadd.f32 0.0, %v1733
      %v1735 = vpop.f32.mrf.mxu0
      %v1736 = vpop.f32.mrf.mxu0
      %v1737 = vadd.f32 0.0, %v1736
      %v1738 = vpop.f32.mrf.mxu0
      %1739 = vmatprep.mubr.bf16.mxu0 0
      %1740 = vmatmul.mubr.bf16.gmra.mxu0 %v1663
      %v1741 = vpop.f32.mrf.mxu0
      %v1742 = vadd.f32 0.0, %v1741
      %v1743 = vpop.f32.mrf.mxu0
      %v1744 = vpop.f32.mrf.mxu0
      %v1745 = vadd.f32 0.0, %v1744
      %v1746 = vpop.f32.mrf.mxu0
      %1747 = vmatprep.mubr.bf16.mxu0 0
      %1748 = vmatmul.mubr.bf16.gmra.mxu0 %v1666
      %v1749 = vpop.f32.mrf.mxu0
      %v1750 = vadd.f32 0.0, %v1749
      %v1751 = vpop.f32.mrf.mxu0
      %v1752 = vpop.f32.mrf.mxu0
      %v1753 = vadd.f32 0.0, %v1752
      %v1754 = vpop.f32.mrf.mxu0
      %1755 = vmatprep.mubr.bf16.mxu0 0
      %1756 = vmatmul.mubr.bf16.gmra.mxu0 %v1669
      %v1757 = vpop.f32.mrf.mxu0
      %v1758 = vadd.f32 0.0, %v1757
      %v1759 = vpop.f32.mrf.mxu0
      %v1760 = vpop.f32.mrf.mxu0
      %v1761 = vadd.f32 0.0, %v1760
      %v1762 = vpop.f32.mrf.mxu0
      %1763 = vmatprep.mubr.bf16.mxu0 0
      %1764 = vmatmul.mubr.bf16.gmra.mxu0 %v1672
      %v1765 = vpop.f32.mrf.mxu0
      %v1766 = vadd.f32 0.0, %v1765
      %v1767 = vpop.f32.mrf.mxu0
      %v1768 = vpop.f32.mrf.mxu0
      %v1769 = vadd.f32 0.0, %v1768
      %v1770 = vpop.f32.mrf.mxu0
      %1771 = vmatprep.mubr.bf16.mxu0 0
      %1772 = vmatmul.mubr.bf16.gmra.mxu0 %v1675
      %v1773 = vpop.f32.mrf.mxu0
      %v1774 = vadd.f32 0.0, %v1773
      %v1775 = vpop.f32.mrf.mxu0
      %v1776 = vpop.f32.mrf.mxu0
      %v1777 = vadd.f32 0.0, %v1776
      %v1778 = vpop.f32.mrf.mxu0
      %1779 = vmatprep.mubr.bf16.mxu0 0
      %1780 = vmatmul.mubr.bf16.gmra.mxu0 %v1678
      %v1781 = vpop.f32.mrf.mxu0
      %v1782 = vadd.f32 0.0, %v1781
      %v1783 = vpop.f32.mrf.mxu0
      %v1784 = vpop.f32.mrf.mxu0
      %v1785 = vadd.f32 0.0, %v1784
      %v1786 = vpop.f32.mrf.mxu0
      %1787 = vmatprep.mubr.bf16.mxu0 0
      %1788 = vmatmul.mubr.bf16.gmra.mxu0 %v1681
      %v1789 = vpop.f32.mrf.mxu0
      %v1790 = vadd.f32 0.0, %v1789
      %v1791 = vpop.f32.mrf.mxu0
      %v1792 = vpop.f32.mrf.mxu0
      %v1793 = vadd.f32 0.0, %v1792
      %v1794 = vpop.f32.mrf.mxu0
      %1795 = vdwg.mxu0
      %v1796 = vld [vmem:[%s6] sm:$0xff]
      %v1797 = vld [vmem:[%s6 + $0x8] sm:$0xff]
      %v1798 = vld [vmem:[%s6 + $0x10] sm:$0xff]
      %v1799 = vld [vmem:[%s6 + $0x18] sm:$0xff]
      %v1800 = vld [vmem:[%s6 + $0x20] sm:$0xff]
      %v1801 = vld [vmem:[%s6 + $0x28] sm:$0xff]
      %v1802 = vld [vmem:[%s6 + $0x30] sm:$0xff]
      %v1803 = vld [vmem:[%s6 + $0x38] sm:$0xff]
      %v1804 = vld [vmem:[%s6 + $0x40] sm:$0xff]
      %v1805 = vld [vmem:[%s6 + $0x48] sm:$0xff]
      %v1806 = vld [vmem:[%s6 + $0x50] sm:$0xff]
      %v1807 = vld [vmem:[%s6 + $0x58] sm:$0xff]
      %v1808 = vld [vmem:[%s6 + $0x60] sm:$0xff]
      %v1809 = vld [vmem:[%s6 + $0x68] sm:$0xff]
      %v1810 = vld [vmem:[%s6 + $0x70] sm:$0xff]
      %v1811 = vld [vmem:[%s6 + $0x78] sm:$0xff]
      %v1812 = vld [vmem:[%s6 + $0x80] sm:$0xff]
      %v1813 = vld [vmem:[%s6 + $0x88] sm:$0xff]
      %v1814 = vld [vmem:[%s6 + $0x90] sm:$0xff]
      %v1815 = vld [vmem:[%s6 + $0x98] sm:$0xff]
      %v1816 = vpack.c.bf16 %v1721, %v1718
      %v1817 = vpack.c.bf16 %v1729, %v1726
      %v1818 = vpack.c.bf16 %v1737, %v1734
      %v1819 = vpack.c.bf16 %v1745, %v1742
      %v1820 = vpack.c.bf16 %v1753, %v1750
      %v1821 = vpack.c.bf16 %v1761, %v1758
      %v1822 = vpack.c.bf16 %v1769, %v1766
      %v1823 = vpack.c.bf16 %v1777, %v1774
      %v1824 = vpack.c.bf16 %v1785, %v1782
      %v1825 = vpack.c.bf16 %v1793, %v1790
      %s1826 = scalar_lea.vmem %s5, 8
      %v1827 = vld [vmem:[%s1826] sm:$0xf]
      %v1828 = vld [vmem:[%s1826 + $0x4] sm:$0xf]
      %v1831 = vunpack.c.l.b16 %v1827
      %v1832 = vunpack.c.l.b16 %v1828
      %v1833 = vpack.c.b16 %v1832, %v1831
      %1835 = vmatprep.subr.bf16.mxu0 0
      %1836 = vmatpush1.bf16.msra.mxu0 0
      %1837 = vmatprep.subr.bf16.mxu0 0
      %1838 = vmatpush1.bf16.msra.mxu0 0
      %1839 = vmatprep.subr.bf16.mxu0 0
      %1840 = vmatpush1.bf16.msra.mxu0 0
      %1841 = vmatprep.subr.bf16.mxu0 0
      %1842 = vmatpush1.bf16.msra.mxu0 0
      %1843 = vmatprep.subr.bf16.mxu0 0
      %1844 = vmatpush1.bf16.msra.mxu0 0
      %1845 = vmatprep.subr.bf16.mxu0 0
      %1846 = vmatpush1.bf16.msra.mxu0 0
      %1847 = vmatprep.subr.bf16.mxu0 0
      %1848 = vmatpush1.bf16.msra.mxu0 0
      %1849 = vmatprep.subr.bf16.mxu0 0
      %1850 = vmatpush1.bf16.msra.mxu0 %v1833
      %1851 = vmatprep.subr.bf16.mxu0 0
      %1852 = vmatpush2.bf16.msra.mxu0 0
      %1853 = vmatprep.subr.bf16.mxu0 0
      %1854 = vmatpush2.bf16.msra.mxu0 0
      %1855 = vmatprep.subr.bf16.mxu0 0
      %1856 = vmatpush2.bf16.msra.mxu0 0
      %1857 = vmatprep.subr.bf16.mxu0 0
      %1858 = vmatpush2.bf16.msra.mxu0 0
      %1859 = vmatprep.subr.bf16.mxu0 0
      %1860 = vmatpush2.bf16.msra.mxu0 0
      %1861 = vmatprep.subr.bf16.mxu0 0
      %1862 = vmatpush2.bf16.msra.mxu0 0
      %1863 = vmatprep.subr.bf16.mxu0 0
      %1864 = vmatpush2.bf16.msra.mxu0 0
      %1865 = vmatprep.subr.bf16.mxu0 0
      %1866 = vmatpush2.bf16.msra.mxu0 0
      %1867 = vmatprep.mubr.bf16.mxu0 0
      %1868 = vmatmul.mubr.bf16.gmra.mxu0 %v1654
      %v1869 = vpop.f32.mrf.mxu0
      %v1870 = vadd.f32 0.0, %v1869
      %v1871 = vpop.f32.mrf.mxu0
      %v1872 = vpop.f32.mrf.mxu0
      %v1873 = vadd.f32 0.0, %v1872
      %v1874 = vpop.f32.mrf.mxu0
      %1875 = vmatprep.mubr.bf16.mxu0 0
      %1876 = vmatmul.mubr.bf16.gmra.mxu0 %v1657
      %v1877 = vpop.f32.mrf.mxu0
      %v1878 = vadd.f32 0.0, %v1877
      %v1879 = vpop.f32.mrf.mxu0
      %v1880 = vpop.f32.mrf.mxu0
      %v1881 = vadd.f32 0.0, %v1880
      %v1882 = vpop.f32.mrf.mxu0
      %1883 = vmatprep.mubr.bf16.mxu0 0
      %1884 = vmatmul.mubr.bf16.gmra.mxu0 %v1660
      %v1885 = vpop.f32.mrf.mxu0
      %v1886 = vadd.f32 0.0, %v1885
      %v1887 = vpop.f32.mrf.mxu0
      %v1888 = vpop.f32.mrf.mxu0
      %v1889 = vadd.f32 0.0, %v1888
      %v1890 = vpop.f32.mrf.mxu0
      %1891 = vmatprep.mubr.bf16.mxu0 0
      %1892 = vmatmul.mubr.bf16.gmra.mxu0 %v1663
      %v1893 = vpop.f32.mrf.mxu0
      %v1894 = vadd.f32 0.0, %v1893
      %v1895 = vpop.f32.mrf.mxu0
      %v1896 = vpop.f32.mrf.mxu0
      %v1897 = vadd.f32 0.0, %v1896
      %v1898 = vpop.f32.mrf.mxu0
      %1899 = vmatprep.mubr.bf16.mxu0 0
      %1900 = vmatmul.mubr.bf16.gmra.mxu0 %v1666
      %v1901 = vpop.f32.mrf.mxu0
      %v1902 = vadd.f32 0.0, %v1901
      %v1903 = vpop.f32.mrf.mxu0
      %v1904 = vpop.f32.mrf.mxu0
      %v1905 = vadd.f32 0.0, %v1904
      %v1906 = vpop.f32.mrf.mxu0
      %1907 = vmatprep.mubr.bf16.mxu0 0
      %1908 = vmatmul.mubr.bf16.gmra.mxu0 %v1669
      %v1909 = vpop.f32.mrf.mxu0
      %v1910 = vadd.f32 0.0, %v1909
      %v1911 = vpop.f32.mrf.mxu0
      %v1912 = vpop.f32.mrf.mxu0
      %v1913 = vadd.f32 0.0, %v1912
      %v1914 = vpop.f32.mrf.mxu0
      %1915 = vmatprep.mubr.bf16.mxu0 0
      %1916 = vmatmul.mubr.bf16.gmra.mxu0 %v1672
      %v1917 = vpop.f32.mrf.mxu0
      %v1918 = vadd.f32 0.0, %v1917
      %v1919 = vpop.f32.mrf.mxu0
      %v1920 = vpop.f32.mrf.mxu0
      %v1921 = vadd.f32 0.0, %v1920
      %v1922 = vpop.f32.mrf.mxu0
      %1923 = vmatprep.mubr.bf16.mxu0 0
      %1924 = vmatmul.mubr.bf16.gmra.mxu0 %v1675
      %v1925 = vpop.f32.mrf.mxu0
      %v1926 = vadd.f32 0.0, %v1925
      %v1927 = vpop.f32.mrf.mxu0
      %v1928 = vpop.f32.mrf.mxu0
      %v1929 = vadd.f32 0.0, %v1928
      %v1930 = vpop.f32.mrf.mxu0
      %1931 = vmatprep.mubr.bf16.mxu0 0
      %1932 = vmatmul.mubr.bf16.gmra.mxu0 %v1678
      %v1933 = vpop.f32.mrf.mxu0
      %v1934 = vadd.f32 0.0, %v1933
      %v1935 = vpop.f32.mrf.mxu0
      %v1936 = vpop.f32.mrf.mxu0
      %v1937 = vadd.f32 0.0, %v1936
      %v1938 = vpop.f32.mrf.mxu0
      %1939 = vmatprep.mubr.bf16.mxu0 0
      %1940 = vmatmul.mubr.bf16.gmra.mxu0 %v1681
      %v1941 = vpop.f32.mrf.mxu0
      %v1942 = vadd.f32 0.0, %v1941
      %v1943 = vpop.f32.mrf.mxu0
      %v1944 = vpop.f32.mrf.mxu0
      %v1945 = vadd.f32 0.0, %v1944
      %v1946 = vpop.f32.mrf.mxu0
      %1947 = vdwg.mxu0
      %s1948 = scalar_lea.vmem %s6, 160
      %v1949 = vld [vmem:[%s1948] sm:$0xff]
      %v1950 = vld [vmem:[%s1948 + $0x8] sm:$0xff]
      %v1951 = vld [vmem:[%s1948 + $0x10] sm:$0xff]
      %v1952 = vld [vmem:[%s1948 + $0x18] sm:$0xff]
      %v1953 = vld [vmem:[%s1948 + $0x20] sm:$0xff]
      %v1954 = vld [vmem:[%s1948 + $0x28] sm:$0xff]
      %v1955 = vld [vmem:[%s1948 + $0x30] sm:$0xff]
      %v1956 = vld [vmem:[%s1948 + $0x38] sm:$0xff]
      %v1957 = vld [vmem:[%s1948 + $0x40] sm:$0xff]
      %v1958 = vld [vmem:[%s1948 + $0x48] sm:$0xff]
      %v1959 = vld [vmem:[%s1948 + $0x50] sm:$0xff]
      %v1960 = vld [vmem:[%s1948 + $0x58] sm:$0xff]
      %v1961 = vld [vmem:[%s1948 + $0x60] sm:$0xff]
      %v1962 = vld [vmem:[%s1948 + $0x68] sm:$0xff]
      %v1963 = vld [vmem:[%s1948 + $0x70] sm:$0xff]
      %v1964 = vld [vmem:[%s1948 + $0x78] sm:$0xff]
      %v1965 = vld [vmem:[%s1948 + $0x80] sm:$0xff]
      %v1966 = vld [vmem:[%s1948 + $0x88] sm:$0xff]
      %v1967 = vld [vmem:[%s1948 + $0x90] sm:$0xff]
      %v1968 = vld [vmem:[%s1948 + $0x98] sm:$0xff]
      %v1969 = vpack.c.bf16 %v1873, %v1870
      %v1970 = vpack.c.bf16 %v1881, %v1878
      %v1971 = vpack.c.bf16 %v1889, %v1886
      %v1972 = vpack.c.bf16 %v1897, %v1894
      %v1973 = vpack.c.bf16 %v1905, %v1902
      %v1974 = vpack.c.bf16 %v1913, %v1910
      %v1975 = vpack.c.bf16 %v1921, %v1918
      %v1976 = vpack.c.bf16 %v1929, %v1926
      %v1977 = vpack.c.bf16 %v1937, %v1934
      %v1978 = vpack.c.bf16 %v1945, %v1942
      %v1999 = vunpack.c.l.b16 %v1949
      %v2000 = vunpack.c.h.b16 %v1949
      %v2001 = vunpack.c.l.b16 %v1950
      %v2002 = vunpack.c.h.b16 %v1950
      %v2003 = vunpack.c.l.b16 %v1951
      %v2004 = vunpack.c.h.b16 %v1951
      %v2005 = vunpack.c.l.b16 %v1952
      %v2006 = vunpack.c.h.b16 %v1952
      %v2007 = vunpack.c.l.b16 %v1953
      %v2008 = vunpack.c.h.b16 %v1953
      %v2009 = vunpack.c.l.b16 %v1954
      %v2010 = vunpack.c.h.b16 %v1954
      %v2011 = vunpack.c.l.b16 %v1955
      %v2012 = vunpack.c.h.b16 %v1955
      %v2013 = vunpack.c.l.b16 %v1956
      %v2014 = vunpack.c.h.b16 %v1956
      %v2015 = vunpack.c.l.b16 %v1957
      %v2016 = vunpack.c.h.b16 %v1957
      %v2017 = vunpack.c.l.b16 %v1958
      %v2018 = vunpack.c.h.b16 %v1958
      %v2019 = vunpack.c.l.b16 %v1959
      %v2020 = vunpack.c.h.b16 %v1959
      %v2021 = vunpack.c.l.b16 %v1960
      %v2022 = vunpack.c.h.b16 %v1960
      %v2023 = vunpack.c.l.b16 %v1961
      %v2024 = vunpack.c.h.b16 %v1961
      %v2025 = vunpack.c.l.b16 %v1962
      %v2026 = vunpack.c.h.b16 %v1962
      %v2027 = vunpack.c.l.b16 %v1963
      %v2028 = vunpack.c.h.b16 %v1963
      %v2029 = vunpack.c.l.b16 %v1964
      %v2030 = vunpack.c.h.b16 %v1964
      %v2031 = vunpack.c.l.b16 %v1965
      %v2032 = vunpack.c.h.b16 %v1965
      %v2033 = vunpack.c.l.b16 %v1966
      %v2034 = vunpack.c.h.b16 %v1966
      %v2035 = vunpack.c.l.b16 %v1967
      %v2036 = vunpack.c.h.b16 %v1967
      %v2037 = vunpack.c.l.b16 %v1968
      %v2038 = vunpack.c.h.b16 %v1968
      %v2039 = vpack.c.b16 %v2001, %v1999
      %v2040 = vpack.c.b16 %v2002, %v2000
      %v2041 = vpack.c.b16 %v2005, %v2003
      %v2042 = vpack.c.b16 %v2006, %v2004
      %v2043 = vpack.c.b16 %v2009, %v2007
      %v2044 = vpack.c.b16 %v2010, %v2008
      %v2045 = vpack.c.b16 %v2013, %v2011
      %v2046 = vpack.c.b16 %v2014, %v2012
      %v2047 = vpack.c.b16 %v2017, %v2015
      %v2048 = vpack.c.b16 %v2018, %v2016
      %v2049 = vpack.c.b16 %v2021, %v2019
      %v2050 = vpack.c.b16 %v2022, %v2020
      %v2051 = vpack.c.b16 %v2025, %v2023
      %v2052 = vpack.c.b16 %v2026, %v2024
      %v2053 = vpack.c.b16 %v2029, %v2027
      %v2054 = vpack.c.b16 %v2030, %v2028
      %v2055 = vpack.c.b16 %v2033, %v2031
      %v2056 = vpack.c.b16 %v2034, %v2032
      %v2057 = vpack.c.b16 %v2037, %v2035
      %v2058 = vpack.c.b16 %v2038, %v2036
      %vm2069 = vcmask 261120
      %v2071 = vsel %vm2069, %v2040, 0
      %v2074 = vsel %vm2069, %v2042, 0
      %v2077 = vsel %vm2069, %v2044, 0
      %v2080 = vsel %vm2069, %v2046, 0
      %v2083 = vsel %vm2069, %v2048, 0
      %v2086 = vsel %vm2069, %v2050, 0
      %v2089 = vsel %vm2069, %v2052, 0
      %v2092 = vsel %vm2069, %v2054, 0
      %v2095 = vsel %vm2069, %v2056, 0
      %v2098 = vsel %vm2069, %v2058, 0
      %2100 = vmatprep.subr.bf16.mxu0 0
      %2101 = vmatpush1.bf16.msra.mxu0 %v1976
      %2102 = vmatprep.subr.bf16.mxu0 0
      %2103 = vmatpush1.bf16.msra.mxu0 %v1975
      %2104 = vmatprep.subr.bf16.mxu0 0
      %2105 = vmatpush1.bf16.msra.mxu0 %v1974
      %2106 = vmatprep.subr.bf16.mxu0 0
      %2107 = vmatpush1.bf16.msra.mxu0 %v1973
      %2108 = vmatprep.subr.bf16.mxu0 0
      %2109 = vmatpush1.bf16.msra.mxu0 %v1972
      %2110 = vmatprep.subr.bf16.mxu0 0
      %2111 = vmatpush1.bf16.msra.mxu0 %v1971
      %2112 = vmatprep.subr.bf16.mxu0 0
      %2113 = vmatpush1.bf16.msra.mxu0 %v1970
      %2114 = vmatprep.subr.bf16.mxu0 0
      %2115 = vmatpush1.bf16.msra.mxu0 %v1969
      %2116 = vmatprep.subr.bf16.mxu0 0
      %2117 = vmatpush2.bf16.msra.mxu0 0
      %2118 = vmatprep.subr.bf16.mxu0 0
      %2119 = vmatpush2.bf16.msra.mxu0 0
      %2120 = vmatprep.subr.bf16.mxu0 0
      %2121 = vmatpush2.bf16.msra.mxu0 0
      %2122 = vmatprep.subr.bf16.mxu0 0
      %2123 = vmatpush2.bf16.msra.mxu0 0
      %2124 = vmatprep.subr.bf16.mxu0 0
      %2125 = vmatpush2.bf16.msra.mxu0 0
      %2126 = vmatprep.subr.bf16.mxu0 0
      %2127 = vmatpush2.bf16.msra.mxu0 0
      %2128 = vmatprep.subr.bf16.mxu0 0
      %2129 = vmatpush2.bf16.msra.mxu0 %v1978
      %2130 = vmatprep.subr.bf16.mxu0 0
      %2131 = vmatpush2.bf16.msra.mxu0 %v1977
      %2132 = vmatprep.mubr.bf16.mxu0 %v2071
      %2133 = vmatmul.mubr.bf16.gmra.mxu0 %v2039
      %v2134 = vpop.f32.mrf.mxu0
      %v2135 = vadd.f32 0.0, %v2134
      %v2136 = vpop.f32.mrf.mxu0
      %v2137 = vpop.f32.mrf.mxu0
      %v2138 = vadd.f32 0.0, %v2137
      %v2139 = vpop.f32.mrf.mxu0
      %2140 = vmatprep.mubr.bf16.mxu0 %v2074
      %2141 = vmatmul.mubr.bf16.gmra.mxu0 %v2041
      %v2142 = vpop.f32.mrf.mxu0
      %v2143 = vadd.f32 0.0, %v2142
      %v2144 = vpop.f32.mrf.mxu0
      %v2145 = vpop.f32.mrf.mxu0
      %v2146 = vadd.f32 0.0, %v2145
      %v2147 = vpop.f32.mrf.mxu0
      %2148 = vmatprep.mubr.bf16.mxu0 %v2077
      %2149 = vmatmul.mubr.bf16.gmra.mxu0 %v2043
      %v2150 = vpop.f32.mrf.mxu0
      %v2151 = vadd.f32 0.0, %v2150
      %v2152 = vpop.f32.mrf.mxu0
      %v2153 = vpop.f32.mrf.mxu0
      %v2154 = vadd.f32 0.0, %v2153
      %v2155 = vpop.f32.mrf.mxu0
      %2156 = vmatprep.mubr.bf16.mxu0 %v2080
      %2157 = vmatmul.mubr.bf16.gmra.mxu0 %v2045
      %v2158 = vpop.f32.mrf.mxu0
      %v2159 = vadd.f32 0.0, %v2158
      %v2160 = vpop.f32.mrf.mxu0
      %v2161 = vpop.f32.mrf.mxu0
      %v2162 = vadd.f32 0.0, %v2161
      %v2163 = vpop.f32.mrf.mxu0
      %2164 = vmatprep.mubr.bf16.mxu0 %v2083
      %2165 = vmatmul.mubr.bf16.gmra.mxu0 %v2047
      %v2166 = vpop.f32.mrf.mxu0
      %v2167 = vadd.f32 0.0, %v2166
      %v2168 = vpop.f32.mrf.mxu0
      %v2169 = vpop.f32.mrf.mxu0
      %v2170 = vadd.f32 0.0, %v2169
      %v2171 = vpop.f32.mrf.mxu0
      %2172 = vmatprep.mubr.bf16.mxu0 %v2086
      %2173 = vmatmul.mubr.bf16.gmra.mxu0 %v2049
      %v2174 = vpop.f32.mrf.mxu0
      %v2175 = vadd.f32 0.0, %v2174
      %v2176 = vpop.f32.mrf.mxu0
      %v2177 = vpop.f32.mrf.mxu0
      %v2178 = vadd.f32 0.0, %v2177
      %v2179 = vpop.f32.mrf.mxu0
      %2180 = vmatprep.mubr.bf16.mxu0 %v2089
      %2181 = vmatmul.mubr.bf16.gmra.mxu0 %v2051
      %v2182 = vpop.f32.mrf.mxu0
      %v2183 = vadd.f32 0.0, %v2182
      %v2184 = vpop.f32.mrf.mxu0
      %v2185 = vpop.f32.mrf.mxu0
      %v2186 = vadd.f32 0.0, %v2185
      %v2187 = vpop.f32.mrf.mxu0
      %2188 = vmatprep.mubr.bf16.mxu0 %v2092
      %2189 = vmatmul.mubr.bf16.gmra.mxu0 %v2053
      %v2190 = vpop.f32.mrf.mxu0
      %v2191 = vadd.f32 0.0, %v2190
      %v2192 = vpop.f32.mrf.mxu0
      %v2193 = vpop.f32.mrf.mxu0
      %v2194 = vadd.f32 0.0, %v2193
      %v2195 = vpop.f32.mrf.mxu0
      %2196 = vmatprep.mubr.bf16.mxu0 %v2095
      %2197 = vmatmul.mubr.bf16.gmra.mxu0 %v2055
      %v2198 = vpop.f32.mrf.mxu0
      %v2199 = vadd.f32 0.0, %v2198
      %v2200 = vpop.f32.mrf.mxu0
      %v2201 = vpop.f32.mrf.mxu0
      %v2202 = vadd.f32 0.0, %v2201
      %v2203 = vpop.f32.mrf.mxu0
      %2204 = vmatprep.mubr.bf16.mxu0 %v2098
      %2205 = vmatmul.mubr.bf16.gmra.mxu0 %v2057
      %v2206 = vpop.f32.mrf.mxu0
      %v2207 = vadd.f32 0.0, %v2206
      %v2208 = vpop.f32.mrf.mxu0
      %v2209 = vpop.f32.mrf.mxu0
      %v2210 = vadd.f32 0.0, %v2209
      %v2211 = vpop.f32.mrf.mxu0
      %2212 = vdwg.mxu0
      %v2233 = vunpack.c.l.b16 %v1796
      %v2234 = vunpack.c.h.b16 %v1796
      %v2235 = vunpack.c.l.b16 %v1797
      %v2236 = vunpack.c.h.b16 %v1797
      %v2237 = vunpack.c.l.b16 %v1798
      %v2238 = vunpack.c.h.b16 %v1798
      %v2239 = vunpack.c.l.b16 %v1799
      %v2240 = vunpack.c.h.b16 %v1799
      %v2241 = vunpack.c.l.b16 %v1800
      %v2242 = vunpack.c.h.b16 %v1800
      %v2243 = vunpack.c.l.b16 %v1801
      %v2244 = vunpack.c.h.b16 %v1801
      %v2245 = vunpack.c.l.b16 %v1802
      %v2246 = vunpack.c.h.b16 %v1802
      %v2247 = vunpack.c.l.b16 %v1803
      %v2248 = vunpack.c.h.b16 %v1803
      %v2249 = vunpack.c.l.b16 %v1804
      %v2250 = vunpack.c.h.b16 %v1804
      %v2251 = vunpack.c.l.b16 %v1805
      %v2252 = vunpack.c.h.b16 %v1805
      %v2253 = vunpack.c.l.b16 %v1806
      %v2254 = vunpack.c.h.b16 %v1806
      %v2255 = vunpack.c.l.b16 %v1807
      %v2256 = vunpack.c.h.b16 %v1807
      %v2257 = vunpack.c.l.b16 %v1808
      %v2258 = vunpack.c.h.b16 %v1808
      %v2259 = vunpack.c.l.b16 %v1809
      %v2260 = vunpack.c.h.b16 %v1809
      %v2261 = vunpack.c.l.b16 %v1810
      %v2262 = vunpack.c.h.b16 %v1810
      %v2263 = vunpack.c.l.b16 %v1811
      %v2264 = vunpack.c.h.b16 %v1811
      %v2265 = vunpack.c.l.b16 %v1812
      %v2266 = vunpack.c.h.b16 %v1812
      %v2267 = vunpack.c.l.b16 %v1813
      %v2268 = vunpack.c.h.b16 %v1813
      %v2269 = vunpack.c.l.b16 %v1814
      %v2270 = vunpack.c.h.b16 %v1814
      %v2271 = vunpack.c.l.b16 %v1815
      %v2272 = vunpack.c.h.b16 %v1815
      %v2273 = vpack.c.b16 %v2235, %v2233
      %v2274 = vpack.c.b16 %v2236, %v2234
      %v2275 = vpack.c.b16 %v2239, %v2237
      %v2276 = vpack.c.b16 %v2240, %v2238
      %v2277 = vpack.c.b16 %v2243, %v2241
      %v2278 = vpack.c.b16 %v2244, %v2242
      %v2279 = vpack.c.b16 %v2247, %v2245
      %v2280 = vpack.c.b16 %v2248, %v2246
      %v2281 = vpack.c.b16 %v2251, %v2249
      %v2282 = vpack.c.b16 %v2252, %v2250
      %v2283 = vpack.c.b16 %v2255, %v2253
      %v2284 = vpack.c.b16 %v2256, %v2254
      %v2285 = vpack.c.b16 %v2259, %v2257
      %v2286 = vpack.c.b16 %v2260, %v2258
      %v2287 = vpack.c.b16 %v2263, %v2261
      %v2288 = vpack.c.b16 %v2264, %v2262
      %v2289 = vpack.c.b16 %v2267, %v2265
      %v2290 = vpack.c.b16 %v2268, %v2266
      %v2291 = vpack.c.b16 %v2271, %v2269
      %v2292 = vpack.c.b16 %v2272, %v2270
      %v2304 = vsel %vm2069, %v2274, 0
      %v2307 = vsel %vm2069, %v2276, 0
      %v2310 = vsel %vm2069, %v2278, 0
      %v2313 = vsel %vm2069, %v2280, 0
      %v2316 = vsel %vm2069, %v2282, 0
      %v2319 = vsel %vm2069, %v2284, 0
      %v2322 = vsel %vm2069, %v2286, 0
      %v2325 = vsel %vm2069, %v2288, 0
      %v2328 = vsel %vm2069, %v2290, 0
      %v2331 = vsel %vm2069, %v2292, 0
      %2333 = vmatprep.subr.bf16.mxu0 0
      %2334 = vmatpush1.bf16.msra.mxu0 %v1823
      %2335 = vmatprep.subr.bf16.mxu0 0
      %2336 = vmatpush1.bf16.msra.mxu0 %v1822
      %2337 = vmatprep.subr.bf16.mxu0 0
      %2338 = vmatpush1.bf16.msra.mxu0 %v1821
      %2339 = vmatprep.subr.bf16.mxu0 0
      %2340 = vmatpush1.bf16.msra.mxu0 %v1820
      %2341 = vmatprep.subr.bf16.mxu0 0
      %2342 = vmatpush1.bf16.msra.mxu0 %v1819
      %2343 = vmatprep.subr.bf16.mxu0 0
      %2344 = vmatpush1.bf16.msra.mxu0 %v1818
      %2345 = vmatprep.subr.bf16.mxu0 0
      %2346 = vmatpush1.bf16.msra.mxu0 %v1817
      %2347 = vmatprep.subr.bf16.mxu0 0
      %2348 = vmatpush1.bf16.msra.mxu0 %v1816
      %2349 = vmatprep.subr.bf16.mxu0 0
      %2350 = vmatpush2.bf16.msra.mxu0 0
      %2351 = vmatprep.subr.bf16.mxu0 0
      %2352 = vmatpush2.bf16.msra.mxu0 0
      %2353 = vmatprep.subr.bf16.mxu0 0
      %2354 = vmatpush2.bf16.msra.mxu0 0
      %2355 = vmatprep.subr.bf16.mxu0 0
      %2356 = vmatpush2.bf16.msra.mxu0 0
      %2357 = vmatprep.subr.bf16.mxu0 0
      %2358 = vmatpush2.bf16.msra.mxu0 0
      %2359 = vmatprep.subr.bf16.mxu0 0
      %2360 = vmatpush2.bf16.msra.mxu0 0
      %2361 = vmatprep.subr.bf16.mxu0 0
      %2362 = vmatpush2.bf16.msra.mxu0 %v1825
      %2363 = vmatprep.subr.bf16.mxu0 0
      %2364 = vmatpush2.bf16.msra.mxu0 %v1824
      %2365 = vmatprep.mubr.bf16.mxu0 %v2304
      %2366 = vmatmul.mubr.bf16.gmra.mxu0 %v2273
      %v2367 = vpop.f32.mrf.mxu0
      %v2368 = vadd.f32 %v2135, %v2367
      %v2369 = vpop.f32.mrf.mxu0
      %v2370 = vpop.f32.mrf.mxu0
      %v2371 = vadd.f32 %v2138, %v2370
      %v2372 = vpop.f32.mrf.mxu0
      %2373 = vmatprep.mubr.bf16.mxu0 %v2307
      %2374 = vmatmul.mubr.bf16.gmra.mxu0 %v2275
      %v2375 = vpop.f32.mrf.mxu0
      %v2376 = vadd.f32 %v2143, %v2375
      %v2377 = vpop.f32.mrf.mxu0
      %v2378 = vpop.f32.mrf.mxu0
      %v2379 = vadd.f32 %v2146, %v2378
      %v2380 = vpop.f32.mrf.mxu0
      %2381 = vmatprep.mubr.bf16.mxu0 %v2310
      %2382 = vmatmul.mubr.bf16.gmra.mxu0 %v2277
      %v2383 = vpop.f32.mrf.mxu0
      %v2384 = vadd.f32 %v2151, %v2383
      %v2385 = vpop.f32.mrf.mxu0
      %v2386 = vpop.f32.mrf.mxu0
      %v2387 = vadd.f32 %v2154, %v2386
      %v2388 = vpop.f32.mrf.mxu0
      %2389 = vmatprep.mubr.bf16.mxu0 %v2313
      %2390 = vmatmul.mubr.bf16.gmra.mxu0 %v2279
      %v2391 = vpop.f32.mrf.mxu0
      %v2392 = vadd.f32 %v2159, %v2391
      %v2393 = vpop.f32.mrf.mxu0
      %v2394 = vpop.f32.mrf.mxu0
      %v2395 = vadd.f32 %v2162, %v2394
      %v2396 = vpop.f32.mrf.mxu0
      %2397 = vmatprep.mubr.bf16.mxu0 %v2316
      %2398 = vmatmul.mubr.bf16.gmra.mxu0 %v2281
      %v2399 = vpop.f32.mrf.mxu0
      %v2400 = vadd.f32 %v2167, %v2399
      %v2401 = vpop.f32.mrf.mxu0
      %v2402 = vpop.f32.mrf.mxu0
      %v2403 = vadd.f32 %v2170, %v2402
      %v2404 = vpop.f32.mrf.mxu0
      %2405 = vmatprep.mubr.bf16.mxu0 %v2319
      %2406 = vmatmul.mubr.bf16.gmra.mxu0 %v2283
      %v2407 = vpop.f32.mrf.mxu0
      %v2408 = vadd.f32 %v2175, %v2407
      %v2409 = vpop.f32.mrf.mxu0
      %v2410 = vpop.f32.mrf.mxu0
      %v2411 = vadd.f32 %v2178, %v2410
      %v2412 = vpop.f32.mrf.mxu0
      %2413 = vmatprep.mubr.bf16.mxu0 %v2322
      %2414 = vmatmul.mubr.bf16.gmra.mxu0 %v2285
      %v2415 = vpop.f32.mrf.mxu0
      %v2416 = vadd.f32 %v2183, %v2415
      %v2417 = vpop.f32.mrf.mxu0
      %v2418 = vpop.f32.mrf.mxu0
      %v2419 = vadd.f32 %v2186, %v2418
      %v2420 = vpop.f32.mrf.mxu0
      %2421 = vmatprep.mubr.bf16.mxu0 %v2325
      %2422 = vmatmul.mubr.bf16.gmra.mxu0 %v2287
      %v2423 = vpop.f32.mrf.mxu0
      %v2424 = vadd.f32 %v2191, %v2423
      %v2425 = vpop.f32.mrf.mxu0
      %v2426 = vpop.f32.mrf.mxu0
      %v2427 = vadd.f32 %v2194, %v2426
      %v2428 = vpop.f32.mrf.mxu0
      %2429 = vmatprep.mubr.bf16.mxu0 %v2328
      %2430 = vmatmul.mubr.bf16.gmra.mxu0 %v2289
      %v2431 = vpop.f32.mrf.mxu0
      %v2432 = vadd.f32 %v2199, %v2431
      %v2433 = vpop.f32.mrf.mxu0
      %v2434 = vpop.f32.mrf.mxu0
      %v2435 = vadd.f32 %v2202, %v2434
      %v2436 = vpop.f32.mrf.mxu0
      %2437 = vmatprep.mubr.bf16.mxu0 %v2331
      %2438 = vmatmul.mubr.bf16.gmra.mxu0 %v2291
      %v2439 = vpop.f32.mrf.mxu0
      %v2440 = vadd.f32 %v2207, %v2439
      %v2441 = vpop.f32.mrf.mxu0
      %v2442 = vpop.f32.mrf.mxu0
      %v2443 = vadd.f32 %v2210, %v2442
      %v2444 = vpop.f32.mrf.mxu0
      %2445 = vdwg.mxu0
      %s2446 = scalar_lea.vmem %s5, 16
      %v2447 = vld [vmem:[%s2446] sm:$0xf]
      %v2448 = vld [vmem:[%s2446 + $0x4] sm:$0xf]
      %v2451 = vunpack.c.l.b16 %v2447
      %v2452 = vunpack.c.l.b16 %v2448
      %v2453 = vpack.c.b16 %v2452, %v2451
      %2455 = vmatprep.subr.bf16.mxu0 0
      %2456 = vmatpush1.bf16.msra.mxu0 0
      %2457 = vmatprep.subr.bf16.mxu0 0
      %2458 = vmatpush1.bf16.msra.mxu0 0
      %2459 = vmatprep.subr.bf16.mxu0 0
      %2460 = vmatpush1.bf16.msra.mxu0 0
      %2461 = vmatprep.subr.bf16.mxu0 0
      %2462 = vmatpush1.bf16.msra.mxu0 0
      %2463 = vmatprep.subr.bf16.mxu0 0
      %2464 = vmatpush1.bf16.msra.mxu0 0
      %2465 = vmatprep.subr.bf16.mxu0 0
      %2466 = vmatpush1.bf16.msra.mxu0 0
      %2467 = vmatprep.subr.bf16.mxu0 0
      %2468 = vmatpush1.bf16.msra.mxu0 0
      %2469 = vmatprep.subr.bf16.mxu0 0
      %2470 = vmatpush1.bf16.msra.mxu0 %v2453
      %2471 = vmatprep.subr.bf16.mxu0 0
      %2472 = vmatpush2.bf16.msra.mxu0 0
      %2473 = vmatprep.subr.bf16.mxu0 0
      %2474 = vmatpush2.bf16.msra.mxu0 0
      %2475 = vmatprep.subr.bf16.mxu0 0
      %2476 = vmatpush2.bf16.msra.mxu0 0
      %2477 = vmatprep.subr.bf16.mxu0 0
      %2478 = vmatpush2.bf16.msra.mxu0 0
      %2479 = vmatprep.subr.bf16.mxu0 0
      %2480 = vmatpush2.bf16.msra.mxu0 0
      %2481 = vmatprep.subr.bf16.mxu0 0
      %2482 = vmatpush2.bf16.msra.mxu0 0
      %2483 = vmatprep.subr.bf16.mxu0 0
      %2484 = vmatpush2.bf16.msra.mxu0 0
      %2485 = vmatprep.subr.bf16.mxu0 0
      %2486 = vmatpush2.bf16.msra.mxu0 0
      %2487 = vmatprep.mubr.bf16.mxu0 0
      %2488 = vmatmul.mubr.bf16.gmra.mxu0 %v1654
      %v2489 = vpop.f32.mrf.mxu0
      %v2490 = vadd.f32 0.0, %v2489
      %v2491 = vpop.f32.mrf.mxu0
      %v2492 = vpop.f32.mrf.mxu0
      %v2493 = vadd.f32 0.0, %v2492
      %v2494 = vpop.f32.mrf.mxu0
      %2495 = vmatprep.mubr.bf16.mxu0 0
      %2496 = vmatmul.mubr.bf16.gmra.mxu0 %v1657
      %v2497 = vpop.f32.mrf.mxu0
      %v2498 = vadd.f32 0.0, %v2497
      %v2499 = vpop.f32.mrf.mxu0
      %v2500 = vpop.f32.mrf.mxu0
      %v2501 = vadd.f32 0.0, %v2500
      %v2502 = vpop.f32.mrf.mxu0
      %2503 = vmatprep.mubr.bf16.mxu0 0
      %2504 = vmatmul.mubr.bf16.gmra.mxu0 %v1660
      %v2505 = vpop.f32.mrf.mxu0
      %v2506 = vadd.f32 0.0, %v2505
      %v2507 = vpop.f32.mrf.mxu0
      %v2508 = vpop.f32.mrf.mxu0
      %v2509 = vadd.f32 0.0, %v2508
      %v2510 = vpop.f32.mrf.mxu0
      %2511 = vmatprep.mubr.bf16.mxu0 0
      %2512 = vmatmul.mubr.bf16.gmra.mxu0 %v1663
      %v2513 = vpop.f32.mrf.mxu0
      %v2514 = vadd.f32 0.0, %v2513
      %v2515 = vpop.f32.mrf.mxu0
      %v2516 = vpop.f32.mrf.mxu0
      %v2517 = vadd.f32 0.0, %v2516
      %v2518 = vpop.f32.mrf.mxu0
      %2519 = vmatprep.mubr.bf16.mxu0 0
      %2520 = vmatmul.mubr.bf16.gmra.mxu0 %v1666
      %v2521 = vpop.f32.mrf.mxu0
      %v2522 = vadd.f32 0.0, %v2521
      %v2523 = vpop.f32.mrf.mxu0
      %v2524 = vpop.f32.mrf.mxu0
      %v2525 = vadd.f32 0.0, %v2524
      %v2526 = vpop.f32.mrf.mxu0
      %2527 = vmatprep.mubr.bf16.mxu0 0
      %2528 = vmatmul.mubr.bf16.gmra.mxu0 %v1669
      %v2529 = vpop.f32.mrf.mxu0
      %v2530 = vadd.f32 0.0, %v2529
      %v2531 = vpop.f32.mrf.mxu0
      %v2532 = vpop.f32.mrf.mxu0
      %v2533 = vadd.f32 0.0, %v2532
      %v2534 = vpop.f32.mrf.mxu0
      %2535 = vmatprep.mubr.bf16.mxu0 0
      %2536 = vmatmul.mubr.bf16.gmra.mxu0 %v1672
      %v2537 = vpop.f32.mrf.mxu0
      %v2538 = vadd.f32 0.0, %v2537
      %v2539 = vpop.f32.mrf.mxu0
      %v2540 = vpop.f32.mrf.mxu0
      %v2541 = vadd.f32 0.0, %v2540
      %v2542 = vpop.f32.mrf.mxu0
      %2543 = vmatprep.mubr.bf16.mxu0 0
      %2544 = vmatmul.mubr.bf16.gmra.mxu0 %v1675
      %v2545 = vpop.f32.mrf.mxu0
      %v2546 = vadd.f32 0.0, %v2545
      %v2547 = vpop.f32.mrf.mxu0
      %v2548 = vpop.f32.mrf.mxu0
      %v2549 = vadd.f32 0.0, %v2548
      %v2550 = vpop.f32.mrf.mxu0
      %2551 = vmatprep.mubr.bf16.mxu0 0
      %2552 = vmatmul.mubr.bf16.gmra.mxu0 %v1678
      %v2553 = vpop.f32.mrf.mxu0
      %v2554 = vadd.f32 0.0, %v2553
      %v2555 = vpop.f32.mrf.mxu0
      %v2556 = vpop.f32.mrf.mxu0
      %v2557 = vadd.f32 0.0, %v2556
      %v2558 = vpop.f32.mrf.mxu0
      %2559 = vmatprep.mubr.bf16.mxu0 0
      %2560 = vmatmul.mubr.bf16.gmra.mxu0 %v1681
      %v2561 = vpop.f32.mrf.mxu0
      %v2562 = vadd.f32 0.0, %v2561
      %v2563 = vpop.f32.mrf.mxu0
      %v2564 = vpop.f32.mrf.mxu0
      %v2565 = vadd.f32 0.0, %v2564
      %v2566 = vpop.f32.mrf.mxu0
      %2567 = vdwg.mxu0
      %s2568 = scalar_lea.vmem %s6, 320
      %v2569 = vld [vmem:[%s2568] sm:$0xff]
      %v2570 = vld [vmem:[%s2568 + $0x8] sm:$0xff]
      %v2571 = vld [vmem:[%s2568 + $0x10] sm:$0xff]
      %v2572 = vld [vmem:[%s2568 + $0x18] sm:$0xff]
      %v2573 = vld [vmem:[%s2568 + $0x20] sm:$0xff]
      %v2574 = vld [vmem:[%s2568 + $0x28] sm:$0xff]
      %v2575 = vld [vmem:[%s2568 + $0x30] sm:$0xff]
      %v2576 = vld [vmem:[%s2568 + $0x38] sm:$0xff]
      %v2577 = vld [vmem:[%s2568 + $0x40] sm:$0xff]
      %v2578 = vld [vmem:[%s2568 + $0x48] sm:$0xff]
      %v2579 = vld [vmem:[%s2568 + $0x50] sm:$0xff]
      %v2580 = vld [vmem:[%s2568 + $0x58] sm:$0xff]
      %v2581 = vld [vmem:[%s2568 + $0x60] sm:$0xff]
      %v2582 = vld [vmem:[%s2568 + $0x68] sm:$0xff]
      %v2583 = vld [vmem:[%s2568 + $0x70] sm:$0xff]
      %v2584 = vld [vmem:[%s2568 + $0x78] sm:$0xff]
      %v2585 = vld [vmem:[%s2568 + $0x80] sm:$0xff]
      %v2586 = vld [vmem:[%s2568 + $0x88] sm:$0xff]
      %v2587 = vld [vmem:[%s2568 + $0x90] sm:$0xff]
      %v2588 = vld [vmem:[%s2568 + $0x98] sm:$0xff]
      %v2589 = vpack.c.bf16 %v2493, %v2490
      %v2590 = vpack.c.bf16 %v2501, %v2498
      %v2591 = vpack.c.bf16 %v2509, %v2506
      %v2592 = vpack.c.bf16 %v2517, %v2514
      %v2593 = vpack.c.bf16 %v2525, %v2522
      %v2594 = vpack.c.bf16 %v2533, %v2530
      %v2595 = vpack.c.bf16 %v2541, %v2538
      %v2596 = vpack.c.bf16 %v2549, %v2546
      %v2597 = vpack.c.bf16 %v2557, %v2554
      %v2598 = vpack.c.bf16 %v2565, %v2562
      %v2619 = vunpack.c.l.b16 %v2569
      %v2620 = vunpack.c.h.b16 %v2569
      %v2621 = vunpack.c.l.b16 %v2570
      %v2622 = vunpack.c.h.b16 %v2570
      %v2623 = vunpack.c.l.b16 %v2571
      %v2624 = vunpack.c.h.b16 %v2571
      %v2625 = vunpack.c.l.b16 %v2572
      %v2626 = vunpack.c.h.b16 %v2572
      %v2627 = vunpack.c.l.b16 %v2573
      %v2628 = vunpack.c.h.b16 %v2573
      %v2629 = vunpack.c.l.b16 %v2574
      %v2630 = vunpack.c.h.b16 %v2574
      %v2631 = vunpack.c.l.b16 %v2575
      %v2632 = vunpack.c.h.b16 %v2575
      %v2633 = vunpack.c.l.b16 %v2576
      %v2634 = vunpack.c.h.b16 %v2576
      %v2635 = vunpack.c.l.b16 %v2577
      %v2636 = vunpack.c.h.b16 %v2577
      %v2637 = vunpack.c.l.b16 %v2578
      %v2638 = vunpack.c.h.b16 %v2578
      %v2639 = vunpack.c.l.b16 %v2579
      %v2640 = vunpack.c.h.b16 %v2579
      %v2641 = vunpack.c.l.b16 %v2580
      %v2642 = vunpack.c.h.b16 %v2580
      %v2643 = vunpack.c.l.b16 %v2581
      %v2644 = vunpack.c.h.b16 %v2581
      %v2645 = vunpack.c.l.b16 %v2582
      %v2646 = vunpack.c.h.b16 %v2582
      %v2647 = vunpack.c.l.b16 %v2583
      %v2648 = vunpack.c.h.b16 %v2583
      %v2649 = vunpack.c.l.b16 %v2584
      %v2650 = vunpack.c.h.b16 %v2584
      %v2651 = vunpack.c.l.b16 %v2585
      %v2652 = vunpack.c.h.b16 %v2585
      %v2653 = vunpack.c.l.b16 %v2586
      %v2654 = vunpack.c.h.b16 %v2586
      %v2655 = vunpack.c.l.b16 %v2587
      %v2656 = vunpack.c.h.b16 %v2587
      %v2657 = vunpack.c.l.b16 %v2588
      %v2658 = vunpack.c.h.b16 %v2588
      %v2659 = vpack.c.b16 %v2621, %v2619
      %v2660 = vpack.c.b16 %v2622, %v2620
      %v2661 = vpack.c.b16 %v2625, %v2623
      %v2662 = vpack.c.b16 %v2626, %v2624
      %v2663 = vpack.c.b16 %v2629, %v2627
      %v2664 = vpack.c.b16 %v2630, %v2628
      %v2665 = vpack.c.b16 %v2633, %v2631
      %v2666 = vpack.c.b16 %v2634, %v2632
      %v2667 = vpack.c.b16 %v2637, %v2635
      %v2668 = vpack.c.b16 %v2638, %v2636
      %v2669 = vpack.c.b16 %v2641, %v2639
      %v2670 = vpack.c.b16 %v2642, %v2640
      %v2671 = vpack.c.b16 %v2645, %v2643
      %v2672 = vpack.c.b16 %v2646, %v2644
      %v2673 = vpack.c.b16 %v2649, %v2647
      %v2674 = vpack.c.b16 %v2650, %v2648
      %v2675 = vpack.c.b16 %v2653, %v2651
      %v2676 = vpack.c.b16 %v2654, %v2652
      %v2677 = vpack.c.b16 %v2657, %v2655
      %v2678 = vpack.c.b16 %v2658, %v2656
      %v2690 = vsel %vm2069, %v2660, 0
      %v2693 = vsel %vm2069, %v2662, 0
      %v2696 = vsel %vm2069, %v2664, 0
      %v2699 = vsel %vm2069, %v2666, 0
      %v2702 = vsel %vm2069, %v2668, 0
      %v2705 = vsel %vm2069, %v2670, 0
      %v2708 = vsel %vm2069, %v2672, 0
      %v2711 = vsel %vm2069, %v2674, 0
      %v2714 = vsel %vm2069, %v2676, 0
      %v2717 = vsel %vm2069, %v2678, 0
      %2719 = vmatprep.subr.bf16.mxu0 0
      %2720 = vmatpush1.bf16.msra.mxu0 %v2596
      %2721 = vmatprep.subr.bf16.mxu0 0
      %2722 = vmatpush1.bf16.msra.mxu0 %v2595
      %2723 = vmatprep.subr.bf16.mxu0 0
      %2724 = vmatpush1.bf16.msra.mxu0 %v2594
      %2725 = vmatprep.subr.bf16.mxu0 0
      %2726 = vmatpush1.bf16.msra.mxu0 %v2593
      %2727 = vmatprep.subr.bf16.mxu0 0
      %2728 = vmatpush1.bf16.msra.mxu0 %v2592
      %2729 = vmatprep.subr.bf16.mxu0 0
      %2730 = vmatpush1.bf16.msra.mxu0 %v2591
      %2731 = vmatprep.subr.bf16.mxu0 0
      %2732 = vmatpush1.bf16.msra.mxu0 %v2590
      %2733 = vmatprep.subr.bf16.mxu0 0
      %2734 = vmatpush1.bf16.msra.mxu0 %v2589
      %2735 = vmatprep.subr.bf16.mxu0 0
      %2736 = vmatpush2.bf16.msra.mxu0 0
      %2737 = vmatprep.subr.bf16.mxu0 0
      %2738 = vmatpush2.bf16.msra.mxu0 0
      %2739 = vmatprep.subr.bf16.mxu0 0
      %2740 = vmatpush2.bf16.msra.mxu0 0
      %2741 = vmatprep.subr.bf16.mxu0 0
      %2742 = vmatpush2.bf16.msra.mxu0 0
      %2743 = vmatprep.subr.bf16.mxu0 0
      %2744 = vmatpush2.bf16.msra.mxu0 0
      %2745 = vmatprep.subr.bf16.mxu0 0
      %2746 = vmatpush2.bf16.msra.mxu0 0
      %2747 = vmatprep.subr.bf16.mxu0 0
      %2748 = vmatpush2.bf16.msra.mxu0 %v2598
      %2749 = vmatprep.subr.bf16.mxu0 0
      %2750 = vmatpush2.bf16.msra.mxu0 %v2597
      %2751 = vmatprep.mubr.bf16.mxu0 %v2690
      %2752 = vmatmul.mubr.bf16.gmra.mxu0 %v2659
      %v2753 = vpop.f32.mrf.mxu0
      %v2754 = vadd.f32 0.0, %v2753
      %v2755 = vpop.f32.mrf.mxu0
      %v2756 = vpop.f32.mrf.mxu0
      %v2757 = vadd.f32 0.0, %v2756
      %v2758 = vpop.f32.mrf.mxu0
      %2759 = vmatprep.mubr.bf16.mxu0 %v2693
      %2760 = vmatmul.mubr.bf16.gmra.mxu0 %v2661
      %v2761 = vpop.f32.mrf.mxu0
      %v2762 = vadd.f32 0.0, %v2761
      %v2763 = vpop.f32.mrf.mxu0
      %v2764 = vpop.f32.mrf.mxu0
      %v2765 = vadd.f32 0.0, %v2764
      %v2766 = vpop.f32.mrf.mxu0
      %2767 = vmatprep.mubr.bf16.mxu0 %v2696
      %2768 = vmatmul.mubr.bf16.gmra.mxu0 %v2663
      %v2769 = vpop.f32.mrf.mxu0
      %v2770 = vadd.f32 0.0, %v2769
      %v2771 = vpop.f32.mrf.mxu0
      %v2772 = vpop.f32.mrf.mxu0
      %v2773 = vadd.f32 0.0, %v2772
      %v2774 = vpop.f32.mrf.mxu0
      %2775 = vmatprep.mubr.bf16.mxu0 %v2699
      %2776 = vmatmul.mubr.bf16.gmra.mxu0 %v2665
      %v2777 = vpop.f32.mrf.mxu0
      %v2778 = vadd.f32 0.0, %v2777
      %v2779 = vpop.f32.mrf.mxu0
      %v2780 = vpop.f32.mrf.mxu0
      %v2781 = vadd.f32 0.0, %v2780
      %v2782 = vpop.f32.mrf.mxu0
      %2783 = vmatprep.mubr.bf16.mxu0 %v2702
      %2784 = vmatmul.mubr.bf16.gmra.mxu0 %v2667
      %v2785 = vpop.f32.mrf.mxu0
      %v2786 = vadd.f32 0.0, %v2785
      %v2787 = vpop.f32.mrf.mxu0
      %v2788 = vpop.f32.mrf.mxu0
      %v2789 = vadd.f32 0.0, %v2788
      %v2790 = vpop.f32.mrf.mxu0
      %2791 = vmatprep.mubr.bf16.mxu0 %v2705
      %2792 = vmatmul.mubr.bf16.gmra.mxu0 %v2669
      %v2793 = vpop.f32.mrf.mxu0
      %v2794 = vadd.f32 0.0, %v2793
      %v2795 = vpop.f32.mrf.mxu0
      %v2796 = vpop.f32.mrf.mxu0
      %v2797 = vadd.f32 0.0, %v2796
      %v2798 = vpop.f32.mrf.mxu0
      %2799 = vmatprep.mubr.bf16.mxu0 %v2708
      %2800 = vmatmul.mubr.bf16.gmra.mxu0 %v2671
      %v2801 = vpop.f32.mrf.mxu0
      %v2802 = vadd.f32 0.0, %v2801
      %v2803 = vpop.f32.mrf.mxu0
      %v2804 = vpop.f32.mrf.mxu0
      %v2805 = vadd.f32 0.0, %v2804
      %v2806 = vpop.f32.mrf.mxu0
      %2807 = vmatprep.mubr.bf16.mxu0 %v2711
      %2808 = vmatmul.mubr.bf16.gmra.mxu0 %v2673
      %v2809 = vpop.f32.mrf.mxu0
      %v2810 = vadd.f32 0.0, %v2809
      %v2811 = vpop.f32.mrf.mxu0
      %v2812 = vpop.f32.mrf.mxu0
      %v2813 = vadd.f32 0.0, %v2812
      %v2814 = vpop.f32.mrf.mxu0
      %2815 = vmatprep.mubr.bf16.mxu0 %v2714
      %2816 = vmatmul.mubr.bf16.gmra.mxu0 %v2675
      %v2817 = vpop.f32.mrf.mxu0
      %v2818 = vadd.f32 0.0, %v2817
      %v2819 = vpop.f32.mrf.mxu0
      %v2820 = vpop.f32.mrf.mxu0
      %v2821 = vadd.f32 0.0, %v2820
      %v2822 = vpop.f32.mrf.mxu0
      %2823 = vmatprep.mubr.bf16.mxu0 %v2717
      %2824 = vmatmul.mubr.bf16.gmra.mxu0 %v2677
      %v2825 = vpop.f32.mrf.mxu0
      %v2826 = vadd.f32 0.0, %v2825
      %v2827 = vpop.f32.mrf.mxu0
      %v2828 = vpop.f32.mrf.mxu0
      %v2829 = vadd.f32 0.0, %v2828
      %v2830 = vpop.f32.mrf.mxu0
      %2831 = vdwg.mxu0
      %v2832 = vadd.f32 %v2368, %v2754
      %v2833 = vadd.f32 %v2371, %v2757
      %v2834 = vadd.f32 %v2376, %v2762
      %v2835 = vadd.f32 %v2379, %v2765
      %v2836 = vadd.f32 %v2384, %v2770
      %v2837 = vadd.f32 %v2387, %v2773
      %v2838 = vadd.f32 %v2392, %v2778
      %v2839 = vadd.f32 %v2395, %v2781
      %v2840 = vadd.f32 %v2400, %v2786
      %v2841 = vadd.f32 %v2403, %v2789
      %v2842 = vadd.f32 %v2408, %v2794
      %v2843 = vadd.f32 %v2411, %v2797
      %v2844 = vadd.f32 %v2416, %v2802
      %v2845 = vadd.f32 %v2419, %v2805
      %v2846 = vadd.f32 %v2424, %v2810
      %v2847 = vadd.f32 %v2427, %v2813
      %v2848 = vadd.f32 %v2432, %v2818
      %v2849 = vadd.f32 %v2435, %v2821
      %v2850 = vadd.f32 %v2440, %v2826
      %v2851 = vadd.f32 %v2443, %v2829
      %v2852 = vld [vmem:[%s7] sm:$0x1]
      %v2854 = vlaneseq
      %v2855 = vshrl.u32 %v2854, 7
      %v2856 = vsub.s32 0, %v2855
      %v2857 = vrot.slane %v2852, %v2856
      %v2859 = vadd.f32 %v2832, %v2857
      %v2860 = vadd.f32 %v2833, %v2857
      %v2861 = vadd.f32 %v2834, %v2857
      %v2862 = vadd.f32 %v2835, %v2857
      %v2863 = vadd.f32 %v2836, %v2857
      %v2864 = vadd.f32 %v2837, %v2857
      %v2865 = vadd.f32 %v2838, %v2857
      %v2866 = vadd.f32 %v2839, %v2857
      %v2867 = vadd.f32 %v2840, %v2857
      %v2868 = vadd.f32 %v2841, %v2857
      %v2869 = vadd.f32 %v2842, %v2857
      %v2870 = vadd.f32 %v2843, %v2857
      %v2871 = vadd.f32 %v2844, %v2857
      %v2872 = vadd.f32 %v2845, %v2857
      %v2873 = vadd.f32 %v2846, %v2857
      %v2874 = vadd.f32 %v2847, %v2857
      %v2875 = vadd.f32 %v2848, %v2857
      %v2876 = vadd.f32 %v2849, %v2857
      %v2877 = vadd.f32 %v2850, %v2857
      %v2878 = vadd.f32 %v2851, %v2857
      %v2879 = vadd.f32 %v2859, %v1615
      %v2880 = vadd.f32 %v2860, %v1616
      %v2881 = vadd.f32 %v2861, %v1617
      %v2882 = vadd.f32 %v2862, %v1618
      %v2883 = vadd.f32 %v2863, %v1619
      %v2884 = vadd.f32 %v2864, %v1620
      %v2885 = vadd.f32 %v2865, %v1621
      %v2886 = vadd.f32 %v2866, %v1622
      %v2887 = vadd.f32 %v2867, %v1623
      %v2888 = vadd.f32 %v2868, %v1624
      %v2889 = vadd.f32 %v2869, %v1625
      %v2890 = vadd.f32 %v2870, %v1626
      %v2891 = vadd.f32 %v2871, %v1627
      %v2892 = vadd.f32 %v2872, %v1628
      %v2893 = vadd.f32 %v2873, %v1629
      %v2894 = vadd.f32 %v2874, %v1630
      %v2895 = vadd.f32 %v2875, %v1631
      %v2896 = vadd.f32 %v2876, %v1632
      %v2897 = vadd.f32 %v2877, %v1633
      %v2898 = vadd.f32 %v2878, %v1634
      %v2899 = vmax.f32 %v2879, 0.0
      %v2900 = vmax.f32 %v2880, 0.0
      %v2901 = vmax.f32 %v2881, 0.0
      %v2902 = vmax.f32 %v2882, 0.0
      %v2903 = vmax.f32 %v2883, 0.0
      %v2904 = vmax.f32 %v2884, 0.0
      %v2905 = vmax.f32 %v2885, 0.0
      %v2906 = vmax.f32 %v2886, 0.0
      %v2907 = vmax.f32 %v2887, 0.0
      %v2908 = vmax.f32 %v2888, 0.0
      %v2909 = vmax.f32 %v2889, 0.0
      %v2910 = vmax.f32 %v2890, 0.0
      %v2911 = vmax.f32 %v2891, 0.0
      %v2912 = vmax.f32 %v2892, 0.0
      %v2913 = vmax.f32 %v2893, 0.0
      %v2914 = vmax.f32 %v2894, 0.0
      %v2915 = vmax.f32 %v2895, 0.0
      %v2916 = vmax.f32 %v2896, 0.0
      %v2917 = vmax.f32 %v2897, 0.0
      %v2918 = vmax.f32 %v2898, 0.0
      %v2919 = vsel %vm606, %v2903, 0.0
      %v2920 = vsel %vm606, %v2904, 0.0
      %v2921 = vsel %vm606, %v2905, 0.0
      %v2922 = vsel %vm606, %v2906, 0.0
      %v2923 = vsel %vm606, %v2907, 0.0
      %v2924 = vsel %vm606, %v2908, 0.0
      %v2925 = vsel %vm606, %v2909, 0.0
      %v2926 = vsel %vm606, %v2910, 0.0
      %v2927 = vsel %vm606, %v2911, 0.0
      %v2928 = vsel %vm606, %v2912, 0.0
      %v2929 = vsel %vm606, %v2913, 0.0
      %v2930 = vsel %vm606, %v2914, 0.0
      %v2931 = vsel %vm606, %v2915, 0.0
      %v2932 = vsel %vm606, %v2916, 0.0
      %v2933 = vsel %vm606, %v2917, 0.0
      %v2934 = vsel %vm606, %v2918, 0.0
      %v2935 = vld [vmem:[%s9] sm:$0x1]
      %v2937 = vlaneseq
      %v2938 = vshrl.u32 %v2937, 7
      %v2939 = vsub.s32 0, %v2938
      %v2940 = vrot.slane %v2935, %v2939
      %v2942 = vadd.f32 %v2919, %v2940
      %v2943 = vadd.f32 %v2920, %v2940
      %v2944 = vadd.f32 %v2921, %v2940
      %v2945 = vadd.f32 %v2922, %v2940
      %v2946 = vadd.f32 %v2923, %v2940
      %v2947 = vadd.f32 %v2924, %v2940
      %v2948 = vadd.f32 %v2925, %v2940
      %v2949 = vadd.f32 %v2926, %v2940
      %v2950 = vadd.f32 %v2927, %v2940
      %v2951 = vadd.f32 %v2928, %v2940
      %v2952 = vadd.f32 %v2929, %v2940
      %v2953 = vadd.f32 %v2930, %v2940
      %v2954 = vadd.f32 %v2931, %v2940
      %v2955 = vadd.f32 %v2932, %v2940
      %v2956 = vadd.f32 %v2933, %v2940
      %v2957 = vadd.f32 %v2934, %v2940
      %v2958 = vpack.c.bf16 %v2900, %v2899
      %v2959 = vpack.c.bf16 %v2902, %v2901
      %v2960 = vpack.c.bf16 %v2904, %v2903
      %v2961 = vpack.c.bf16 %v2906, %v2905
      %v2962 = vpack.c.bf16 %v2908, %v2907
      %v2963 = vpack.c.bf16 %v2910, %v2909
      %v2964 = vpack.c.bf16 %v2912, %v2911
      %v2965 = vpack.c.bf16 %v2914, %v2913
      %v2966 = vpack.c.bf16 %v2916, %v2915
      %v2967 = vpack.c.bf16 %v2918, %v2917
      %v2968 = vld [vmem:[%s8] sm:$0xf]
      %v2969 = vld [vmem:[%s8 + $0x4] sm:$0xf]
      %v2972 = vunpack.c.l.b16 %v2968
      %v2973 = vunpack.c.l.b16 %v2969
      %v2974 = vpack.c.b16 %v2973, %v2972
      %v2977 = vsel %vm606, %v2958, 0
      %v2980 = vsel %vm606, %v2959, 0
      %v2983 = vsel %vm606, %v2960, 0
      %v2986 = vsel %vm606, %v2961, 0
      %v2989 = vsel %vm606, %v2962, 0
      %v2992 = vsel %vm606, %v2963, 0
      %v2995 = vsel %vm606, %v2964, 0
      %v2998 = vsel %vm606, %v2965, 0
      %3000 = vmatprep.subr.bf16.mxu0 0
      %3001 = vmatpush1.bf16.msra.mxu0 0
      %3002 = vmatprep.subr.bf16.mxu0 0
      %3003 = vmatpush1.bf16.msra.mxu0 0
      %3004 = vmatprep.subr.bf16.mxu0 0
      %3005 = vmatpush1.bf16.msra.mxu0 0
      %3006 = vmatprep.subr.bf16.mxu0 0
      %3007 = vmatpush1.bf16.msra.mxu0 0
      %3008 = vmatprep.subr.bf16.mxu0 0
      %3009 = vmatpush1.bf16.msra.mxu0 0
      %3010 = vmatprep.subr.bf16.mxu0 0
      %3011 = vmatpush1.bf16.msra.mxu0 0
      %3012 = vmatprep.subr.bf16.mxu0 0
      %3013 = vmatpush1.bf16.msra.mxu0 0
      %3014 = vmatprep.subr.bf16.mxu0 0
      %3015 = vmatpush1.bf16.msra.mxu0 %v2974
      %3016 = vmatprep.subr.bf16.mxu0 0
      %3017 = vmatpush2.bf16.msra.mxu0 0
      %3018 = vmatprep.subr.bf16.mxu0 0
      %3019 = vmatpush2.bf16.msra.mxu0 0
      %3020 = vmatprep.subr.bf16.mxu0 0
      %3021 = vmatpush2.bf16.msra.mxu0 0
      %3022 = vmatprep.subr.bf16.mxu0 0
      %3023 = vmatpush2.bf16.msra.mxu0 0
      %3024 = vmatprep.subr.bf16.mxu0 0
      %3025 = vmatpush2.bf16.msra.mxu0 0
      %3026 = vmatprep.subr.bf16.mxu0 0
      %3027 = vmatpush2.bf16.msra.mxu0 0
      %3028 = vmatprep.subr.bf16.mxu0 0
      %3029 = vmatpush2.bf16.msra.mxu0 0
      %3030 = vmatprep.subr.bf16.mxu0 0
      %3031 = vmatpush2.bf16.msra.mxu0 0
      %3032 = vmatprep.mubr.bf16.mxu0 0
      %3033 = vmatmul.mubr.bf16.gmra.mxu0 %v2977
      %v3034 = vpop.f32.mrf.mxu0
      %v3035 = vadd.f32 0.0, %v3034
      %v3036 = vpop.f32.mrf.mxu0
      %v3037 = vpop.f32.mrf.mxu0
      %v3038 = vadd.f32 0.0, %v3037
      %v3039 = vpop.f32.mrf.mxu0
      %3040 = vmatprep.mubr.bf16.mxu0 0
      %3041 = vmatmul.mubr.bf16.gmra.mxu0 %v2980
      %v3042 = vpop.f32.mrf.mxu0
      %v3043 = vadd.f32 0.0, %v3042
      %v3044 = vpop.f32.mrf.mxu0
      %v3045 = vpop.f32.mrf.mxu0
      %v3046 = vadd.f32 0.0, %v3045
      %v3047 = vpop.f32.mrf.mxu0
      %3048 = vmatprep.mubr.bf16.mxu0 0
      %3049 = vmatmul.mubr.bf16.gmra.mxu0 %v2983
      %v3050 = vpop.f32.mrf.mxu0
      %v3051 = vadd.f32 0.0, %v3050
      %v3052 = vpop.f32.mrf.mxu0
      %v3053 = vpop.f32.mrf.mxu0
      %v3054 = vadd.f32 0.0, %v3053
      %v3055 = vpop.f32.mrf.mxu0
      %3056 = vmatprep.mubr.bf16.mxu0 0
      %3057 = vmatmul.mubr.bf16.gmra.mxu0 %v2986
      %v3058 = vpop.f32.mrf.mxu0
      %v3059 = vadd.f32 0.0, %v3058
      %v3060 = vpop.f32.mrf.mxu0
      %v3061 = vpop.f32.mrf.mxu0
      %v3062 = vadd.f32 0.0, %v3061
      %v3063 = vpop.f32.mrf.mxu0
      %3064 = vmatprep.mubr.bf16.mxu0 0
      %3065 = vmatmul.mubr.bf16.gmra.mxu0 %v2989
      %v3066 = vpop.f32.mrf.mxu0
      %v3067 = vadd.f32 0.0, %v3066
      %v3068 = vpop.f32.mrf.mxu0
      %v3069 = vpop.f32.mrf.mxu0
      %v3070 = vadd.f32 0.0, %v3069
      %v3071 = vpop.f32.mrf.mxu0
      %3072 = vmatprep.mubr.bf16.mxu0 0
      %3073 = vmatmul.mubr.bf16.gmra.mxu0 %v2992
      %v3074 = vpop.f32.mrf.mxu0
      %v3075 = vadd.f32 0.0, %v3074
      %v3076 = vpop.f32.mrf.mxu0
      %v3077 = vpop.f32.mrf.mxu0
      %v3078 = vadd.f32 0.0, %v3077
      %v3079 = vpop.f32.mrf.mxu0
      %3080 = vmatprep.mubr.bf16.mxu0 0
      %3081 = vmatmul.mubr.bf16.gmra.mxu0 %v2995
      %v3082 = vpop.f32.mrf.mxu0
      %v3083 = vadd.f32 0.0, %v3082
      %v3084 = vpop.f32.mrf.mxu0
      %v3085 = vpop.f32.mrf.mxu0
      %v3086 = vadd.f32 0.0, %v3085
      %v3087 = vpop.f32.mrf.mxu0
      %3088 = vmatprep.mubr.bf16.mxu0 0
      %3089 = vmatmul.mubr.bf16.gmra.mxu0 %v2998
      %v3090 = vpop.f32.mrf.mxu0
      %v3091 = vadd.f32 0.0, %v3090
      %v3092 = vpop.f32.mrf.mxu0
      %v3093 = vpop.f32.mrf.mxu0
      %v3094 = vadd.f32 0.0, %v3093
      %v3095 = vpop.f32.mrf.mxu0
      %3096 = vdwg.mxu0
      %v3097 = vadd.f32 %v2942, %v3035
      %v3098 = vadd.f32 %v2943, %v3038
      %v3099 = vadd.f32 %v2944, %v3043
      %v3100 = vadd.f32 %v2945, %v3046
      %v3101 = vadd.f32 %v2946, %v3051
      %v3102 = vadd.f32 %v2947, %v3054
      %v3103 = vadd.f32 %v2948, %v3059
      %v3104 = vadd.f32 %v2949, %v3062
      %v3105 = vadd.f32 %v2950, %v3067
      %v3106 = vadd.f32 %v2951, %v3070
      %v3107 = vadd.f32 %v2952, %v3075
      %v3108 = vadd.f32 %v2953, %v3078
      %v3109 = vadd.f32 %v2954, %v3083
      %v3110 = vadd.f32 %v2955, %v3086
      %v3111 = vadd.f32 %v2956, %v3091
      %v3112 = vadd.f32 %v2957, %v3094
      %s3113 = scalar_lea.vmem %s8, 8
      %v3114 = vld [vmem:[%s3113] sm:$0xf]
      %v3115 = vld [vmem:[%s3113 + $0x4] sm:$0xf]
      %v3118 = vunpack.c.l.b16 %v3114
      %v3119 = vunpack.c.l.b16 %v3115
      %v3120 = vpack.c.b16 %v3119, %v3118
      %v3123 = vsel %vm606, %v2966, 0
      %3125 = vmatprep.subr.bf16.mxu0 0
      %3126 = vmatpush1.bf16.msra.mxu0 0
      %3127 = vmatprep.subr.bf16.mxu0 0
      %3128 = vmatpush1.bf16.msra.mxu0 0
      %3129 = vmatprep.subr.bf16.mxu0 0
      %3130 = vmatpush1.bf16.msra.mxu0 0
      %3131 = vmatprep.subr.bf16.mxu0 0
      %3132 = vmatpush1.bf16.msra.mxu0 0
      %3133 = vmatprep.subr.bf16.mxu0 0
      %3134 = vmatpush1.bf16.msra.mxu0 0
      %3135 = vmatprep.subr.bf16.mxu0 0
      %3136 = vmatpush1.bf16.msra.mxu0 0
      %3137 = vmatprep.subr.bf16.mxu0 0
      %3138 = vmatpush1.bf16.msra.mxu0 0
      %3139 = vmatprep.subr.bf16.mxu0 0
      %3140 = vmatpush1.bf16.msra.mxu0 %v3120
      %3141 = vmatprep.subr.bf16.mxu0 0
      %3142 = vmatpush2.bf16.msra.mxu0 0
      %3143 = vmatprep.subr.bf16.mxu0 0
      %3144 = vmatpush2.bf16.msra.mxu0 0
      %3145 = vmatprep.subr.bf16.mxu0 0
      %3146 = vmatpush2.bf16.msra.mxu0 0
      %3147 = vmatprep.subr.bf16.mxu0 0
      %3148 = vmatpush2.bf16.msra.mxu0 0
      %3149 = vmatprep.subr.bf16.mxu0 0
      %3150 = vmatpush2.bf16.msra.mxu0 0
      %3151 = vmatprep.subr.bf16.mxu0 0
      %3152 = vmatpush2.bf16.msra.mxu0 0
      %3153 = vmatprep.subr.bf16.mxu0 0
      %3154 = vmatpush2.bf16.msra.mxu0 0
      %3155 = vmatprep.subr.bf16.mxu0 0
      %3156 = vmatpush2.bf16.msra.mxu0 0
      %3157 = vmatprep.mubr.bf16.mxu0 0
      %3158 = vmatmul.mubr.bf16.gmra.mxu0 %v2980
      %v3159 = vpop.f32.mrf.mxu0
      %v3160 = vadd.f32 0.0, %v3159
      %v3161 = vpop.f32.mrf.mxu0
      %v3162 = vpop.f32.mrf.mxu0
      %v3163 = vadd.f32 0.0, %v3162
      %v3164 = vpop.f32.mrf.mxu0
      %3165 = vmatprep.mubr.bf16.mxu0 0
      %3166 = vmatmul.mubr.bf16.gmra.mxu0 %v2983
      %v3167 = vpop.f32.mrf.mxu0
      %v3168 = vadd.f32 0.0, %v3167
      %v3169 = vpop.f32.mrf.mxu0
      %v3170 = vpop.f32.mrf.mxu0
      %v3171 = vadd.f32 0.0, %v3170
      %v3172 = vpop.f32.mrf.mxu0
      %3173 = vmatprep.mubr.bf16.mxu0 0
      %3174 = vmatmul.mubr.bf16.gmra.mxu0 %v2986
      %v3175 = vpop.f32.mrf.mxu0
      %v3176 = vadd.f32 0.0, %v3175
      %v3177 = vpop.f32.mrf.mxu0
      %v3178 = vpop.f32.mrf.mxu0
      %v3179 = vadd.f32 0.0, %v3178
      %v3180 = vpop.f32.mrf.mxu0
      %3181 = vmatprep.mubr.bf16.mxu0 0
      %3182 = vmatmul.mubr.bf16.gmra.mxu0 %v2989
      %v3183 = vpop.f32.mrf.mxu0
      %v3184 = vadd.f32 0.0, %v3183
      %v3185 = vpop.f32.mrf.mxu0
      %v3186 = vpop.f32.mrf.mxu0
      %v3187 = vadd.f32 0.0, %v3186
      %v3188 = vpop.f32.mrf.mxu0
      %3189 = vmatprep.mubr.bf16.mxu0 0
      %3190 = vmatmul.mubr.bf16.gmra.mxu0 %v2992
      %v3191 = vpop.f32.mrf.mxu0
      %v3192 = vadd.f32 0.0, %v3191
      %v3193 = vpop.f32.mrf.mxu0
      %v3194 = vpop.f32.mrf.mxu0
      %v3195 = vadd.f32 0.0, %v3194
      %v3196 = vpop.f32.mrf.mxu0
      %3197 = vmatprep.mubr.bf16.mxu0 0
      %3198 = vmatmul.mubr.bf16.gmra.mxu0 %v2995
      %v3199 = vpop.f32.mrf.mxu0
      %v3200 = vadd.f32 0.0, %v3199
      %v3201 = vpop.f32.mrf.mxu0
      %v3202 = vpop.f32.mrf.mxu0
      %v3203 = vadd.f32 0.0, %v3202
      %v3204 = vpop.f32.mrf.mxu0
      %3205 = vmatprep.mubr.bf16.mxu0 0
      %3206 = vmatmul.mubr.bf16.gmra.mxu0 %v2998
      %v3207 = vpop.f32.mrf.mxu0
      %v3208 = vadd.f32 0.0, %v3207
      %v3209 = vpop.f32.mrf.mxu0
      %v3210 = vpop.f32.mrf.mxu0
      %v3211 = vadd.f32 0.0, %v3210
      %v3212 = vpop.f32.mrf.mxu0
      %3213 = vmatprep.mubr.bf16.mxu0 0
      %3214 = vmatmul.mubr.bf16.gmra.mxu0 %v3123
      %v3215 = vpop.f32.mrf.mxu0
      %v3216 = vadd.f32 0.0, %v3215
      %v3217 = vpop.f32.mrf.mxu0
      %v3218 = vpop.f32.mrf.mxu0
      %v3219 = vadd.f32 0.0, %v3218
      %v3220 = vpop.f32.mrf.mxu0
      %3221 = vdwg.mxu0
      %v3222 = vadd.f32 %v3097, %v3160
      %v3223 = vadd.f32 %v3098, %v3163
      %v3224 = vadd.f32 %v3099, %v3168
      %v3225 = vadd.f32 %v3100, %v3171
      %v3226 = vadd.f32 %v3101, %v3176
      %v3227 = vadd.f32 %v3102, %v3179
      %v3228 = vadd.f32 %v3103, %v3184
      %v3229 = vadd.f32 %v3104, %v3187
      %v3230 = vadd.f32 %v3105, %v3192
      %v3231 = vadd.f32 %v3106, %v3195
      %v3232 = vadd.f32 %v3107, %v3200
      %v3233 = vadd.f32 %v3108, %v3203
      %v3234 = vadd.f32 %v3109, %v3208
      %v3235 = vadd.f32 %v3110, %v3211
      %v3236 = vadd.f32 %v3111, %v3216
      %v3237 = vadd.f32 %v3112, %v3219
      %s3238 = scalar_lea.vmem %s8, 16
      %v3239 = vld [vmem:[%s3238] sm:$0xf]
      %v3240 = vld [vmem:[%s3238 + $0x4] sm:$0xf]
      %v3243 = vunpack.c.l.b16 %v3239
      %v3244 = vunpack.c.l.b16 %v3240
      %v3245 = vpack.c.b16 %v3244, %v3243
      %v3248 = vsel %vm606, %v2967, 0
      %3250 = vmatprep.subr.bf16.mxu0 0
      %3251 = vmatpush1.bf16.msra.mxu0 0
      %3252 = vmatprep.subr.bf16.mxu0 0
      %3253 = vmatpush1.bf16.msra.mxu0 0
      %3254 = vmatprep.subr.bf16.mxu0 0
      %3255 = vmatpush1.bf16.msra.mxu0 0
      %3256 = vmatprep.subr.bf16.mxu0 0
      %3257 = vmatpush1.bf16.msra.mxu0 0
      %3258 = vmatprep.subr.bf16.mxu0 0
      %3259 = vmatpush1.bf16.msra.mxu0 0
      %3260 = vmatprep.subr.bf16.mxu0 0
      %3261 = vmatpush1.bf16.msra.mxu0 0
      %3262 = vmatprep.subr.bf16.mxu0 0
      %3263 = vmatpush1.bf16.msra.mxu0 0
      %3264 = vmatprep.subr.bf16.mxu0 0
      %3265 = vmatpush1.bf16.msra.mxu0 %v3245
      %3266 = vmatprep.subr.bf16.mxu0 0
      %3267 = vmatpush2.bf16.msra.mxu0 0
      %3268 = vmatprep.subr.bf16.mxu0 0
      %3269 = vmatpush2.bf16.msra.mxu0 0
      %3270 = vmatprep.subr.bf16.mxu0 0
      %3271 = vmatpush2.bf16.msra.mxu0 0
      %3272 = vmatprep.subr.bf16.mxu0 0
      %3273 = vmatpush2.bf16.msra.mxu0 0
      %3274 = vmatprep.subr.bf16.mxu0 0
      %3275 = vmatpush2.bf16.msra.mxu0 0
      %3276 = vmatprep.subr.bf16.mxu0 0
      %3277 = vmatpush2.bf16.msra.mxu0 0
      %3278 = vmatprep.subr.bf16.mxu0 0
      %3279 = vmatpush2.bf16.msra.mxu0 0
      %3280 = vmatprep.subr.bf16.mxu0 0
      %3281 = vmatpush2.bf16.msra.mxu0 0
      %3282 = vmatprep.mubr.bf16.mxu0 0
      %3283 = vmatmul.mubr.bf16.gmra.mxu0 %v2983
      %v3284 = vpop.f32.mrf.mxu0
      %v3285 = vadd.f32 0.0, %v3284
      %v3286 = vpop.f32.mrf.mxu0
      %v3287 = vpop.f32.mrf.mxu0
      %v3288 = vadd.f32 0.0, %v3287
      %v3289 = vpop.f32.mrf.mxu0
      %3290 = vmatprep.mubr.bf16.mxu0 0
      %3291 = vmatmul.mubr.bf16.gmra.mxu0 %v2986
      %v3292 = vpop.f32.mrf.mxu0
      %v3293 = vadd.f32 0.0, %v3292
      %v3294 = vpop.f32.mrf.mxu0
      %v3295 = vpop.f32.mrf.mxu0
      %v3296 = vadd.f32 0.0, %v3295
      %v3297 = vpop.f32.mrf.mxu0
      %3298 = vmatprep.mubr.bf16.mxu0 0
      %3299 = vmatmul.mubr.bf16.gmra.mxu0 %v2989
      %v3300 = vpop.f32.mrf.mxu0
      %v3301 = vadd.f32 0.0, %v3300
      %v3302 = vpop.f32.mrf.mxu0
      %v3303 = vpop.f32.mrf.mxu0
      %v3304 = vadd.f32 0.0, %v3303
      %v3305 = vpop.f32.mrf.mxu0
      %3306 = vmatprep.mubr.bf16.mxu0 0
      %3307 = vmatmul.mubr.bf16.gmra.mxu0 %v2992
      %v3308 = vpop.f32.mrf.mxu0
      %v3309 = vadd.f32 0.0, %v3308
      %v3310 = vpop.f32.mrf.mxu0
      %v3311 = vpop.f32.mrf.mxu0
      %v3312 = vadd.f32 0.0, %v3311
      %v3313 = vpop.f32.mrf.mxu0
      %3314 = vmatprep.mubr.bf16.mxu0 0
      %3315 = vmatmul.mubr.bf16.gmra.mxu0 %v2995
      %v3316 = vpop.f32.mrf.mxu0
      %v3317 = vadd.f32 0.0, %v3316
      %v3318 = vpop.f32.mrf.mxu0
      %v3319 = vpop.f32.mrf.mxu0
      %v3320 = vadd.f32 0.0, %v3319
      %v3321 = vpop.f32.mrf.mxu0
      %3322 = vmatprep.mubr.bf16.mxu0 0
      %3323 = vmatmul.mubr.bf16.gmra.mxu0 %v2998
      %v3324 = vpop.f32.mrf.mxu0
      %v3325 = vadd.f32 0.0, %v3324
      %v3326 = vpop.f32.mrf.mxu0
      %v3327 = vpop.f32.mrf.mxu0
      %v3328 = vadd.f32 0.0, %v3327
      %v3329 = vpop.f32.mrf.mxu0
      %3330 = vmatprep.mubr.bf16.mxu0 0
      %3331 = vmatmul.mubr.bf16.gmra.mxu0 %v3123
      %v3332 = vpop.f32.mrf.mxu0
      %v3333 = vadd.f32 0.0, %v3332
      %v3334 = vpop.f32.mrf.mxu0
      %v3335 = vpop.f32.mrf.mxu0
      %v3336 = vadd.f32 0.0, %v3335
      %v3337 = vpop.f32.mrf.mxu0
      %3338 = vmatprep.mubr.bf16.mxu0 0
      %3339 = vmatmul.mubr.bf16.gmra.mxu0 %v3248
      %v3340 = vpop.f32.mrf.mxu0
      %v3341 = vadd.f32 0.0, %v3340
      %v3342 = vpop.f32.mrf.mxu0
      %v3343 = vpop.f32.mrf.mxu0
      %v3344 = vadd.f32 0.0, %v3343
      %v3345 = vpop.f32.mrf.mxu0
      %3346 = vdwg.mxu0
      %v3347 = vadd.f32 %v3222, %v3285
      %v3348 = vadd.f32 %v3223, %v3288
      %v3349 = vadd.f32 %v3224, %v3293
      %v3350 = vadd.f32 %v3225, %v3296
      %v3351 = vadd.f32 %v3226, %v3301
      %v3352 = vadd.f32 %v3227, %v3304
      %v3353 = vadd.f32 %v3228, %v3309
      %v3354 = vadd.f32 %v3229, %v3312
      %v3355 = vadd.f32 %v3230, %v3317
      %v3356 = vadd.f32 %v3231, %v3320
      %v3357 = vadd.f32 %v3232, %v3325
      %v3358 = vadd.f32 %v3233, %v3328
      %v3359 = vadd.f32 %v3234, %v3333
      %v3360 = vadd.f32 %v3235, %v3336
      %v3361 = vadd.f32 %v3236, %v3341
      %v3362 = vadd.f32 %v3237, %v3344
      %v3363 = vmax.f32 %v3347, 0.0
      %v3364 = vmax.f32 %v3348, 0.0
      %v3365 = vmax.f32 %v3349, 0.0
      %v3366 = vmax.f32 %v3350, 0.0
      %v3367 = vmax.f32 %v3351, 0.0
      %v3368 = vmax.f32 %v3352, 0.0
      %v3369 = vmax.f32 %v3353, 0.0
      %v3370 = vmax.f32 %v3354, 0.0
      %v3371 = vmax.f32 %v3355, 0.0
      %v3372 = vmax.f32 %v3356, 0.0
      %v3373 = vmax.f32 %v3357, 0.0
      %v3374 = vmax.f32 %v3358, 0.0
      %v3375 = vmax.f32 %v3359, 0.0
      %v3376 = vmax.f32 %v3360, 0.0
      %v3377 = vmax.f32 %v3361, 0.0
      %v3378 = vmax.f32 %v3362, 0.0
      %v3379 = vld [vmem:[%s10] sm:$0xff]
      %3380 = vmatprep.subr.mxu0 0.0
      %3381 = vmatpush1.msra.mxu0 %v3378
      %3382 = vmatprep.subr.mxu0 0.0
      %3383 = vmatpush1.msra.mxu0 %v3377
      %3384 = vmatprep.subr.mxu0 0.0
      %3385 = vmatpush1.msra.mxu0 %v3376
      %3386 = vmatprep.subr.mxu0 0.0
      %3387 = vmatpush1.msra.mxu0 %v3375
      %3388 = vmatprep.subr.mxu0 0.0
      %3389 = vmatpush1.msra.mxu0 %v3374
      %3390 = vmatprep.subr.mxu0 0.0
      %3391 = vmatpush1.msra.mxu0 %v3373
      %3392 = vmatprep.subr.mxu0 0.0
      %3393 = vmatpush1.msra.mxu0 %v3372
      %3394 = vmatprep.subr.mxu0 0.0
      %3395 = vmatpush1.msra.mxu0 %v3371
      %3396 = vmatprep.subr.mxu0 0.0
      %3397 = vmatpush1.msra.mxu0 %v3370
      %3398 = vmatprep.subr.mxu0 0.0
      %3399 = vmatpush1.msra.mxu0 %v3369
      %3400 = vmatprep.subr.mxu0 0.0
      %3401 = vmatpush1.msra.mxu0 %v3368
      %3402 = vmatprep.subr.mxu0 0.0
      %3403 = vmatpush1.msra.mxu0 %v3367
      %3404 = vmatprep.subr.mxu0 0.0
      %3405 = vmatpush1.msra.mxu0 %v3366
      %3406 = vmatprep.subr.mxu0 0.0
      %3407 = vmatpush1.msra.mxu0 %v3365
      %3408 = vmatprep.subr.mxu0 0.0
      %3409 = vmatpush1.msra.mxu0 %v3364
      %3410 = vmatprep.subr.mxu0 0.0
      %3411 = vmatpush1.msra.mxu0 %v3363
      %3412 = vmatprep.subr.mxu0 0.0
      %3413 = vmatpush2.msra.mxu0 0.0
      %3414 = vmatprep.subr.mxu0 0.0
      %3415 = vmatpush2.msra.mxu0 0.0
      %3416 = vmatprep.subr.mxu0 0.0
      %3417 = vmatpush2.msra.mxu0 0.0
      %3418 = vmatprep.subr.mxu0 0.0
      %3419 = vmatpush2.msra.mxu0 0.0
      %3420 = vmatprep.subr.mxu0 0.0
      %3421 = vmatpush2.msra.mxu0 0.0
      %3422 = vmatprep.subr.mxu0 0.0
      %3423 = vmatpush2.msra.mxu0 0.0
      %3424 = vmatprep.subr.mxu0 0.0
      %3425 = vmatpush2.msra.mxu0 0.0
      %3426 = vmatprep.subr.mxu0 0.0
      %3427 = vmatpush2.msra.mxu0 0.0
      %3428 = vmatprep.subr.mxu0 0.0
      %3429 = vmatpush2.msra.mxu0 0.0
      %3430 = vmatprep.subr.mxu0 0.0
      %3431 = vmatpush2.msra.mxu0 0.0
      %3432 = vmatprep.subr.mxu0 0.0
      %3433 = vmatpush2.msra.mxu0 0.0
      %3434 = vmatprep.subr.mxu0 0.0
      %3435 = vmatpush2.msra.mxu0 0.0
      %3436 = vmatprep.subr.mxu0 0.0
      %3437 = vmatpush2.msra.mxu0 0.0
      %3438 = vmatprep.subr.mxu0 0.0
      %3439 = vmatpush2.msra.mxu0 0.0
      %3440 = vmatprep.subr.mxu0 0.0
      %3441 = vmatpush2.msra.mxu0 0.0
      %3442 = vmatprep.subr.mxu0 0.0
      %3443 = vmatpush2.msra.mxu0 0.0
      %3444 = vmatprep.mubr.f32.mxu0 0.0
      %3445 = vmatmul.mubr.f32.gmra.mxu0 %v3379
      %v3446 = vpop.f32.mrf.mxu0
      %v3447 = vadd.f32 0.0, %v3446
      %v3448 = vpop.f32.mrf.mxu0
      %3449 = vdwg.mxu0
      %v3450 = vsel %vm2069, %v3447, 0.0
      %3451 = vadd.xlane.f32.xlu0 %v3450
      %v3452 = vpop.xlane.xlu0 %3451
      %v3453 = vmul.f32 %v3452, 0.001953125
      %v3454 = vld [vmem:[%s11] sm:$0xff]
      %v3455 = vld [vmem:[%s11 + $0x8] sm:$0xff]
      %v3456 = vld [vmem:[%s11 + $0x10] sm:$0xff]
      %v3457 = vld [vmem:[%s11 + $0x18] sm:$0xff]
      %v3458 = vld [vmem:[%s11 + $0x20] sm:$0xff]
      %v3459 = vld [vmem:[%s11 + $0x28] sm:$0xff]
      %v3460 = vld [vmem:[%s11 + $0x30] sm:$0xff]
      %v3461 = vld [vmem:[%s11 + $0x38] sm:$0xff]
      %v3462 = vld [vmem:[%s11 + $0x40] sm:$0xff]
      %v3463 = vld [vmem:[%s11 + $0x48] sm:$0xff]
      %v3464 = vld [vmem:[%s11 + $0x50] sm:$0xff]
      %v3465 = vld [vmem:[%s11 + $0x58] sm:$0xff]
      %v3466 = vld [vmem:[%s11 + $0x60] sm:$0xff]
      %v3467 = vld [vmem:[%s11 + $0x68] sm:$0xff]
      %v3468 = vld [vmem:[%s11 + $0x70] sm:$0xff]
      %v3469 = vld [vmem:[%s11 + $0x78] sm:$0xff]
      %vm3470 = vcmask 64512
      %v3472 = vsel %vm3470, %v3454, 0
      %v3475 = vsel %vm3470, %v3455, 0
      %v3478 = vsel %vm3470, %v3456, 0
      %v3481 = vsel %vm3470, %v3457, 0
      %v3484 = vsel %vm3470, %v3458, 0
      %v3487 = vsel %vm3470, %v3459, 0
      %v3490 = vsel %vm3470, %v3460, 0
      %v3493 = vsel %vm3470, %v3461, 0
      %v3496 = vsel %vm3470, %v3462, 0
      %v3499 = vsel %vm3470, %v3463, 0
      %v3502 = vsel %vm3470, %v3464, 0
      %v3505 = vsel %vm3470, %v3465, 0
      %v3508 = vsel %vm3470, %v3466, 0
      %v3511 = vsel %vm3470, %v3467, 0
      %v3514 = vsel %vm3470, %v3468, 0
      %v3517 = vsel %vm3470, %v3469, 0
      %3519 = vmatprep.subr.mxu0 0.0
      %3520 = vmatpush1.msra.mxu0 0.0
      %3521 = vmatprep.subr.mxu0 0.0
      %3522 = vmatpush1.msra.mxu0 0.0
      %3523 = vmatprep.subr.mxu0 0.0
      %3524 = vmatpush1.msra.mxu0 0.0
      %3525 = vmatprep.subr.mxu0 0.0
      %3526 = vmatpush1.msra.mxu0 0.0
      %3527 = vmatprep.subr.mxu0 0.0
      %3528 = vmatpush1.msra.mxu0 0.0
      %3529 = vmatprep.subr.mxu0 0.0
      %3530 = vmatpush1.msra.mxu0 0.0
      %3531 = vmatprep.subr.mxu0 0.0
      %3532 = vmatpush1.msra.mxu0 0.0
      %3533 = vmatprep.subr.mxu0 0.0
      %3534 = vmatpush1.msra.mxu0 0.0
      %3535 = vmatprep.subr.mxu0 0.0
      %3536 = vmatpush1.msra.mxu0 0.0
      %3537 = vmatprep.subr.mxu0 0.0
      %3538 = vmatpush1.msra.mxu0 0.0
      %3539 = vmatprep.subr.mxu0 0.0
      %3540 = vmatpush1.msra.mxu0 0.0
      %3541 = vmatprep.subr.mxu0 0.0
      %3542 = vmatpush1.msra.mxu0 0.0
      %3543 = vmatprep.subr.mxu0 0.0
      %3544 = vmatpush1.msra.mxu0 0.0
      %3545 = vmatprep.subr.mxu0 0.0
      %3546 = vmatpush1.msra.mxu0 0.0
      %3547 = vmatprep.subr.mxu0 0.0
      %3548 = vmatpush1.msra.mxu0 0.0
      %3549 = vmatprep.subr.mxu0 0.0
      %3550 = vmatpush1.msra.mxu0 %v3453
      %3551 = vmatprep.subr.mxu0 0.0
      %3552 = vmatpush2.msra.mxu0 0.0
      %3553 = vmatprep.subr.mxu0 0.0
      %3554 = vmatpush2.msra.mxu0 0.0
      %3555 = vmatprep.subr.mxu0 0.0
      %3556 = vmatpush2.msra.mxu0 0.0
      %3557 = vmatprep.subr.mxu0 0.0
      %3558 = vmatpush2.msra.mxu0 0.0
      %3559 = vmatprep.subr.mxu0 0.0
      %3560 = vmatpush2.msra.mxu0 0.0
      %3561 = vmatprep.subr.mxu0 0.0
      %3562 = vmatpush2.msra.mxu0 0.0
      %3563 = vmatprep.subr.mxu0 0.0
      %3564 = vmatpush2.msra.mxu0 0.0
      %3565 = vmatprep.subr.mxu0 0.0
      %3566 = vmatpush2.msra.mxu0 0.0
      %3567 = vmatprep.subr.mxu0 0.0
      %3568 = vmatpush2.msra.mxu0 0.0
      %3569 = vmatprep.subr.mxu0 0.0
      %3570 = vmatpush2.msra.mxu0 0.0
      %3571 = vmatprep.subr.mxu0 0.0
      %3572 = vmatpush2.msra.mxu0 0.0
      %3573 = vmatprep.subr.mxu0 0.0
      %3574 = vmatpush2.msra.mxu0 0.0
      %3575 = vmatprep.subr.mxu0 0.0
      %3576 = vmatpush2.msra.mxu0 0.0
      %3577 = vmatprep.subr.mxu0 0.0
      %3578 = vmatpush2.msra.mxu0 0.0
      %3579 = vmatprep.subr.mxu0 0.0
      %3580 = vmatpush2.msra.mxu0 0.0
      %3581 = vmatprep.subr.mxu0 0.0
      %3582 = vmatpush2.msra.mxu0 0.0
      %3583 = vmatprep.mubr.f32.mxu0 0.0
      %3584 = vmatmul.mubr.f32.gmra.mxu0 %v3472
      %v3585 = vpop.f32.mrf.mxu0
      %v3586 = vadd.f32 0.0, %v3585
      %v3587 = vpop.f32.mrf.mxu0
      %3588 = vmatprep.mubr.f32.mxu0 0.0
      %3589 = vmatmul.mubr.f32.gmra.mxu0 %v3475
      %v3590 = vpop.f32.mrf.mxu0
      %v3591 = vadd.f32 0.0, %v3590
      %v3592 = vpop.f32.mrf.mxu0
      %3593 = vmatprep.mubr.f32.mxu0 0.0
      %3594 = vmatmul.mubr.f32.gmra.mxu0 %v3478
      %v3595 = vpop.f32.mrf.mxu0
      %v3596 = vadd.f32 0.0, %v3595
      %v3597 = vpop.f32.mrf.mxu0
      %3598 = vmatprep.mubr.f32.mxu0 0.0
      %3599 = vmatmul.mubr.f32.gmra.mxu0 %v3481
      %v3600 = vpop.f32.mrf.mxu0
      %v3601 = vadd.f32 0.0, %v3600
      %v3602 = vpop.f32.mrf.mxu0
      %3603 = vmatprep.mubr.f32.mxu0 0.0
      %3604 = vmatmul.mubr.f32.gmra.mxu0 %v3484
      %v3605 = vpop.f32.mrf.mxu0
      %v3606 = vadd.f32 0.0, %v3605
      %v3607 = vpop.f32.mrf.mxu0
      %3608 = vmatprep.mubr.f32.mxu0 0.0
      %3609 = vmatmul.mubr.f32.gmra.mxu0 %v3487
      %v3610 = vpop.f32.mrf.mxu0
      %v3611 = vadd.f32 0.0, %v3610
      %v3612 = vpop.f32.mrf.mxu0
      %3613 = vmatprep.mubr.f32.mxu0 0.0
      %3614 = vmatmul.mubr.f32.gmra.mxu0 %v3490
      %v3615 = vpop.f32.mrf.mxu0
      %v3616 = vadd.f32 0.0, %v3615
      %v3617 = vpop.f32.mrf.mxu0
      %3618 = vmatprep.mubr.f32.mxu0 0.0
      %3619 = vmatmul.mubr.f32.gmra.mxu0 %v3493
      %v3620 = vpop.f32.mrf.mxu0
      %v3621 = vadd.f32 0.0, %v3620
      %v3622 = vpop.f32.mrf.mxu0
      %3623 = vmatprep.mubr.f32.mxu0 0.0
      %3624 = vmatmul.mubr.f32.gmra.mxu0 %v3496
      %v3625 = vpop.f32.mrf.mxu0
      %v3626 = vadd.f32 0.0, %v3625
      %v3627 = vpop.f32.mrf.mxu0
      %3628 = vmatprep.mubr.f32.mxu0 0.0
      %3629 = vmatmul.mubr.f32.gmra.mxu0 %v3499
      %v3630 = vpop.f32.mrf.mxu0
      %v3631 = vadd.f32 0.0, %v3630
      %v3632 = vpop.f32.mrf.mxu0
      %3633 = vmatprep.mubr.f32.mxu0 0.0
      %3634 = vmatmul.mubr.f32.gmra.mxu0 %v3502
      %v3635 = vpop.f32.mrf.mxu0
      %v3636 = vadd.f32 0.0, %v3635
      %v3637 = vpop.f32.mrf.mxu0
      %3638 = vmatprep.mubr.f32.mxu0 0.0
      %3639 = vmatmul.mubr.f32.gmra.mxu0 %v3505
      %v3640 = vpop.f32.mrf.mxu0
      %v3641 = vadd.f32 0.0, %v3640
      %v3642 = vpop.f32.mrf.mxu0
      %3643 = vmatprep.mubr.f32.mxu0 0.0
      %3644 = vmatmul.mubr.f32.gmra.mxu0 %v3508
      %v3645 = vpop.f32.mrf.mxu0
      %v3646 = vadd.f32 0.0, %v3645
      %v3647 = vpop.f32.mrf.mxu0
      %3648 = vmatprep.mubr.f32.mxu0 0.0
      %3649 = vmatmul.mubr.f32.gmra.mxu0 %v3511
      %v3650 = vpop.f32.mrf.mxu0
      %v3651 = vadd.f32 0.0, %v3650
      %v3652 = vpop.f32.mrf.mxu0
      %3653 = vmatprep.mubr.f32.mxu0 0.0
      %3654 = vmatmul.mubr.f32.gmra.mxu0 %v3514
      %v3655 = vpop.f32.mrf.mxu0
      %v3656 = vadd.f32 0.0, %v3655
      %v3657 = vpop.f32.mrf.mxu0
      %3658 = vmatprep.mubr.f32.mxu0 0.0
      %3659 = vmatmul.mubr.f32.gmra.mxu0 %v3517
      %v3660 = vpop.f32.mrf.mxu0
      %v3661 = vadd.f32 0.0, %v3660
      %v3662 = vpop.f32.mrf.mxu0
      %3663 = vdwg.mxu0
      %v3664 = vsub.f32 %v3363, %v3586
      %v3665 = vsub.f32 %v3364, %v3591
      %v3666 = vsub.f32 %v3365, %v3596
      %v3667 = vsub.f32 %v3366, %v3601
      %v3668 = vsub.f32 %v3367, %v3606
      %v3669 = vsub.f32 %v3368, %v3611
      %v3670 = vsub.f32 %v3369, %v3616
      %v3671 = vsub.f32 %v3370, %v3621
      %v3672 = vsub.f32 %v3371, %v3626
      %v3673 = vsub.f32 %v3372, %v3631
      %v3674 = vsub.f32 %v3373, %v3636
      %v3675 = vsub.f32 %v3374, %v3641
      %v3676 = vsub.f32 %v3375, %v3646
      %v3677 = vsub.f32 %v3376, %v3651
      %v3678 = vsub.f32 %v3377, %v3656
      %v3679 = vsub.f32 %v3378, %v3661
      %v3680 = vmul.f32 %v3664, %v3664
      %v3681 = vmul.f32 %v3665, %v3665
      %v3682 = vmul.f32 %v3666, %v3666
      %v3683 = vmul.f32 %v3667, %v3667
      %v3684 = vmul.f32 %v3668, %v3668
      %v3685 = vmul.f32 %v3669, %v3669
      %v3686 = vmul.f32 %v3670, %v3670
      %v3687 = vmul.f32 %v3671, %v3671
      %v3688 = vmul.f32 %v3672, %v3672
      %v3689 = vmul.f32 %v3673, %v3673
      %v3690 = vmul.f32 %v3674, %v3674
      %v3691 = vmul.f32 %v3675, %v3675
      %v3692 = vmul.f32 %v3676, %v3676
      %v3693 = vmul.f32 %v3677, %v3677
      %v3694 = vmul.f32 %v3678, %v3678
      %v3695 = vmul.f32 %v3679, %v3679
      %3696 = vmatprep.subr.mxu0 0.0
      %3697 = vmatpush1.msra.mxu0 %v3695
      %3698 = vmatprep.subr.mxu0 0.0
      %3699 = vmatpush1.msra.mxu0 %v3694
      %3700 = vmatprep.subr.mxu0 0.0
      %3701 = vmatpush1.msra.mxu0 %v3693
      %3702 = vmatprep.subr.mxu0 0.0
      %3703 = vmatpush1.msra.mxu0 %v3692
      %3704 = vmatprep.subr.mxu0 0.0
      %3705 = vmatpush1.msra.mxu0 %v3691
      %3706 = vmatprep.subr.mxu0 0.0
      %3707 = vmatpush1.msra.mxu0 %v3690
      %3708 = vmatprep.subr.mxu0 0.0
      %3709 = vmatpush1.msra.mxu0 %v3689
      %3710 = vmatprep.subr.mxu0 0.0
      %3711 = vmatpush1.msra.mxu0 %v3688
      %3712 = vmatprep.subr.mxu0 0.0
      %3713 = vmatpush1.msra.mxu0 %v3687
      %3714 = vmatprep.subr.mxu0 0.0
      %3715 = vmatpush1.msra.mxu0 %v3686
      %3716 = vmatprep.subr.mxu0 0.0
      %3717 = vmatpush1.msra.mxu0 %v3685
      %3718 = vmatprep.subr.mxu0 0.0
      %3719 = vmatpush1.msra.mxu0 %v3684
      %3720 = vmatprep.subr.mxu0 0.0
      %3721 = vmatpush1.msra.mxu0 %v3683
      %3722 = vmatprep.subr.mxu0 0.0
      %3723 = vmatpush1.msra.mxu0 %v3682
      %3724 = vmatprep.subr.mxu0 0.0
      %3725 = vmatpush1.msra.mxu0 %v3681
      %3726 = vmatprep.subr.mxu0 0.0
      %3727 = vmatpush1.msra.mxu0 %v3680
      %3728 = vmatprep.subr.mxu0 0.0
      %3729 = vmatpush2.msra.mxu0 0.0
      %3730 = vmatprep.subr.mxu0 0.0
      %3731 = vmatpush2.msra.mxu0 0.0
      %3732 = vmatprep.subr.mxu0 0.0
      %3733 = vmatpush2.msra.mxu0 0.0
      %3734 = vmatprep.subr.mxu0 0.0
      %3735 = vmatpush2.msra.mxu0 0.0
      %3736 = vmatprep.subr.mxu0 0.0
      %3737 = vmatpush2.msra.mxu0 0.0
      %3738 = vmatprep.subr.mxu0 0.0
      %3739 = vmatpush2.msra.mxu0 0.0
      %3740 = vmatprep.subr.mxu0 0.0
      %3741 = vmatpush2.msra.mxu0 0.0
      %3742 = vmatprep.subr.mxu0 0.0
      %3743 = vmatpush2.msra.mxu0 0.0
      %3744 = vmatprep.subr.mxu0 0.0
      %3745 = vmatpush2.msra.mxu0 0.0
      %3746 = vmatprep.subr.mxu0 0.0
      %3747 = vmatpush2.msra.mxu0 0.0
      %3748 = vmatprep.subr.mxu0 0.0
      %3749 = vmatpush2.msra.mxu0 0.0
      %3750 = vmatprep.subr.mxu0 0.0
      %3751 = vmatpush2.msra.mxu0 0.0
      %3752 = vmatprep.subr.mxu0 0.0
      %3753 = vmatpush2.msra.mxu0 0.0
      %3754 = vmatprep.subr.mxu0 0.0
      %3755 = vmatpush2.msra.mxu0 0.0
      %3756 = vmatprep.subr.mxu0 0.0
      %3757 = vmatpush2.msra.mxu0 0.0
      %3758 = vmatprep.subr.mxu0 0.0
      %3759 = vmatpush2.msra.mxu0 0.0
      %3760 = vmatprep.mubr.f32.mxu0 0.0
      %3761 = vmatmul.mubr.f32.gmra.mxu0 %v3379
      %v3762 = vpop.f32.mrf.mxu0
      %v3763 = vadd.f32 0.0, %v3762
      %v3764 = vpop.f32.mrf.mxu0
      %3765 = vdwg.mxu0
      %v3766 = vsel %vm2069, %v3763, 0.0
      %3767 = vadd.xlane.f32.xlu0 %v3766
      %v3768 = vpop.xlane.xlu0 %3767
      %v3769 = vmul.f32 %v3768, 0.001953125
      %v3770 = vadd.f32 %v3769, 1e-05
      %v3771 = vrsqrt.pop %v3770
      %3772 = vmatprep.subr.mxu0 0.0
      %3773 = vmatpush1.msra.mxu0 0.0
      %3774 = vmatprep.subr.mxu0 0.0
      %3775 = vmatpush1.msra.mxu0 0.0
      %3776 = vmatprep.subr.mxu0 0.0
      %3777 = vmatpush1.msra.mxu0 0.0
      %3778 = vmatprep.subr.mxu0 0.0
      %3779 = vmatpush1.msra.mxu0 0.0
      %3780 = vmatprep.subr.mxu0 0.0
      %3781 = vmatpush1.msra.mxu0 0.0
      %3782 = vmatprep.subr.mxu0 0.0
      %3783 = vmatpush1.msra.mxu0 0.0
      %3784 = vmatprep.subr.mxu0 0.0
      %3785 = vmatpush1.msra.mxu0 0.0
      %3786 = vmatprep.subr.mxu0 0.0
      %3787 = vmatpush1.msra.mxu0 0.0
      %3788 = vmatprep.subr.mxu0 0.0
      %3789 = vmatpush1.msra.mxu0 0.0
      %3790 = vmatprep.subr.mxu0 0.0
      %3791 = vmatpush1.msra.mxu0 0.0
      %3792 = vmatprep.subr.mxu0 0.0
      %3793 = vmatpush1.msra.mxu0 0.0
      %3794 = vmatprep.subr.mxu0 0.0
      %3795 = vmatpush1.msra.mxu0 0.0
      %3796 = vmatprep.subr.mxu0 0.0
      %3797 = vmatpush1.msra.mxu0 0.0
      %3798 = vmatprep.subr.mxu0 0.0
      %3799 = vmatpush1.msra.mxu0 0.0
      %3800 = vmatprep.subr.mxu0 0.0
      %3801 = vmatpush1.msra.mxu0 0.0
      %3802 = vmatprep.subr.mxu0 0.0
      %3803 = vmatpush1.msra.mxu0 %v3771
      %3804 = vmatprep.subr.mxu0 0.0
      %3805 = vmatpush2.msra.mxu0 0.0
      %3806 = vmatprep.subr.mxu0 0.0
      %3807 = vmatpush2.msra.mxu0 0.0
      %3808 = vmatprep.subr.mxu0 0.0
      %3809 = vmatpush2.msra.mxu0 0.0
      %3810 = vmatprep.subr.mxu0 0.0
      %3811 = vmatpush2.msra.mxu0 0.0
      %3812 = vmatprep.subr.mxu0 0.0
      %3813 = vmatpush2.msra.mxu0 0.0
      %3814 = vmatprep.subr.mxu0 0.0
      %3815 = vmatpush2.msra.mxu0 0.0
      %3816 = vmatprep.subr.mxu0 0.0
      %3817 = vmatpush2.msra.mxu0 0.0
      %3818 = vmatprep.subr.mxu0 0.0
      %3819 = vmatpush2.msra.mxu0 0.0
      %3820 = vmatprep.subr.mxu0 0.0
      %3821 = vmatpush2.msra.mxu0 0.0
      %3822 = vmatprep.subr.mxu0 0.0
      %3823 = vmatpush2.msra.mxu0 0.0
      %3824 = vmatprep.subr.mxu0 0.0
      %3825 = vmatpush2.msra.mxu0 0.0
      %3826 = vmatprep.subr.mxu0 0.0
      %3827 = vmatpush2.msra.mxu0 0.0
      %3828 = vmatprep.subr.mxu0 0.0
      %3829 = vmatpush2.msra.mxu0 0.0
      %3830 = vmatprep.subr.mxu0 0.0
      %3831 = vmatpush2.msra.mxu0 0.0
      %3832 = vmatprep.subr.mxu0 0.0
      %3833 = vmatpush2.msra.mxu0 0.0
      %3834 = vmatprep.subr.mxu0 0.0
      %3835 = vmatpush2.msra.mxu0 0.0
      %3836 = vmatprep.mubr.f32.mxu0 0.0
      %3837 = vmatmul.mubr.f32.gmra.mxu0 %v3472
      %v3838 = vpop.f32.mrf.mxu0
      %v3839 = vadd.f32 0.0, %v3838
      %v3840 = vpop.f32.mrf.mxu0
      %3841 = vmatprep.mubr.f32.mxu0 0.0
      %3842 = vmatmul.mubr.f32.gmra.mxu0 %v3475
      %v3843 = vpop.f32.mrf.mxu0
      %v3844 = vadd.f32 0.0, %v3843
      %v3845 = vpop.f32.mrf.mxu0
      %3846 = vmatprep.mubr.f32.mxu0 0.0
      %3847 = vmatmul.mubr.f32.gmra.mxu0 %v3478
      %v3848 = vpop.f32.mrf.mxu0
      %v3849 = vadd.f32 0.0, %v3848
      %v3850 = vpop.f32.mrf.mxu0
      %3851 = vmatprep.mubr.f32.mxu0 0.0
      %3852 = vmatmul.mubr.f32.gmra.mxu0 %v3481
      %v3853 = vpop.f32.mrf.mxu0
      %v3854 = vadd.f32 0.0, %v3853
      %v3855 = vpop.f32.mrf.mxu0
      %3856 = vmatprep.mubr.f32.mxu0 0.0
      %3857 = vmatmul.mubr.f32.gmra.mxu0 %v3484
      %v3858 = vpop.f32.mrf.mxu0
      %v3859 = vadd.f32 0.0, %v3858
      %v3860 = vpop.f32.mrf.mxu0
      %3861 = vmatprep.mubr.f32.mxu0 0.0
      %3862 = vmatmul.mubr.f32.gmra.mxu0 %v3487
      %v3863 = vpop.f32.mrf.mxu0
      %v3864 = vadd.f32 0.0, %v3863
      %v3865 = vpop.f32.mrf.mxu0
      %3866 = vmatprep.mubr.f32.mxu0 0.0
      %3867 = vmatmul.mubr.f32.gmra.mxu0 %v3490
      %v3868 = vpop.f32.mrf.mxu0
      %v3869 = vadd.f32 0.0, %v3868
      %v3870 = vpop.f32.mrf.mxu0
      %3871 = vmatprep.mubr.f32.mxu0 0.0
      %3872 = vmatmul.mubr.f32.gmra.mxu0 %v3493
      %v3873 = vpop.f32.mrf.mxu0
      %v3874 = vadd.f32 0.0, %v3873
      %v3875 = vpop.f32.mrf.mxu0
      %3876 = vmatprep.mubr.f32.mxu0 0.0
      %3877 = vmatmul.mubr.f32.gmra.mxu0 %v3496
      %v3878 = vpop.f32.mrf.mxu0
      %v3879 = vadd.f32 0.0, %v3878
      %v3880 = vpop.f32.mrf.mxu0
      %3881 = vmatprep.mubr.f32.mxu0 0.0
      %3882 = vmatmul.mubr.f32.gmra.mxu0 %v3499
      %v3883 = vpop.f32.mrf.mxu0
      %v3884 = vadd.f32 0.0, %v3883
      %v3885 = vpop.f32.mrf.mxu0
      %3886 = vmatprep.mubr.f32.mxu0 0.0
      %3887 = vmatmul.mubr.f32.gmra.mxu0 %v3502
      %v3888 = vpop.f32.mrf.mxu0
      %v3889 = vadd.f32 0.0, %v3888
      %v3890 = vpop.f32.mrf.mxu0
      %3891 = vmatprep.mubr.f32.mxu0 0.0
      %3892 = vmatmul.mubr.f32.gmra.mxu0 %v3505
      %v3893 = vpop.f32.mrf.mxu0
      %v3894 = vadd.f32 0.0, %v3893
      %v3895 = vpop.f32.mrf.mxu0
      %3896 = vmatprep.mubr.f32.mxu0 0.0
      %3897 = vmatmul.mubr.f32.gmra.mxu0 %v3508
      %v3898 = vpop.f32.mrf.mxu0
      %v3899 = vadd.f32 0.0, %v3898
      %v3900 = vpop.f32.mrf.mxu0
      %3901 = vmatprep.mubr.f32.mxu0 0.0
      %3902 = vmatmul.mubr.f32.gmra.mxu0 %v3511
      %v3903 = vpop.f32.mrf.mxu0
      %v3904 = vadd.f32 0.0, %v3903
      %v3905 = vpop.f32.mrf.mxu0
      %3906 = vmatprep.mubr.f32.mxu0 0.0
      %3907 = vmatmul.mubr.f32.gmra.mxu0 %v3514
      %v3908 = vpop.f32.mrf.mxu0
      %v3909 = vadd.f32 0.0, %v3908
      %v3910 = vpop.f32.mrf.mxu0
      %3911 = vmatprep.mubr.f32.mxu0 0.0
      %3912 = vmatmul.mubr.f32.gmra.mxu0 %v3517
      %v3913 = vpop.f32.mrf.mxu0
      %v3914 = vadd.f32 0.0, %v3913
      %v3915 = vpop.f32.mrf.mxu0
      %3916 = vdwg.mxu0
      %v3917 = vmul.f32 %v3664, %v3839
      %v3918 = vmul.f32 %v3665, %v3844
      %v3919 = vmul.f32 %v3666, %v3849
      %v3920 = vmul.f32 %v3667, %v3854
      %v3921 = vmul.f32 %v3668, %v3859
      %v3922 = vmul.f32 %v3669, %v3864
      %v3923 = vmul.f32 %v3670, %v3869
      %v3924 = vmul.f32 %v3671, %v3874
      %v3925 = vmul.f32 %v3672, %v3879
      %v3926 = vmul.f32 %v3673, %v3884
      %v3927 = vmul.f32 %v3674, %v3889
      %v3928 = vmul.f32 %v3675, %v3894
      %v3929 = vmul.f32 %v3676, %v3899
      %v3930 = vmul.f32 %v3677, %v3904
      %v3931 = vmul.f32 %v3678, %v3909
      %v3932 = vmul.f32 %v3679, %v3914
      %v3933 = vld [vmem:[%s12] sm:$0xff]
      %v3934 = vld [vmem:[%s12 + $0x8] sm:$0xff]
      %v3935 = vld [vmem:[%s12 + $0x10] sm:$0xff]
      %v3936 = vld [vmem:[%s12 + $0x18] sm:$0xff]
      %v3937 = vld [vmem:[%s12 + $0x20] sm:$0xff]
      %v3938 = vld [vmem:[%s12 + $0x28] sm:$0xff]
      %v3939 = vld [vmem:[%s12 + $0x30] sm:$0xff]
      %v3940 = vld [vmem:[%s12 + $0x38] sm:$0xff]
      %v3941 = vld [vmem:[%s12 + $0x40] sm:$0xff]
      %v3942 = vld [vmem:[%s12 + $0x48] sm:$0xff]
      %v3943 = vld [vmem:[%s12 + $0x50] sm:$0xff]
      %v3944 = vld [vmem:[%s12 + $0x58] sm:$0xff]
      %v3945 = vld [vmem:[%s12 + $0x60] sm:$0xff]
      %v3946 = vld [vmem:[%s12 + $0x68] sm:$0xff]
      %v3947 = vld [vmem:[%s12 + $0x70] sm:$0xff]
      %v3948 = vld [vmem:[%s12 + $0x78] sm:$0xff]
      %v3949 = vmul.f32 %v3917, %v3933
      %v3950 = vmul.f32 %v3918, %v3934
      %v3951 = vmul.f32 %v3919, %v3935
      %v3952 = vmul.f32 %v3920, %v3936
      %v3953 = vmul.f32 %v3921, %v3937
      %v3954 = vmul.f32 %v3922, %v3938
      %v3955 = vmul.f32 %v3923, %v3939
      %v3956 = vmul.f32 %v3924, %v3940
      %v3957 = vmul.f32 %v3925, %v3941
      %v3958 = vmul.f32 %v3926, %v3942
      %v3959 = vmul.f32 %v3927, %v3943
      %v3960 = vmul.f32 %v3928, %v3944
      %v3961 = vmul.f32 %v3929, %v3945
      %v3962 = vmul.f32 %v3930, %v3946
      %v3963 = vmul.f32 %v3931, %v3947
      %v3964 = vmul.f32 %v3932, %v3948
      %v3965 = vld [vmem:[%s13] sm:$0xff]
      %v3966 = vld [vmem:[%s13 + $0x8] sm:$0xff]
      %v3967 = vld [vmem:[%s13 + $0x10] sm:$0xff]
      %v3968 = vld [vmem:[%s13 + $0x18] sm:$0xff]
      %v3969 = vld [vmem:[%s13 + $0x20] sm:$0xff]
      %v3970 = vld [vmem:[%s13 + $0x28] sm:$0xff]
      %v3971 = vld [vmem:[%s13 + $0x30] sm:$0xff]
      %v3972 = vld [vmem:[%s13 + $0x38] sm:$0xff]
      %v3973 = vld [vmem:[%s13 + $0x40] sm:$0xff]
      %v3974 = vld [vmem:[%s13 + $0x48] sm:$0xff]
      %v3975 = vld [vmem:[%s13 + $0x50] sm:$0xff]
      %v3976 = vld [vmem:[%s13 + $0x58] sm:$0xff]
      %v3977 = vld [vmem:[%s13 + $0x60] sm:$0xff]
      %v3978 = vld [vmem:[%s13 + $0x68] sm:$0xff]
      %v3979 = vld [vmem:[%s13 + $0x70] sm:$0xff]
      %v3980 = vld [vmem:[%s13 + $0x78] sm:$0xff]
      %v3981 = vadd.f32 %v3949, %v3965
      %v3982 = vadd.f32 %v3950, %v3966
      %v3983 = vadd.f32 %v3951, %v3967
      %v3984 = vadd.f32 %v3952, %v3968
      %v3985 = vadd.f32 %v3953, %v3969
      %v3986 = vadd.f32 %v3954, %v3970
      %v3987 = vadd.f32 %v3955, %v3971
      %v3988 = vadd.f32 %v3956, %v3972
      %v3989 = vadd.f32 %v3957, %v3973
      %v3990 = vadd.f32 %v3958, %v3974
      %v3991 = vadd.f32 %v3959, %v3975
      %v3992 = vadd.f32 %v3960, %v3976
      %v3993 = vadd.f32 %v3961, %v3977
      %v3994 = vadd.f32 %v3962, %v3978
      %v3995 = vadd.f32 %v3963, %v3979
      %v3996 = vadd.f32 %v3964, %v3980
      %3997 = vst.msk [vmem:[%s467] sm:$0xff] %vm2069, %v3981
      %3998 = vst.msk [vmem:[%s467 + $0x8] sm:$0xff] %vm2069, %v3982
      %3999 = vst.msk [vmem:[%s467 + $0x10] sm:$0xff] %vm2069, %v3983
      %4000 = vst.msk [vmem:[%s467 + $0x18] sm:$0xff] %vm2069, %v3984
      %4001 = vst.msk [vmem:[%s467 + $0x20] sm:$0xff] %vm2069, %v3985
      %4002 = vst.msk [vmem:[%s467 + $0x28] sm:$0xff] %vm2069, %v3986
      %4003 = vst.msk [vmem:[%s467 + $0x30] sm:$0xff] %vm2069, %v3987
      %4004 = vst.msk [vmem:[%s467 + $0x38] sm:$0xff] %vm2069, %v3988
      %4005 = vst.msk [vmem:[%s467 + $0x40] sm:$0xff] %vm2069, %v3989
      %4006 = vst.msk [vmem:[%s467 + $0x48] sm:$0xff] %vm2069, %v3990
      %4007 = vst.msk [vmem:[%s467 + $0x50] sm:$0xff] %vm2069, %v3991
      %4008 = vst.msk [vmem:[%s467 + $0x58] sm:$0xff] %vm2069, %v3992
      %4009 = vst.msk [vmem:[%s467 + $0x60] sm:$0xff] %vm2069, %v3993
      %4010 = vst.msk [vmem:[%s467 + $0x68] sm:$0xff] %vm2069, %v3994
      %4011 = vst.msk [vmem:[%s467 + $0x70] sm:$0xff] %vm2069, %v3995
      %4012 = vst.msk [vmem:[%s467 + $0x78] sm:$0xff] %vm2069, %v3996
      %p4013 = scmp.lt.s32.totalorder %s25, 1
      %s4014 = scalar_select %p4013, %s25, 1
      %s4015 = smul.addr %s4014, 16
      %s4016 = smul.addr %s4015, 8
      %s4017 = scalar_lea.vmem %s14, %s4016
      // Predicated region
      $region77: #{tpu_custom_call.1} parent=75 // pred_check
        %p4018 = pneg %p342
      $region78: #{tpu_custom_call.1} parent=75 // pred_check_branch
        %4020 = sbr.rel (%p4018) target = $region80
      $region79: #{tpu_custom_call.1} parent=75 // pred_region
        _
      $region80: #{tpu_custom_call.1} parent=75 // pred_fallthru
        _
    $region76: #{tpu_custom_call.1} parent=5 // pred_fallthru
      _
    %p4021 = scmp.le.s32.totalorder 2, %s20
    // Predicated region
    $region81: #{tpu_custom_call.1} parent=5 // pred_check
      %p4022 = pneg %p4021
    $region82: #{tpu_custom_call.1} parent=5 // pred_check_branch
      %4024 = sbr.rel (%p4022) target = $region84
    $region83: #{tpu_custom_call.1} parent=5 // pred_region
      %s4025 = ssub.s32 %s20, 2
      // Predicated region
      $region85: #{tpu_custom_call.1} parent=83 // pred_check
        %p4026 = pneg %p348
      $region86: #{tpu_custom_call.1} parent=83 // pred_check_branch
        %4028 = sbr.rel (%p4026) target = $region88
      $region87: #{tpu_custom_call.1} parent=83 // pred_region
        %p4029 = scmp.lt.s32.totalorder %s26, 1
        %s4030 = scalar_select %p4029, %s26, 1
        %s4031 = smul.addr %s4030, 16
        %s4032 = smul.addr %s4031, 8
        %s4033 = scalar_lea.vmem %s14, %s4032
      $region88: #{tpu_custom_call.1} parent=83 // pred_fallthru
        _
    $region84: #{tpu_custom_call.1} parent=5 // pred_fallthru
      _
  $region6: #{tpu_custom_call.1} parent=0 // loop_footer
    %s24 = sadd.s32 1, %s20
  $region7: #{tpu_custom_call.1} parent=0 // loop_footer_branch
    %19 = sbr.rel target = $region3
  $region8: #{tpu_custom_call.1} parent=0 // loop_exit
    _

</llo_original>
